<compile_context>
chip_gen: v7x
topology: tpu7x:2x2x1
jax: 0.10.0
libtpu: 0.0.40
codegen_flags: <defaults>
</compile_context>

<pallas_src>
import jax
import jax.numpy as jnp
from jax.experimental import pallas as pl
from jax.experimental.pallas import tpu as pltpu

D_MODEL = 128
N_HEADS = 4
HEAD_DIM = D_MODEL // N_HEADS
LN_EPS = 1e-5
SCALE = 1.0 / (HEAD_DIM ** 0.5)


def cross_attn_kernel(tgt_ref, mem_ref, qpos_ref, kpos_ref,
                      wq_ref, bq_ref, wk_ref, bk_ref, wv_ref, bv_ref,
                      wo_ref, bo_ref, gamma_ref, beta_ref, out_ref):
    tgt = tgt_ref[0]                        # (St, D)
    mem = mem_ref[0]                        # (Sm, D)
    q_in = tgt + qpos_ref[0]                # query = tgt + query_pos
    k_in = mem + kpos_ref[0]                # key   = memory + pos

    attn = jnp.zeros_like(tgt)              # (St, D) f32 accumulator over heads
    for h in range(N_HEADS):                # static unroll (N_HEADS small)
        q = jnp.dot(q_in, wq_ref[h],
                    preferred_element_type=jnp.float32) + bq_ref[h]   # (St, Dh)
        k = jnp.dot(k_in, wk_ref[h],
                    preferred_element_type=jnp.float32) + bk_ref[h]   # (Sm, Dh)
        v = jnp.dot(mem, wv_ref[h],
                    preferred_element_type=jnp.float32) + bv_ref[h]   # (Sm, Dh)

        # scores: q @ k^T without materializing the transpose
        s = jax.lax.dot_general(q, k, (((1,), (1,)), ((), ())),
                                preferred_element_type=jnp.float32) * SCALE  # (St, Sm)
        s = s - jnp.max(s, axis=-1, keepdims=True)
        e = jnp.exp(s)
        p = e / jnp.sum(e, axis=-1, keepdims=True)                    # softmax over keys

        o = jnp.dot(p, v, preferred_element_type=jnp.float32)         # (St, Dh)
        # accumulate this head's slice of the output projection
        attn = attn + jnp.dot(o, wo_ref[h],
                              preferred_element_type=jnp.float32)     # (St, D)

    # residual (dropout p=0.0 -> identity) + out-proj bias + LayerNorm
    x = tgt + attn + bo_ref[...]
    mu = jnp.mean(x, axis=-1, keepdims=True)
    xc = x - mu
    var = jnp.mean(xc * xc, axis=-1, keepdims=True)
    y = xc * jax.lax.rsqrt(var + LN_EPS)
    out_ref[0] = (y * gamma_ref[...] + beta_ref[...]).astype(out_ref.dtype)


def cross_attention_forward(tgt, memory, query_pos, pos,
                            wq, bq, wk, bk, wv, bv, wo, bo, gamma, beta):
    B, St, D = tgt.shape
    Sm = memory.shape[1]
    H, Dh = N_HEADS, HEAD_DIM

    # Per-head weight layout (layout plumbing once in the wrapper; the kernel
    # only ever sees aligned (D, Dh) / (Dh, D) tiles).
    wq_s = wq.reshape(D, H, Dh).transpose(1, 0, 2)   # (H, D, Dh)
    wk_s = wk.reshape(D, H, Dh).transpose(1, 0, 2)
    wv_s = wv.reshape(D, H, Dh).transpose(1, 0, 2)
    wo_s = wo.reshape(H, Dh, D)                      # (H, Dh, D)
    bq_s = bq.reshape(H, 1, Dh)
    bk_s = bk.reshape(H, 1, Dh)
    bv_s = bv.reshape(H, 1, Dh)

    tgt_spec = pl.BlockSpec((1, St, D), lambda b: (b, 0, 0))
    mem_spec = pl.BlockSpec((1, Sm, D), lambda b: (b, 0, 0))

    def full_spec(shape):
        n = len(shape)
        return pl.BlockSpec(shape, lambda b: (0,) * n)   # block index constant -> DMA'd once

    return pl.pallas_call(
        cross_attn_kernel,
        out_shape=jax.ShapeDtypeStruct((B, St, D), jnp.float32),
        grid_spec=pltpu.PrefetchScalarGridSpec(
            num_scalar_prefetch=0,
            grid=(B,),
            in_specs=[
                tgt_spec, mem_spec, tgt_spec, mem_spec,
                full_spec((H, D, Dh)), full_spec((H, 1, Dh)),
                full_spec((H, D, Dh)), full_spec((H, 1, Dh)),
                full_spec((H, D, Dh)), full_spec((H, 1, Dh)),
                full_spec((H, Dh, D)), full_spec((1, D)),
                full_spec((1, D)), full_spec((1, D)),
            ],
            out_specs=pl.BlockSpec((1, St, D), lambda b: (b, 0, 0)),
        ),
        compiler_params=pltpu.CompilerParams(
            dimension_semantics=("parallel",)),
    )(tgt, memory, query_pos, pos,
      wq_s, bq_s, wk_s, bk_s, wv_s, bv_s, wo_s, bo, gamma, beta)


def reference_forward(tgt, memory, query_pos, pos,
                      wq, bq, wk, bk, wv, bv, wo, bo, gamma, beta):
    B, St, D = tgt.shape
    Sm = memory.shape[1]
    H, Dh = N_HEADS, HEAD_DIM
    hi = jax.lax.Precision.HIGHEST

    q = jnp.matmul(tgt + query_pos, wq, precision=hi) + bq
    k = jnp.matmul(memory + pos, wk, precision=hi) + bk
    v = jnp.matmul(memory, wv, precision=hi) + bv
    qh = q.reshape(B, St, H, Dh).transpose(0, 2, 1, 3)
    kh = k.reshape(B, Sm, H, Dh).transpose(0, 2, 1, 3)
    vh = v.reshape(B, Sm, H, Dh).transpose(0, 2, 1, 3)
    s = jnp.einsum('bhqd,bhkd->bhqk', qh, kh, precision=hi) * SCALE
    p = jax.nn.softmax(s, axis=-1)
    o = jnp.einsum('bhqk,bhkd->bhqd', p, vh, precision=hi)
    o = o.transpose(0, 2, 1, 3).reshape(B, St, D)
    x = tgt + (jnp.matmul(o, wo, precision=hi) + bo)   # dropout(p=0.0) == identity
    mu = jnp.mean(x, axis=-1, keepdims=True)
    var = jnp.mean((x - mu) ** 2, axis=-1, keepdims=True)
    return (x - mu) / jnp.sqrt(var + LN_EPS) * gamma + beta


if __name__ == "__main__":
    key = jax.random.PRNGKey(0)
    ks = jax.random.split(key, 12)

    B, St, Sm = 2, 8, 16
    D = D_MODEL

    def xavier(k, shape):
        a = (6.0 / (shape[0] + shape[1])) ** 0.5
        return jax.random.uniform(k, shape, jnp.float32, -a, a)

    # Weights stored as (in_features, out_features) so the kernel computes x @ W.
    wq = xavier(ks[0], (D, D))
    wk = xavier(ks[1], (D, D))
    wv = xavier(ks[2], (D, D))
    wo = xavier(ks[3], (D, D))
    bq = 0.1 * jax.random.normal(ks[4], (1, D), jnp.float32)
    bk = 0.1 * jax.random.normal(ks[5], (1, D), jnp.float32)
    bv = 0.1 * jax.random.normal(ks[6], (1, D), jnp.float32)
    bo = 0.1 * jax.random.normal(ks[7], (1, D), jnp.float32)
    gamma = jnp.ones((1, D), jnp.float32)   # LayerNorm default weight
    beta = jnp.zeros((1, D), jnp.float32)   # LayerNorm default bias

    tgt = jax.random.normal(ks[8], (B, St, D), jnp.float32)
    memory = jax.random.normal(ks[9], (B, Sm, D), jnp.float32)
    query_pos = jax.random.normal(ks[10], (B, St, D), jnp.float32)
    pos = jax.random.normal(ks[11], (B, Sm, D), jnp.float32)

    out = cross_attention_forward(tgt, memory, query_pos, pos,
                                  wq, bq, wk, bk, wv, bv, wo, bo, gamma, beta)
    out = jax.block_until_ready(out)

    ref = reference_forward(tgt, memory, query_pos, pos,
                            wq, bq, wk, bk, wv, bv, wo, bo, gamma, beta)
    assert out.shape == (B, St, D)
    max_err = float(jnp.max(jnp.abs(out - ref)))
    assert jnp.allclose(out, ref, atol=1e-3, rtol=1e-3), max_err

    print("KERNEL_OK")
</pallas_src>

<mosaic_0001>
module attributes {stable_mosaic.version = 11 : i64} {
  func.func @cross_attn_kernel(%arg0: i32, %arg1: memref<1x8x128xf32, #tpu.memory_space<vmem>>, %arg2: memref<1x16x128xf32, #tpu.memory_space<vmem>>, %arg3: memref<1x8x128xf32, #tpu.memory_space<vmem>>, %arg4: memref<1x16x128xf32, #tpu.memory_space<vmem>>, %arg5: memref<4x128x32xf32, #tpu.memory_space<vmem>>, %arg6: memref<4x1x32xf32, #tpu.memory_space<vmem>>, %arg7: memref<4x128x32xf32, #tpu.memory_space<vmem>>, %arg8: memref<4x1x32xf32, #tpu.memory_space<vmem>>, %arg9: memref<4x128x32xf32, #tpu.memory_space<vmem>>, %arg10: memref<4x1x32xf32, #tpu.memory_space<vmem>>, %arg11: memref<4x32x128xf32, #tpu.memory_space<vmem>>, %arg12: memref<1x128xf32, #tpu.memory_space<vmem>>, %arg13: memref<1x128xf32, #tpu.memory_space<vmem>>, %arg14: memref<1x128xf32, #tpu.memory_space<vmem>>, %arg15: memref<1x8x128xf32, #tpu.memory_space<vmem>>) attributes {dimension_semantics = [#tpu.dimension_semantics<parallel>], iteration_bounds = array<i64: 2>, scalar_prefetch = 0 : i64, scratch_operands = 0 : i64, tpu.core_type = #tpu.core_type<tc>, window_params = [{transform_indices = @transform_0, window_bounds = array<i64: 1, 8, 128>}, {transform_indices = @transform_1, window_bounds = array<i64: 1, 16, 128>}, {transform_indices = @transform_2, window_bounds = array<i64: 1, 8, 128>}, {transform_indices = @transform_3, window_bounds = array<i64: 1, 16, 128>}, {pipeline_mode = #tpu.pipeline_mode<synchronous>, transform_indices = @transform_4, window_bounds = array<i64: 4, 128, 32>}, {pipeline_mode = #tpu.pipeline_mode<synchronous>, transform_indices = @transform_5, window_bounds = array<i64: 4, 1, 32>}, {pipeline_mode = #tpu.pipeline_mode<synchronous>, transform_indices = @transform_6, window_bounds = array<i64: 4, 128, 32>}, {pipeline_mode = #tpu.pipeline_mode<synchronous>, transform_indices = @transform_7, window_bounds = array<i64: 4, 1, 32>}, {pipeline_mode = #tpu.pipeline_mode<synchronous>, transform_indices = @transform_8, window_bounds = array<i64: 4, 128, 32>}, {pipeline_mode = #tpu.pipeline_mode<synchronous>, transform_indices = @transform_9, window_bounds = array<i64: 4, 1, 32>}, {pipeline_mode = #tpu.pipeline_mode<synchronous>, transform_indices = @transform_10, window_bounds = array<i64: 4, 32, 128>}, {pipeline_mode = #tpu.pipeline_mode<synchronous>, transform_indices = @transform_11, window_bounds = array<i64: 1, 128>}, {pipeline_mode = #tpu.pipeline_mode<synchronous>, transform_indices = @transform_12, window_bounds = array<i64: 1, 128>}, {pipeline_mode = #tpu.pipeline_mode<synchronous>, transform_indices = @transform_13, window_bounds = array<i64: 1, 128>}, {transform_indices = @transform_14, window_bounds = array<i64: 1, 8, 128>}]} {
    %c0 = arith.constant 0 : index
    %c0_0 = arith.constant 0 : index
    %c0_1 = arith.constant 0 : index
    %0 = vector.load %arg1[%c0, %c0_0, %c0_1] : memref<1x8x128xf32, #tpu.memory_space<vmem>>, vector<1x8x128xf32>
    %1 = vector.shape_cast %0 : vector<1x8x128xf32> to vector<8x128xf32>
    %c0_2 = arith.constant 0 : index
    %c0_3 = arith.constant 0 : index
    %c0_4 = arith.constant 0 : index
    %2 = vector.load %arg2[%c0_2, %c0_3, %c0_4] : memref<1x16x128xf32, #tpu.memory_space<vmem>>, vector<1x16x128xf32>
    %3 = vector.shape_cast %2 : vector<1x16x128xf32> to vector<16x128xf32>
    %c0_5 = arith.constant 0 : index
    %c0_6 = arith.constant 0 : index
    %c0_7 = arith.constant 0 : index
    %4 = vector.load %arg3[%c0_5, %c0_6, %c0_7] : memref<1x8x128xf32, #tpu.memory_space<vmem>>, vector<1x8x128xf32>
    %5 = vector.shape_cast %4 : vector<1x8x128xf32> to vector<8x128xf32>
    %6 = arith.addf %1, %5 : vector<8x128xf32>
    %c0_8 = arith.constant 0 : index
    %c0_9 = arith.constant 0 : index
    %c0_10 = arith.constant 0 : index
    %7 = vector.load %arg4[%c0_8, %c0_9, %c0_10] : memref<1x16x128xf32, #tpu.memory_space<vmem>>, vector<1x16x128xf32>
    %8 = vector.shape_cast %7 : vector<1x16x128xf32> to vector<16x128xf32>
    %9 = arith.addf %3, %8 : vector<16x128xf32>
    %cst = arith.constant 0.000000e+00 : f32
    %10 = vector.broadcast %cst : f32 to vector<8x128xf32>
    %c0_11 = arith.constant 0 : index
    %c0_12 = arith.constant 0 : index
    %c0_13 = arith.constant 0 : index
    %11 = vector.load %arg5[%c0_11, %c0_12, %c0_13] : memref<4x128x32xf32, #tpu.memory_space<vmem>>, vector<1x128x32xf32>
    %12 = vector.shape_cast %11 : vector<1x128x32xf32> to vector<128x32xf32>
    %cst_14 = arith.constant dense<0.000000e+00> : vector<8x32xf32>
    %13 = tpu.matmul %6, %12, %cst_14 {dimension_numbers = #tpu.dot_dimension_numbers<[1], [0], [0], [1], [0, 0, 1, 1], [], []>} : vector<8x128xf32>, vector<128x32xf32>, vector<8x32xf32> -> vector<8x32xf32>
    %c0_15 = arith.constant 0 : index
    %c0_16 = arith.constant 0 : index
    %c0_17 = arith.constant 0 : index
    %14 = vector.load %arg6[%c0_15, %c0_16, %c0_17] : memref<4x1x32xf32, #tpu.memory_space<vmem>>, vector<1x1x32xf32>
    %15 = vector.shape_cast %14 : vector<1x1x32xf32> to vector<1x32xf32>
    %16 = vector.broadcast %15 : vector<1x32xf32> to vector<8x32xf32>
    %17 = arith.addf %13, %16 : vector<8x32xf32>
    %c0_18 = arith.constant 0 : index
    %c0_19 = arith.constant 0 : index
    %c0_20 = arith.constant 0 : index
    %18 = vector.load %arg7[%c0_18, %c0_19, %c0_20] : memref<4x128x32xf32, #tpu.memory_space<vmem>>, vector<1x128x32xf32>
    %19 = vector.shape_cast %18 : vector<1x128x32xf32> to vector<128x32xf32>
    %cst_21 = arith.constant dense<0.000000e+00> : vector<16x32xf32>
    %20 = tpu.matmul %9, %19, %cst_21 {dimension_numbers = #tpu.dot_dimension_numbers<[1], [0], [0], [1], [0, 0, 1, 1], [], []>} : vector<16x128xf32>, vector<128x32xf32>, vector<16x32xf32> -> vector<16x32xf32>
    %c0_22 = arith.constant 0 : index
    %c0_23 = arith.constant 0 : index
    %c0_24 = arith.constant 0 : index
    %21 = vector.load %arg8[%c0_22, %c0_23, %c0_24] : memref<4x1x32xf32, #tpu.memory_space<vmem>>, vector<1x1x32xf32>
    %22 = vector.shape_cast %21 : vector<1x1x32xf32> to vector<1x32xf32>
    %23 = vector.broadcast %22 : vector<1x32xf32> to vector<16x32xf32>
    %24 = arith.addf %20, %23 : vector<16x32xf32>
    %c0_25 = arith.constant 0 : index
    %c0_26 = arith.constant 0 : index
    %c0_27 = arith.constant 0 : index
    %25 = vector.load %arg9[%c0_25, %c0_26, %c0_27] : memref<4x128x32xf32, #tpu.memory_space<vmem>>, vector<1x128x32xf32>
    %26 = vector.shape_cast %25 : vector<1x128x32xf32> to vector<128x32xf32>
    %cst_28 = arith.constant dense<0.000000e+00> : vector<16x32xf32>
    %27 = tpu.matmul %3, %26, %cst_28 {dimension_numbers = #tpu.dot_dimension_numbers<[1], [0], [0], [1], [0, 0, 1, 1], [], []>} : vector<16x128xf32>, vector<128x32xf32>, vector<16x32xf32> -> vector<16x32xf32>
    %c0_29 = arith.constant 0 : index
    %c0_30 = arith.constant 0 : index
    %c0_31 = arith.constant 0 : index
    %28 = vector.load %arg10[%c0_29, %c0_30, %c0_31] : memref<4x1x32xf32, #tpu.memory_space<vmem>>, vector<1x1x32xf32>
    %29 = vector.shape_cast %28 : vector<1x1x32xf32> to vector<1x32xf32>
    %30 = vector.broadcast %29 : vector<1x32xf32> to vector<16x32xf32>
    %31 = arith.addf %27, %30 : vector<16x32xf32>
    %cst_32 = arith.constant dense<0.000000e+00> : vector<8x16xf32>
    %32 = tpu.matmul %17, %24, %cst_32 {dimension_numbers = #tpu.dot_dimension_numbers<[1], [1], [0], [0], [0, 0, 1, 0], [], []>} : vector<8x32xf32>, vector<16x32xf32>, vector<8x16xf32> -> vector<8x16xf32>
    %cst_33 = arith.constant 0.176776692 : f32
    %33 = vector.broadcast %cst_33 : f32 to vector<8x16xf32>
    %34 = arith.mulf %32, %33 : vector<8x16xf32>
    %cst_34 = arith.constant dense<0xFF800000> : vector<8xf32>
    %35 = vector.multi_reduction <maximumf>, %34, %cst_34 [1] : vector<8x16xf32> to vector<8xf32>
    %36 = vector.shape_cast %35 : vector<8xf32> to vector<8x1xf32>
    %37 = vector.broadcast %36 : vector<8x1xf32> to vector<8x16xf32>
    %38 = arith.subf %34, %37 : vector<8x16xf32>
    %39 = math.exp %38 : vector<8x16xf32>
    %cst_35 = arith.constant dense<0.000000e+00> : vector<8xf32>
    %40 = vector.multi_reduction <add>, %39, %cst_35 [1] : vector<8x16xf32> to vector<8xf32>
    %41 = vector.shape_cast %40 : vector<8xf32> to vector<8x1xf32>
    %42 = vector.broadcast %41 : vector<8x1xf32> to vector<8x16xf32>
    %43 = arith.divf %39, %42 : vector<8x16xf32>
    %cst_36 = arith.constant dense<0.000000e+00> : vector<8x32xf32>
    %44 = tpu.matmul %43, %31, %cst_36 {dimension_numbers = #tpu.dot_dimension_numbers<[1], [0], [0], [1], [0, 0, 1, 1], [], []>} : vector<8x16xf32>, vector<16x32xf32>, vector<8x32xf32> -> vector<8x32xf32>
    %c0_37 = arith.constant 0 : index
    %c0_38 = arith.constant 0 : index
    %c0_39 = arith.constant 0 : index
    %45 = vector.load %arg11[%c0_37, %c0_38, %c0_39] : memref<4x32x128xf32, #tpu.memory_space<vmem>>, vector<1x32x128xf32>
    %46 = vector.shape_cast %45 : vector<1x32x128xf32> to vector<32x128xf32>
    %cst_40 = arith.constant dense<0.000000e+00> : vector<8x128xf32>
    %47 = tpu.matmul %44, %46, %cst_40 {dimension_numbers = #tpu.dot_dimension_numbers<[1], [0], [0], [1], [0, 0, 1, 1], [], []>} : vector<8x32xf32>, vector<32x128xf32>, vector<8x128xf32> -> vector<8x128xf32>
    %48 = arith.addf %10, %47 : vector<8x128xf32>
    %c1 = arith.constant 1 : index
    %c0_41 = arith.constant 0 : index
    %c0_42 = arith.constant 0 : index
    %49 = vector.load %arg5[%c1, %c0_41, %c0_42] : memref<4x128x32xf32, #tpu.memory_space<vmem>>, vector<1x128x32xf32>
    %50 = vector.shape_cast %49 : vector<1x128x32xf32> to vector<128x32xf32>
    %cst_43 = arith.constant dense<0.000000e+00> : vector<8x32xf32>
    %51 = tpu.matmul %6, %50, %cst_43 {dimension_numbers = #tpu.dot_dimension_numbers<[1], [0], [0], [1], [0, 0, 1, 1], [], []>} : vector<8x128xf32>, vector<128x32xf32>, vector<8x32xf32> -> vector<8x32xf32>
    %c1_44 = arith.constant 1 : index
    %c0_45 = arith.constant 0 : index
    %c0_46 = arith.constant 0 : index
    %52 = vector.load %arg6[%c1_44, %c0_45, %c0_46] : memref<4x1x32xf32, #tpu.memory_space<vmem>>, vector<1x1x32xf32>
    %53 = vector.shape_cast %52 : vector<1x1x32xf32> to vector<1x32xf32>
    %54 = vector.broadcast %53 : vector<1x32xf32> to vector<8x32xf32>
    %55 = arith.addf %51, %54 : vector<8x32xf32>
    %c1_47 = arith.constant 1 : index
    %c0_48 = arith.constant 0 : index
    %c0_49 = arith.constant 0 : index
    %56 = vector.load %arg7[%c1_47, %c0_48, %c0_49] : memref<4x128x32xf32, #tpu.memory_space<vmem>>, vector<1x128x32xf32>
    %57 = vector.shape_cast %56 : vector<1x128x32xf32> to vector<128x32xf32>
    %cst_50 = arith.constant dense<0.000000e+00> : vector<16x32xf32>
    %58 = tpu.matmul %9, %57, %cst_50 {dimension_numbers = #tpu.dot_dimension_numbers<[1], [0], [0], [1], [0, 0, 1, 1], [], []>} : vector<16x128xf32>, vector<128x32xf32>, vector<16x32xf32> -> vector<16x32xf32>
    %c1_51 = arith.constant 1 : index
    %c0_52 = arith.constant 0 : index
    %c0_53 = arith.constant 0 : index
    %59 = vector.load %arg8[%c1_51, %c0_52, %c0_53] : memref<4x1x32xf32, #tpu.memory_space<vmem>>, vector<1x1x32xf32>
    %60 = vector.shape_cast %59 : vector<1x1x32xf32> to vector<1x32xf32>
    %61 = vector.broadcast %60 : vector<1x32xf32> to vector<16x32xf32>
    %62 = arith.addf %58, %61 : vector<16x32xf32>
    %c1_54 = arith.constant 1 : index
    %c0_55 = arith.constant 0 : index
    %c0_56 = arith.constant 0 : index
    %63 = vector.load %arg9[%c1_54, %c0_55, %c0_56] : memref<4x128x32xf32, #tpu.memory_space<vmem>>, vector<1x128x32xf32>
    %64 = vector.shape_cast %63 : vector<1x128x32xf32> to vector<128x32xf32>
    %cst_57 = arith.constant dense<0.000000e+00> : vector<16x32xf32>
    %65 = tpu.matmul %3, %64, %cst_57 {dimension_numbers = #tpu.dot_dimension_numbers<[1], [0], [0], [1], [0, 0, 1, 1], [], []>} : vector<16x128xf32>, vector<128x32xf32>, vector<16x32xf32> -> vector<16x32xf32>
    %c1_58 = arith.constant 1 : index
    %c0_59 = arith.constant 0 : index
    %c0_60 = arith.constant 0 : index
    %66 = vector.load %arg10[%c1_58, %c0_59, %c0_60] : memref<4x1x32xf32, #tpu.memory_space<vmem>>, vector<1x1x32xf32>
    %67 = vector.shape_cast %66 : vector<1x1x32xf32> to vector<1x32xf32>
    %68 = vector.broadcast %67 : vector<1x32xf32> to vector<16x32xf32>
    %69 = arith.addf %65, %68 : vector<16x32xf32>
    %cst_61 = arith.constant dense<0.000000e+00> : vector<8x16xf32>
    %70 = tpu.matmul %55, %62, %cst_61 {dimension_numbers = #tpu.dot_dimension_numbers<[1], [1], [0], [0], [0, 0, 1, 0], [], []>} : vector<8x32xf32>, vector<16x32xf32>, vector<8x16xf32> -> vector<8x16xf32>
    %cst_62 = arith.constant 0.176776692 : f32
    %71 = vector.broadcast %cst_62 : f32 to vector<8x16xf32>
    %72 = arith.mulf %70, %71 : vector<8x16xf32>
    %cst_63 = arith.constant dense<0xFF800000> : vector<8xf32>
    %73 = vector.multi_reduction <maximumf>, %72, %cst_63 [1] : vector<8x16xf32> to vector<8xf32>
    %74 = vector.shape_cast %73 : vector<8xf32> to vector<8x1xf32>
    %75 = vector.broadcast %74 : vector<8x1xf32> to vector<8x16xf32>
    %76 = arith.subf %72, %75 : vector<8x16xf32>
    %77 = math.exp %76 : vector<8x16xf32>
    %cst_64 = arith.constant dense<0.000000e+00> : vector<8xf32>
    %78 = vector.multi_reduction <add>, %77, %cst_64 [1] : vector<8x16xf32> to vector<8xf32>
    %79 = vector.shape_cast %78 : vector<8xf32> to vector<8x1xf32>
    %80 = vector.broadcast %79 : vector<8x1xf32> to vector<8x16xf32>
    %81 = arith.divf %77, %80 : vector<8x16xf32>
    %cst_65 = arith.constant dense<0.000000e+00> : vector<8x32xf32>
    %82 = tpu.matmul %81, %69, %cst_65 {dimension_numbers = #tpu.dot_dimension_numbers<[1], [0], [0], [1], [0, 0, 1, 1], [], []>} : vector<8x16xf32>, vector<16x32xf32>, vector<8x32xf32> -> vector<8x32xf32>
    %c1_66 = arith.constant 1 : index
    %c0_67 = arith.constant 0 : index
    %c0_68 = arith.constant 0 : index
    %83 = vector.load %arg11[%c1_66, %c0_67, %c0_68] : memref<4x32x128xf32, #tpu.memory_space<vmem>>, vector<1x32x128xf32>
    %84 = vector.shape_cast %83 : vector<1x32x128xf32> to vector<32x128xf32>
    %cst_69 = arith.constant dense<0.000000e+00> : vector<8x128xf32>
    %85 = tpu.matmul %82, %84, %cst_69 {dimension_numbers = #tpu.dot_dimension_numbers<[1], [0], [0], [1], [0, 0, 1, 1], [], []>} : vector<8x32xf32>, vector<32x128xf32>, vector<8x128xf32> -> vector<8x128xf32>
    %86 = arith.addf %48, %85 : vector<8x128xf32>
    %c2 = arith.constant 2 : index
    %c0_70 = arith.constant 0 : index
    %c0_71 = arith.constant 0 : index
    %87 = vector.load %arg5[%c2, %c0_70, %c0_71] : memref<4x128x32xf32, #tpu.memory_space<vmem>>, vector<1x128x32xf32>
    %88 = vector.shape_cast %87 : vector<1x128x32xf32> to vector<128x32xf32>
    %cst_72 = arith.constant dense<0.000000e+00> : vector<8x32xf32>
    %89 = tpu.matmul %6, %88, %cst_72 {dimension_numbers = #tpu.dot_dimension_numbers<[1], [0], [0], [1], [0, 0, 1, 1], [], []>} : vector<8x128xf32>, vector<128x32xf32>, vector<8x32xf32> -> vector<8x32xf32>
    %c2_73 = arith.constant 2 : index
    %c0_74 = arith.constant 0 : index
    %c0_75 = arith.constant 0 : index
    %90 = vector.load %arg6[%c2_73, %c0_74, %c0_75] : memref<4x1x32xf32, #tpu.memory_space<vmem>>, vector<1x1x32xf32>
    %91 = vector.shape_cast %90 : vector<1x1x32xf32> to vector<1x32xf32>
    %92 = vector.broadcast %91 : vector<1x32xf32> to vector<8x32xf32>
    %93 = arith.addf %89, %92 : vector<8x32xf32>
    %c2_76 = arith.constant 2 : index
    %c0_77 = arith.constant 0 : index
    %c0_78 = arith.constant 0 : index
    %94 = vector.load %arg7[%c2_76, %c0_77, %c0_78] : memref<4x128x32xf32, #tpu.memory_space<vmem>>, vector<1x128x32xf32>
    %95 = vector.shape_cast %94 : vector<1x128x32xf32> to vector<128x32xf32>
    %cst_79 = arith.constant dense<0.000000e+00> : vector<16x32xf32>
    %96 = tpu.matmul %9, %95, %cst_79 {dimension_numbers = #tpu.dot_dimension_numbers<[1], [0], [0], [1], [0, 0, 1, 1], [], []>} : vector<16x128xf32>, vector<128x32xf32>, vector<16x32xf32> -> vector<16x32xf32>
    %c2_80 = arith.constant 2 : index
    %c0_81 = arith.constant 0 : index
    %c0_82 = arith.constant 0 : index
    %97 = vector.load %arg8[%c2_80, %c0_81, %c0_82] : memref<4x1x32xf32, #tpu.memory_space<vmem>>, vector<1x1x32xf32>
    %98 = vector.shape_cast %97 : vector<1x1x32xf32> to vector<1x32xf32>
    %99 = vector.broadcast %98 : vector<1x32xf32> to vector<16x32xf32>
    %100 = arith.addf %96, %99 : vector<16x32xf32>
    %c2_83 = arith.constant 2 : index
    %c0_84 = arith.constant 0 : index
    %c0_85 = arith.constant 0 : index
    %101 = vector.load %arg9[%c2_83, %c0_84, %c0_85] : memref<4x128x32xf32, #tpu.memory_space<vmem>>, vector<1x128x32xf32>
    %102 = vector.shape_cast %101 : vector<1x128x32xf32> to vector<128x32xf32>
    %cst_86 = arith.constant dense<0.000000e+00> : vector<16x32xf32>
    %103 = tpu.matmul %3, %102, %cst_86 {dimension_numbers = #tpu.dot_dimension_numbers<[1], [0], [0], [1], [0, 0, 1, 1], [], []>} : vector<16x128xf32>, vector<128x32xf32>, vector<16x32xf32> -> vector<16x32xf32>
    %c2_87 = arith.constant 2 : index
    %c0_88 = arith.constant 0 : index
    %c0_89 = arith.constant 0 : index
    %104 = vector.load %arg10[%c2_87, %c0_88, %c0_89] : memref<4x1x32xf32, #tpu.memory_space<vmem>>, vector<1x1x32xf32>
    %105 = vector.shape_cast %104 : vector<1x1x32xf32> to vector<1x32xf32>
    %106 = vector.broadcast %105 : vector<1x32xf32> to vector<16x32xf32>
    %107 = arith.addf %103, %106 : vector<16x32xf32>
    %cst_90 = arith.constant dense<0.000000e+00> : vector<8x16xf32>
    %108 = tpu.matmul %93, %100, %cst_90 {dimension_numbers = #tpu.dot_dimension_numbers<[1], [1], [0], [0], [0, 0, 1, 0], [], []>} : vector<8x32xf32>, vector<16x32xf32>, vector<8x16xf32> -> vector<8x16xf32>
    %cst_91 = arith.constant 0.176776692 : f32
    %109 = vector.broadcast %cst_91 : f32 to vector<8x16xf32>
    %110 = arith.mulf %108, %109 : vector<8x16xf32>
    %cst_92 = arith.constant dense<0xFF800000> : vector<8xf32>
    %111 = vector.multi_reduction <maximumf>, %110, %cst_92 [1] : vector<8x16xf32> to vector<8xf32>
    %112 = vector.shape_cast %111 : vector<8xf32> to vector<8x1xf32>
    %113 = vector.broadcast %112 : vector<8x1xf32> to vector<8x16xf32>
    %114 = arith.subf %110, %113 : vector<8x16xf32>
    %115 = math.exp %114 : vector<8x16xf32>
    %cst_93 = arith.constant dense<0.000000e+00> : vector<8xf32>
    %116 = vector.multi_reduction <add>, %115, %cst_93 [1] : vector<8x16xf32> to vector<8xf32>
    %117 = vector.shape_cast %116 : vector<8xf32> to vector<8x1xf32>
    %118 = vector.broadcast %117 : vector<8x1xf32> to vector<8x16xf32>
    %119 = arith.divf %115, %118 : vector<8x16xf32>
    %cst_94 = arith.constant dense<0.000000e+00> : vector<8x32xf32>
    %120 = tpu.matmul %119, %107, %cst_94 {dimension_numbers = #tpu.dot_dimension_numbers<[1], [0], [0], [1], [0, 0, 1, 1], [], []>} : vector<8x16xf32>, vector<16x32xf32>, vector<8x32xf32> -> vector<8x32xf32>
    %c2_95 = arith.constant 2 : index
    %c0_96 = arith.constant 0 : index
    %c0_97 = arith.constant 0 : index
    %121 = vector.load %arg11[%c2_95, %c0_96, %c0_97] : memref<4x32x128xf32, #tpu.memory_space<vmem>>, vector<1x32x128xf32>
    %122 = vector.shape_cast %121 : vector<1x32x128xf32> to vector<32x128xf32>
    %cst_98 = arith.constant dense<0.000000e+00> : vector<8x128xf32>
    %123 = tpu.matmul %120, %122, %cst_98 {dimension_numbers = #tpu.dot_dimension_numbers<[1], [0], [0], [1], [0, 0, 1, 1], [], []>} : vector<8x32xf32>, vector<32x128xf32>, vector<8x128xf32> -> vector<8x128xf32>
    %124 = arith.addf %86, %123 : vector<8x128xf32>
    %c3 = arith.constant 3 : index
    %c0_99 = arith.constant 0 : index
    %c0_100 = arith.constant 0 : index
    %125 = vector.load %arg5[%c3, %c0_99, %c0_100] : memref<4x128x32xf32, #tpu.memory_space<vmem>>, vector<1x128x32xf32>
    %126 = vector.shape_cast %125 : vector<1x128x32xf32> to vector<128x32xf32>
    %cst_101 = arith.constant dense<0.000000e+00> : vector<8x32xf32>
    %127 = tpu.matmul %6, %126, %cst_101 {dimension_numbers = #tpu.dot_dimension_numbers<[1], [0], [0], [1], [0, 0, 1, 1], [], []>} : vector<8x128xf32>, vector<128x32xf32>, vector<8x32xf32> -> vector<8x32xf32>
    %c3_102 = arith.constant 3 : index
    %c0_103 = arith.constant 0 : index
    %c0_104 = arith.constant 0 : index
    %128 = vector.load %arg6[%c3_102, %c0_103, %c0_104] : memref<4x1x32xf32, #tpu.memory_space<vmem>>, vector<1x1x32xf32>
    %129 = vector.shape_cast %128 : vector<1x1x32xf32> to vector<1x32xf32>
    %130 = vector.broadcast %129 : vector<1x32xf32> to vector<8x32xf32>
    %131 = arith.addf %127, %130 : vector<8x32xf32>
    %c3_105 = arith.constant 3 : index
    %c0_106 = arith.constant 0 : index
    %c0_107 = arith.constant 0 : index
    %132 = vector.load %arg7[%c3_105, %c0_106, %c0_107] : memref<4x128x32xf32, #tpu.memory_space<vmem>>, vector<1x128x32xf32>
    %133 = vector.shape_cast %132 : vector<1x128x32xf32> to vector<128x32xf32>
    %cst_108 = arith.constant dense<0.000000e+00> : vector<16x32xf32>
    %134 = tpu.matmul %9, %133, %cst_108 {dimension_numbers = #tpu.dot_dimension_numbers<[1], [0], [0], [1], [0, 0, 1, 1], [], []>} : vector<16x128xf32>, vector<128x32xf32>, vector<16x32xf32> -> vector<16x32xf32>
    %c3_109 = arith.constant 3 : index
    %c0_110 = arith.constant 0 : index
    %c0_111 = arith.constant 0 : index
    %135 = vector.load %arg8[%c3_109, %c0_110, %c0_111] : memref<4x1x32xf32, #tpu.memory_space<vmem>>, vector<1x1x32xf32>
    %136 = vector.shape_cast %135 : vector<1x1x32xf32> to vector<1x32xf32>
    %137 = vector.broadcast %136 : vector<1x32xf32> to vector<16x32xf32>
    %138 = arith.addf %134, %137 : vector<16x32xf32>
    %c3_112 = arith.constant 3 : index
    %c0_113 = arith.constant 0 : index
    %c0_114 = arith.constant 0 : index
    %139 = vector.load %arg9[%c3_112, %c0_113, %c0_114] : memref<4x128x32xf32, #tpu.memory_space<vmem>>, vector<1x128x32xf32>
    %140 = vector.shape_cast %139 : vector<1x128x32xf32> to vector<128x32xf32>
    %cst_115 = arith.constant dense<0.000000e+00> : vector<16x32xf32>
    %141 = tpu.matmul %3, %140, %cst_115 {dimension_numbers = #tpu.dot_dimension_numbers<[1], [0], [0], [1], [0, 0, 1, 1], [], []>} : vector<16x128xf32>, vector<128x32xf32>, vector<16x32xf32> -> vector<16x32xf32>
    %c3_116 = arith.constant 3 : index
    %c0_117 = arith.constant 0 : index
    %c0_118 = arith.constant 0 : index
    %142 = vector.load %arg10[%c3_116, %c0_117, %c0_118] : memref<4x1x32xf32, #tpu.memory_space<vmem>>, vector<1x1x32xf32>
    %143 = vector.shape_cast %142 : vector<1x1x32xf32> to vector<1x32xf32>
    %144 = vector.broadcast %143 : vector<1x32xf32> to vector<16x32xf32>
    %145 = arith.addf %141, %144 : vector<16x32xf32>
    %cst_119 = arith.constant dense<0.000000e+00> : vector<8x16xf32>
    %146 = tpu.matmul %131, %138, %cst_119 {dimension_numbers = #tpu.dot_dimension_numbers<[1], [1], [0], [0], [0, 0, 1, 0], [], []>} : vector<8x32xf32>, vector<16x32xf32>, vector<8x16xf32> -> vector<8x16xf32>
    %cst_120 = arith.constant 0.176776692 : f32
    %147 = vector.broadcast %cst_120 : f32 to vector<8x16xf32>
    %148 = arith.mulf %146, %147 : vector<8x16xf32>
    %cst_121 = arith.constant dense<0xFF800000> : vector<8xf32>
    %149 = vector.multi_reduction <maximumf>, %148, %cst_121 [1] : vector<8x16xf32> to vector<8xf32>
    %150 = vector.shape_cast %149 : vector<8xf32> to vector<8x1xf32>
    %151 = vector.broadcast %150 : vector<8x1xf32> to vector<8x16xf32>
    %152 = arith.subf %148, %151 : vector<8x16xf32>
    %153 = math.exp %152 : vector<8x16xf32>
    %cst_122 = arith.constant dense<0.000000e+00> : vector<8xf32>
    %154 = vector.multi_reduction <add>, %153, %cst_122 [1] : vector<8x16xf32> to vector<8xf32>
    %155 = vector.shape_cast %154 : vector<8xf32> to vector<8x1xf32>
    %156 = vector.broadcast %155 : vector<8x1xf32> to vector<8x16xf32>
    %157 = arith.divf %153, %156 : vector<8x16xf32>
    %cst_123 = arith.constant dense<0.000000e+00> : vector<8x32xf32>
    %158 = tpu.matmul %157, %145, %cst_123 {dimension_numbers = #tpu.dot_dimension_numbers<[1], [0], [0], [1], [0, 0, 1, 1], [], []>} : vector<8x16xf32>, vector<16x32xf32>, vector<8x32xf32> -> vector<8x32xf32>
    %c3_124 = arith.constant 3 : index
    %c0_125 = arith.constant 0 : index
    %c0_126 = arith.constant 0 : index
    %159 = vector.load %arg11[%c3_124, %c0_125, %c0_126] : memref<4x32x128xf32, #tpu.memory_space<vmem>>, vector<1x32x128xf32>
    %160 = vector.shape_cast %159 : vector<1x32x128xf32> to vector<32x128xf32>
    %cst_127 = arith.constant dense<0.000000e+00> : vector<8x128xf32>
    %161 = tpu.matmul %158, %160, %cst_127 {dimension_numbers = #tpu.dot_dimension_numbers<[1], [0], [0], [1], [0, 0, 1, 1], [], []>} : vector<8x32xf32>, vector<32x128xf32>, vector<8x128xf32> -> vector<8x128xf32>
    %162 = arith.addf %124, %161 : vector<8x128xf32>
    %163 = arith.addf %1, %162 : vector<8x128xf32>
    %c0_128 = arith.constant 0 : index
    %c0_129 = arith.constant 0 : index
    %164 = vector.load %arg12[%c0_128, %c0_129] : memref<1x128xf32, #tpu.memory_space<vmem>>, vector<1x128xf32>
    %165 = vector.broadcast %164 : vector<1x128xf32> to vector<8x128xf32>
    %166 = arith.addf %163, %165 : vector<8x128xf32>
    %cst_130 = arith.constant dense<0.000000e+00> : vector<8xf32>
    %167 = vector.multi_reduction <add>, %166, %cst_130 [1] : vector<8x128xf32> to vector<8xf32>
    %168 = vector.shape_cast %167 : vector<8xf32> to vector<8x1xf32>
    %cst_131 = arith.constant 1.280000e+02 : f32
    %169 = vector.broadcast %cst_131 : f32 to vector<8x1xf32>
    %170 = arith.divf %168, %169 : vector<8x1xf32>
    %171 = vector.broadcast %170 : vector<8x1xf32> to vector<8x128xf32>
    %172 = arith.subf %166, %171 : vector<8x128xf32>
    %173 = arith.mulf %172, %172 : vector<8x128xf32>
    %cst_132 = arith.constant dense<0.000000e+00> : vector<8xf32>
    %174 = vector.multi_reduction <add>, %173, %cst_132 [1] : vector<8x128xf32> to vector<8xf32>
    %175 = vector.shape_cast %174 : vector<8xf32> to vector<8x1xf32>
    %cst_133 = arith.constant 1.280000e+02 : f32
    %176 = vector.broadcast %cst_133 : f32 to vector<8x1xf32>
    %177 = arith.divf %175, %176 : vector<8x1xf32>
    %cst_134 = arith.constant 9.99999974E-6 : f32
    %178 = vector.broadcast %cst_134 : f32 to vector<8x1xf32>
    %179 = arith.addf %177, %178 : vector<8x1xf32>
    %180 = math.rsqrt %179 : vector<8x1xf32>
    %181 = vector.broadcast %180 : vector<8x1xf32> to vector<8x128xf32>
    %182 = arith.mulf %172, %181 : vector<8x128xf32>
    %c0_135 = arith.constant 0 : index
    %c0_136 = arith.constant 0 : index
    %183 = vector.load %arg13[%c0_135, %c0_136] : memref<1x128xf32, #tpu.memory_space<vmem>>, vector<1x128xf32>
    %184 = vector.broadcast %183 : vector<1x128xf32> to vector<8x128xf32>
    %185 = arith.mulf %182, %184 : vector<8x128xf32>
    %c0_137 = arith.constant 0 : index
    %c0_138 = arith.constant 0 : index
    %186 = vector.load %arg14[%c0_137, %c0_138] : memref<1x128xf32, #tpu.memory_space<vmem>>, vector<1x128xf32>
    %187 = vector.broadcast %186 : vector<1x128xf32> to vector<8x128xf32>
    %188 = arith.addf %185, %187 : vector<8x128xf32>
    %c0_139 = arith.constant 0 : index
    %c0_140 = arith.constant 0 : index
    %c0_141 = arith.constant 0 : index
    %189 = vector.load %arg15[%c0_139, %c0_140, %c0_141] : memref<1x8x128xf32, #tpu.memory_space<vmem>>, vector<1x8x128xf32>
    %190 = vector.shape_cast %189 : vector<1x8x128xf32> to vector<8x128xf32>
    %191 = vector.shape_cast %188 : vector<8x128xf32> to vector<1x8x128xf32>
    tpu.vector_store %arg15[%c0_139, %c0_140, %c0_141], %191 {strides = array<i32>} : memref<1x8x128xf32, #tpu.memory_space<vmem>>, vector<1x8x128xf32>,
    return
  }
  func.func @transform_0(%arg0: i32) -> (i32, i32, i32) {
    %c0_i32 = arith.constant 0 : i32
    %c0_i32_0 = arith.constant 0 : i32
    %c0_i32_1 = arith.constant 0 : i32
    return %arg0, %c0_i32, %c0_i32_0 : i32, i32, i32
  }
  func.func @transform_1(%arg0: i32) -> (i32, i32, i32) {
    %c0_i32 = arith.constant 0 : i32
    %c0_i32_0 = arith.constant 0 : i32
    %c0_i32_1 = arith.constant 0 : i32
    return %arg0, %c0_i32, %c0_i32_0 : i32, i32, i32
  }
  func.func @transform_2(%arg0: i32) -> (i32, i32, i32) {
    %c0_i32 = arith.constant 0 : i32
    %c0_i32_0 = arith.constant 0 : i32
    %c0_i32_1 = arith.constant 0 : i32
    return %arg0, %c0_i32, %c0_i32_0 : i32, i32, i32
  }
  func.func @transform_3(%arg0: i32) -> (i32, i32, i32) {
    %c0_i32 = arith.constant 0 : i32
    %c0_i32_0 = arith.constant 0 : i32
    %c0_i32_1 = arith.constant 0 : i32
    return %arg0, %c0_i32, %c0_i32_0 : i32, i32, i32
  }
  func.func @transform_4(%arg0: i32) -> (i32, i32, i32) {
    %c0_i32 = arith.constant 0 : i32
    %c0_i32_0 = arith.constant 0 : i32
    %c0_i32_1 = arith.constant 0 : i32
    %c0_i32_2 = arith.constant 0 : i32
    return %c0_i32, %c0_i32_0, %c0_i32_1 : i32, i32, i32
  }
  func.func @transform_5(%arg0: i32) -> (i32, i32, i32) {
    %c0_i32 = arith.constant 0 : i32
    %c0_i32_0 = arith.constant 0 : i32
    %c0_i32_1 = arith.constant 0 : i32
    %c0_i32_2 = arith.constant 0 : i32
    return %c0_i32, %c0_i32_0, %c0_i32_1 : i32, i32, i32
  }
  func.func @transform_6(%arg0: i32) -> (i32, i32, i32) {
    %c0_i32 = arith.constant 0 : i32
    %c0_i32_0 = arith.constant 0 : i32
    %c0_i32_1 = arith.constant 0 : i32
    %c0_i32_2 = arith.constant 0 : i32
    return %c0_i32, %c0_i32_0, %c0_i32_1 : i32, i32, i32
  }
  func.func @transform_7(%arg0: i32) -> (i32, i32, i32) {
    %c0_i32 = arith.constant 0 : i32
    %c0_i32_0 = arith.constant 0 : i32
    %c0_i32_1 = arith.constant 0 : i32
    %c0_i32_2 = arith.constant 0 : i32
    return %c0_i32, %c0_i32_0, %c0_i32_1 : i32, i32, i32
  }
  func.func @transform_8(%arg0: i32) -> (i32, i32, i32) {
    %c0_i32 = arith.constant 0 : i32
    %c0_i32_0 = arith.constant 0 : i32
    %c0_i32_1 = arith.constant 0 : i32
    %c0_i32_2 = arith.constant 0 : i32
    return %c0_i32, %c0_i32_0, %c0_i32_1 : i32, i32, i32
  }
  func.func @transform_9(%arg0: i32) -> (i32, i32, i32) {
    %c0_i32 = arith.constant 0 : i32
    %c0_i32_0 = arith.constant 0 : i32
    %c0_i32_1 = arith.constant 0 : i32
    %c0_i32_2 = arith.constant 0 : i32
    return %c0_i32, %c0_i32_0, %c0_i32_1 : i32, i32, i32
  }
  func.func @transform_10(%arg0: i32) -> (i32, i32, i32) {
    %c0_i32 = arith.constant 0 : i32
    %c0_i32_0 = arith.constant 0 : i32
    %c0_i32_1 = arith.constant 0 : i32
    %c0_i32_2 = arith.constant 0 : i32
    return %c0_i32, %c0_i32_0, %c0_i32_1 : i32, i32, i32
  }
  func.func @transform_11(%arg0: i32) -> (i32, i32) {
    %c0_i32 = arith.constant 0 : i32
    %c0_i32_0 = arith.constant 0 : i32
    %c0_i32_1 = arith.constant 0 : i32
    return %c0_i32, %c0_i32_0 : i32, i32
  }
  func.func @transform_12(%arg0: i32) -> (i32, i32) {
    %c0_i32 = arith.constant 0 : i32
    %c0_i32_0 = arith.constant 0 : i32
    %c0_i32_1 = arith.constant 0 : i32
    return %c0_i32, %c0_i32_0 : i32, i32
  }
  func.func @transform_13(%arg0: i32) -> (i32, i32) {
    %c0_i32 = arith.constant 0 : i32
    %c0_i32_0 = arith.constant 0 : i32
    %c0_i32_1 = arith.constant 0 : i32
    return %c0_i32, %c0_i32_0 : i32, i32
  }
  func.func @transform_14(%arg0: i32) -> (i32, i32, i32) {
    %c0_i32 = arith.constant 0 : i32
    %c0_i32_0 = arith.constant 0 : i32
    %c0_i32_1 = arith.constant 0 : i32
    return %arg0, %c0_i32, %c0_i32_0 : i32, i32, i32
  }
}

</mosaic_0001>

<llo_original>
// kernel: tpu_custom_call.1
$region0: #{tpu_custom_call.1}
  #allocation0 [shape = 'u32[]', space=smem, size = 0x4, offset = 0x4, fixed_abs, tag = 'smem constant byte address 0x4 - core index']
  #allocation1 [shape = 'u32[144,128]{1,0:T(1,128)}', space=vmem, size = 0x12000, scoped, tag = 'internal scratch']
  %s0 = inlined_call_operand.vmem [shape: f32[2,8,128], index: 0, kind: input, shape index: {}]
  %s1 = inlined_call_operand.vmem [shape: f32[2,16,128], index: 1, kind: input, shape index: {}]
  %s2 = inlined_call_operand.vmem [shape: f32[2,8,128], index: 2, kind: input, shape index: {}]
  %s3 = inlined_call_operand.vmem [shape: f32[2,16,128], index: 3, kind: input, shape index: {}]
  %s4 = inlined_call_operand.vmem [shape: f32[4,128,32], index: 4, kind: input, shape index: {}]
  %s5 = inlined_call_operand.vmem [shape: f32[4,1,32], index: 5, kind: input, shape index: {}]
  %s6 = inlined_call_operand.vmem [shape: f32[4,128,32], index: 6, kind: input, shape index: {}]
  %s7 = inlined_call_operand.vmem [shape: f32[4,1,32], index: 7, kind: input, shape index: {}]
  %s8 = inlined_call_operand.vmem [shape: f32[4,128,32], index: 8, kind: input, shape index: {}]
  %s9 = inlined_call_operand.vmem [shape: f32[4,1,32], index: 9, kind: input, shape index: {}]
  %s10 = inlined_call_operand.vmem [shape: f32[4,32,128], index: 10, kind: input, shape index: {}]
  %s11 = inlined_call_operand.vmem [shape: f32[1,128], index: 11, kind: input, shape index: {}]
  %s12 = inlined_call_operand.vmem [shape: f32[1,128], index: 12, kind: input, shape index: {}]
  %s13 = inlined_call_operand.vmem [shape: f32[1,128], index: 13, kind: input, shape index: {}]
  %s14 = inlined_call_operand.hbm [shape: f32[2,8,128], index: 14, kind: output, shape index: {}]
  %s15 = sld [smem:[#allocation0]]
  $region89: #{tpu_custom_call.1} parent=0
    _
  %s17 = ssub.s32 1, %s15
  %s18 = scalar_select 0, %s17, %s15
  $region1: #{tpu_custom_call.1} parent=0
    #allocation2 [shape = 'u8[8192]{0}', space=vmem, size = 0x2000, scoped, tag = 'output window, operand 0']
    #allocation3 [shape = 's32[2]{0}', space=sflag, size = 0x8, scoped, tag = 'scoped memory for tpu_custom_call.1']
    %19 = vsyncpa [#allocation3], 0
    %s20 = scalar_lea.sflag [#allocation3], 1
    %21 = vsyncpa %s20, 0
    loop: start=0, step=1, limit=4
    $region2: #{tpu_custom_call.1} parent=1 // loop_pre_header
      _
    $region3: #{tpu_custom_call.1} parent=1 // loop_header
      %s23 = sphi 0, %s27
      %p24 = scmp.ge.s32.totalorder %s23, 4
      %s33 = sphi 0, %s35
      %s36 = sphi 0, %s33
      %s37 = sphi 0, %s36
      %s53 = sphi 0, %s37
      %s59 = sphi 0, %s61
      %s62 = sphi 0, %s59
      %s63 = sphi 0, %s62
      %s79 = sphi 0, %s63
      %s85 = sphi 0, %s87
      %s88 = sphi 0, %s85
      %s89 = sphi 0, %s88
      %s105 = sphi 0, %s89
      %s111 = sphi 0, %s113
      %s114 = sphi 0, %s111
      %s115 = sphi 0, %s114
      %s131 = sphi 0, %s115
      %s135 = sphi 0, %s135
      %s137 = sphi 0, %s135
      %s138 = sphi 0, %s137
      %s152 = sphi 0, %s138
      %s156 = sphi 0, %s156
      %s158 = sphi 0, %s156
      %s159 = sphi 0, %s158
      %s173 = sphi 0, %s159
      %s177 = sphi 0, %s177
      %s179 = sphi 0, %s177
      %s180 = sphi 0, %s179
      %s194 = sphi 0, %s180
      %s198 = sphi 0, %s198
      %s200 = sphi 0, %s198
      %s201 = sphi 0, %s200
      %s215 = sphi 0, %s201
      %s219 = sphi 0, %s219
      %s221 = sphi 0, %s219
      %s222 = sphi 0, %s221
      %s236 = sphi 0, %s222
      %s240 = sphi 0, %s240
      %s242 = sphi 0, %s240
      %s243 = sphi 0, %s242
      %s257 = sphi 0, %s243
      %s261 = sphi 0, %s261
      %s263 = sphi 0, %s261
      %s264 = sphi 0, %s263
      %s278 = sphi 0, %s264
      %s282 = sphi 0, %s282
      %s284 = sphi 0, %s282
      %s285 = sphi 0, %s284
      %s299 = sphi 0, %s285
      %s303 = sphi 0, %s303
      %s305 = sphi 0, %s303
      %s306 = sphi 0, %s305
      %s320 = sphi 0, %s306
      %s324 = sphi 0, %s324
      %s326 = sphi 0, %s324
      %s327 = sphi 0, %s326
      %s341 = sphi 0, %s327
      %s347 = sphi 0, %s349
      %s350 = sphi 0, %s347
      %s351 = sphi 0, %s350
      %s367 = sphi 0, %s351
    $region4: #{tpu_custom_call.1} parent=1 // loop_header_branch
      %26 = sbr.rel (%p24) target = $region8
    $region5: #{tpu_custom_call.1} parent=1 // loop_body
      %s28 = ssub.s32 %s23, 1
      %s29 = ssub.s32 %s23, 2
      %s30 = sadd.s32 %s23, 1
      %s31 = ssub.s32 %s23, %s30
      %p32 = scmp.eq.s32.totalorder %s31, 0
      %s34 = sadd.s32 %s33, 1
      %s35 = scalar_select %p32, %s33, %s34
      %p38 = pneg %p32
      %p39 = scmp.eq.s32.totalorder %s23, 1
      %p40 = por %p38, %p39
      %p41 = scmp.ne.s32.totalorder %s33, %s36
      %p42 = scmp.eq.s32.totalorder %s23, 0
      %p43 = por %p41, %p42
      %p44 = scmp.ne.s32.totalorder %s33, %s36
      %p45 = scmp.eq.s32.totalorder %s28, 1
      %p46 = por %p44, %p45
      %p47 = scmp.ne.s32.totalorder %s36, %s37
      %p48 = scmp.eq.s32.totalorder %s28, 0
      %p49 = por %p47, %p48
      %p50 = scmp.ne.s32.totalorder %s36, %s37
      %p51 = scmp.eq.s32.totalorder %s29, 1
      %p52 = por %p50, %p51
      %p54 = scmp.ne.s32.totalorder %s37, %s53
      %p55 = scmp.eq.s32.totalorder %s29, 0
      %p56 = por %p54, %p55
      %s57 = ssub.s32 %s23, %s30
      %p58 = scmp.eq.s32.totalorder %s57, 0
      %s60 = sadd.s32 %s59, 1
      %s61 = scalar_select %p58, %s59, %s60
      %p64 = pneg %p58
      %p65 = scmp.eq.s32.totalorder %s23, 1
      %p66 = por %p64, %p65
      %p67 = scmp.ne.s32.totalorder %s59, %s62
      %p68 = scmp.eq.s32.totalorder %s23, 0
      %p69 = por %p67, %p68
      %p70 = scmp.ne.s32.totalorder %s59, %s62
      %p71 = scmp.eq.s32.totalorder %s28, 1
      %p72 = por %p70, %p71
      %p73 = scmp.ne.s32.totalorder %s62, %s63
      %p74 = scmp.eq.s32.totalorder %s28, 0
      %p75 = por %p73, %p74
      %p76 = scmp.ne.s32.totalorder %s62, %s63
      %p77 = scmp.eq.s32.totalorder %s29, 1
      %p78 = por %p76, %p77
      %p80 = scmp.ne.s32.totalorder %s63, %s79
      %p81 = scmp.eq.s32.totalorder %s29, 0
      %p82 = por %p80, %p81
      %s83 = ssub.s32 %s23, %s30
      %p84 = scmp.eq.s32.totalorder %s83, 0
      %s86 = sadd.s32 %s85, 1
      %s87 = scalar_select %p84, %s85, %s86
      %p90 = pneg %p84
      %p91 = scmp.eq.s32.totalorder %s23, 1
      %p92 = por %p90, %p91
      %p93 = scmp.ne.s32.totalorder %s85, %s88
      %p94 = scmp.eq.s32.totalorder %s23, 0
      %p95 = por %p93, %p94
      %p96 = scmp.ne.s32.totalorder %s85, %s88
      %p97 = scmp.eq.s32.totalorder %s28, 1
      %p98 = por %p96, %p97
      %p99 = scmp.ne.s32.totalorder %s88, %s89
      %p100 = scmp.eq.s32.totalorder %s28, 0
      %p101 = por %p99, %p100
      %p102 = scmp.ne.s32.totalorder %s88, %s89
      %p103 = scmp.eq.s32.totalorder %s29, 1
      %p104 = por %p102, %p103
      %p106 = scmp.ne.s32.totalorder %s89, %s105
      %p107 = scmp.eq.s32.totalorder %s29, 0
      %p108 = por %p106, %p107
      %s109 = ssub.s32 %s23, %s30
      %p110 = scmp.eq.s32.totalorder %s109, 0
      %s112 = sadd.s32 %s111, 1
      %s113 = scalar_select %p110, %s111, %s112
      %p116 = pneg %p110
      %p117 = scmp.eq.s32.totalorder %s23, 1
      %p118 = por %p116, %p117
      %p119 = scmp.ne.s32.totalorder %s111, %s114
      %p120 = scmp.eq.s32.totalorder %s23, 0
      %p121 = por %p119, %p120
      %p122 = scmp.ne.s32.totalorder %s111, %s114
      %p123 = scmp.eq.s32.totalorder %s28, 1
      %p124 = por %p122, %p123
      %p125 = scmp.ne.s32.totalorder %s114, %s115
      %p126 = scmp.eq.s32.totalorder %s28, 0
      %p127 = por %p125, %p126
      %p128 = scmp.ne.s32.totalorder %s114, %s115
      %p129 = scmp.eq.s32.totalorder %s29, 1
      %p130 = por %p128, %p129
      %p132 = scmp.ne.s32.totalorder %s115, %s131
      %p133 = scmp.eq.s32.totalorder %s29, 0
      %p134 = por %p132, %p133
      %s136 = sadd.s32 %s135, 1
      %p139 = scmp.eq.s32.totalorder %s23, 1
      %p140 = scmp.ne.s32.totalorder %s135, %s137
      %p141 = scmp.eq.s32.totalorder %s23, 0
      %p142 = por %p140, %p141
      %p143 = scmp.ne.s32.totalorder %s135, %s137
      %p144 = scmp.eq.s32.totalorder %s28, 1
      %p145 = por %p143, %p144
      %p146 = scmp.ne.s32.totalorder %s137, %s138
      %p147 = scmp.eq.s32.totalorder %s28, 0
      %p148 = por %p146, %p147
      %p149 = scmp.ne.s32.totalorder %s137, %s138
      %p150 = scmp.eq.s32.totalorder %s29, 1
      %p151 = por %p149, %p150
      %p153 = scmp.ne.s32.totalorder %s138, %s152
      %p154 = scmp.eq.s32.totalorder %s29, 0
      %p155 = por %p153, %p154
      %s157 = sadd.s32 %s156, 1
      %p160 = scmp.eq.s32.totalorder %s23, 1
      %p161 = scmp.ne.s32.totalorder %s156, %s158
      %p162 = scmp.eq.s32.totalorder %s23, 0
      %p163 = por %p161, %p162
      %p164 = scmp.ne.s32.totalorder %s156, %s158
      %p165 = scmp.eq.s32.totalorder %s28, 1
      %p166 = por %p164, %p165
      %p167 = scmp.ne.s32.totalorder %s158, %s159
      %p168 = scmp.eq.s32.totalorder %s28, 0
      %p169 = por %p167, %p168
      %p170 = scmp.ne.s32.totalorder %s158, %s159
      %p171 = scmp.eq.s32.totalorder %s29, 1
      %p172 = por %p170, %p171
      %p174 = scmp.ne.s32.totalorder %s159, %s173
      %p175 = scmp.eq.s32.totalorder %s29, 0
      %p176 = por %p174, %p175
      %s178 = sadd.s32 %s177, 1
      %p181 = scmp.eq.s32.totalorder %s23, 1
      %p182 = scmp.ne.s32.totalorder %s177, %s179
      %p183 = scmp.eq.s32.totalorder %s23, 0
      %p184 = por %p182, %p183
      %p185 = scmp.ne.s32.totalorder %s177, %s179
      %p186 = scmp.eq.s32.totalorder %s28, 1
      %p187 = por %p185, %p186
      %p188 = scmp.ne.s32.totalorder %s179, %s180
      %p189 = scmp.eq.s32.totalorder %s28, 0
      %p190 = por %p188, %p189
      %p191 = scmp.ne.s32.totalorder %s179, %s180
      %p192 = scmp.eq.s32.totalorder %s29, 1
      %p193 = por %p191, %p192
      %p195 = scmp.ne.s32.totalorder %s180, %s194
      %p196 = scmp.eq.s32.totalorder %s29, 0
      %p197 = por %p195, %p196
      %s199 = sadd.s32 %s198, 1
      %p202 = scmp.eq.s32.totalorder %s23, 1
      %p203 = scmp.ne.s32.totalorder %s198, %s200
      %p204 = scmp.eq.s32.totalorder %s23, 0
      %p205 = por %p203, %p204
      %p206 = scmp.ne.s32.totalorder %s198, %s200
      %p207 = scmp.eq.s32.totalorder %s28, 1
      %p208 = por %p206, %p207
      %p209 = scmp.ne.s32.totalorder %s200, %s201
      %p210 = scmp.eq.s32.totalorder %s28, 0
      %p211 = por %p209, %p210
      %p212 = scmp.ne.s32.totalorder %s200, %s201
      %p213 = scmp.eq.s32.totalorder %s29, 1
      %p214 = por %p212, %p213
      %p216 = scmp.ne.s32.totalorder %s201, %s215
      %p217 = scmp.eq.s32.totalorder %s29, 0
      %p218 = por %p216, %p217
      %s220 = sadd.s32 %s219, 1
      %p223 = scmp.eq.s32.totalorder %s23, 1
      %p224 = scmp.ne.s32.totalorder %s219, %s221
      %p225 = scmp.eq.s32.totalorder %s23, 0
      %p226 = por %p224, %p225
      %p227 = scmp.ne.s32.totalorder %s219, %s221
      %p228 = scmp.eq.s32.totalorder %s28, 1
      %p229 = por %p227, %p228
      %p230 = scmp.ne.s32.totalorder %s221, %s222
      %p231 = scmp.eq.s32.totalorder %s28, 0
      %p232 = por %p230, %p231
      %p233 = scmp.ne.s32.totalorder %s221, %s222
      %p234 = scmp.eq.s32.totalorder %s29, 1
      %p235 = por %p233, %p234
      %p237 = scmp.ne.s32.totalorder %s222, %s236
      %p238 = scmp.eq.s32.totalorder %s29, 0
      %p239 = por %p237, %p238
      %s241 = sadd.s32 %s240, 1
      %p244 = scmp.eq.s32.totalorder %s23, 1
      %p245 = scmp.ne.s32.totalorder %s240, %s242
      %p246 = scmp.eq.s32.totalorder %s23, 0
      %p247 = por %p245, %p246
      %p248 = scmp.ne.s32.totalorder %s240, %s242
      %p249 = scmp.eq.s32.totalorder %s28, 1
      %p250 = por %p248, %p249
      %p251 = scmp.ne.s32.totalorder %s242, %s243
      %p252 = scmp.eq.s32.totalorder %s28, 0
      %p253 = por %p251, %p252
      %p254 = scmp.ne.s32.totalorder %s242, %s243
      %p255 = scmp.eq.s32.totalorder %s29, 1
      %p256 = por %p254, %p255
      %p258 = scmp.ne.s32.totalorder %s243, %s257
      %p259 = scmp.eq.s32.totalorder %s29, 0
      %p260 = por %p258, %p259
      %s262 = sadd.s32 %s261, 1
      %p265 = scmp.eq.s32.totalorder %s23, 1
      %p266 = scmp.ne.s32.totalorder %s261, %s263
      %p267 = scmp.eq.s32.totalorder %s23, 0
      %p268 = por %p266, %p267
      %p269 = scmp.ne.s32.totalorder %s261, %s263
      %p270 = scmp.eq.s32.totalorder %s28, 1
      %p271 = por %p269, %p270
      %p272 = scmp.ne.s32.totalorder %s263, %s264
      %p273 = scmp.eq.s32.totalorder %s28, 0
      %p274 = por %p272, %p273
      %p275 = scmp.ne.s32.totalorder %s263, %s264
      %p276 = scmp.eq.s32.totalorder %s29, 1
      %p277 = por %p275, %p276
      %p279 = scmp.ne.s32.totalorder %s264, %s278
      %p280 = scmp.eq.s32.totalorder %s29, 0
      %p281 = por %p279, %p280
      %s283 = sadd.s32 %s282, 1
      %p286 = scmp.eq.s32.totalorder %s23, 1
      %p287 = scmp.ne.s32.totalorder %s282, %s284
      %p288 = scmp.eq.s32.totalorder %s23, 0
      %p289 = por %p287, %p288
      %p290 = scmp.ne.s32.totalorder %s282, %s284
      %p291 = scmp.eq.s32.totalorder %s28, 1
      %p292 = por %p290, %p291
      %p293 = scmp.ne.s32.totalorder %s284, %s285
      %p294 = scmp.eq.s32.totalorder %s28, 0
      %p295 = por %p293, %p294
      %p296 = scmp.ne.s32.totalorder %s284, %s285
      %p297 = scmp.eq.s32.totalorder %s29, 1
      %p298 = por %p296, %p297
      %p300 = scmp.ne.s32.totalorder %s285, %s299
      %p301 = scmp.eq.s32.totalorder %s29, 0
      %p302 = por %p300, %p301
      %s304 = sadd.s32 %s303, 1
      %p307 = scmp.eq.s32.totalorder %s23, 1
      %p308 = scmp.ne.s32.totalorder %s303, %s305
      %p309 = scmp.eq.s32.totalorder %s23, 0
      %p310 = por %p308, %p309
      %p311 = scmp.ne.s32.totalorder %s303, %s305
      %p312 = scmp.eq.s32.totalorder %s28, 1
      %p313 = por %p311, %p312
      %p314 = scmp.ne.s32.totalorder %s305, %s306
      %p315 = scmp.eq.s32.totalorder %s28, 0
      %p316 = por %p314, %p315
      %p317 = scmp.ne.s32.totalorder %s305, %s306
      %p318 = scmp.eq.s32.totalorder %s29, 1
      %p319 = por %p317, %p318
      %p321 = scmp.ne.s32.totalorder %s306, %s320
      %p322 = scmp.eq.s32.totalorder %s29, 0
      %p323 = por %p321, %p322
      %s325 = sadd.s32 %s324, 1
      %p328 = scmp.eq.s32.totalorder %s23, 1
      %p329 = scmp.ne.s32.totalorder %s324, %s326
      %p330 = scmp.eq.s32.totalorder %s23, 0
      %p331 = por %p329, %p330
      %p332 = scmp.ne.s32.totalorder %s324, %s326
      %p333 = scmp.eq.s32.totalorder %s28, 1
      %p334 = por %p332, %p333
      %p335 = scmp.ne.s32.totalorder %s326, %s327
      %p336 = scmp.eq.s32.totalorder %s28, 0
      %p337 = por %p335, %p336
      %p338 = scmp.ne.s32.totalorder %s326, %s327
      %p339 = scmp.eq.s32.totalorder %s29, 1
      %p340 = por %p338, %p339
      %p342 = scmp.ne.s32.totalorder %s327, %s341
      %p343 = scmp.eq.s32.totalorder %s29, 0
      %p344 = por %p342, %p343
      %s345 = ssub.s32 %s23, %s30
      %p346 = scmp.eq.s32.totalorder %s345, 0
      %s348 = sadd.s32 %s347, 1
      %s349 = scalar_select %p346, %s347, %s348
      %p352 = pneg %p346
      %p353 = scmp.eq.s32.totalorder %s23, 1
      %p354 = por %p352, %p353
      %p355 = scmp.ne.s32.totalorder %s347, %s350
      %p356 = scmp.eq.s32.totalorder %s23, 0
      %p357 = por %p355, %p356
      %p358 = scmp.ne.s32.totalorder %s347, %s350
      %p359 = scmp.eq.s32.totalorder %s28, 1
      %p360 = por %p358, %p359
      %p361 = scmp.ne.s32.totalorder %s350, %s351
      %p362 = scmp.eq.s32.totalorder %s28, 0
      %p363 = por %p361, %p362
      %p364 = scmp.ne.s32.totalorder %s350, %s351
      %p365 = scmp.eq.s32.totalorder %s29, 1
      %p366 = por %p364, %p365
      %p368 = scmp.ne.s32.totalorder %s351, %s367
      %p369 = scmp.eq.s32.totalorder %s29, 0
      %p370 = por %p368, %p369
      %p371 = scmp.le.s32.totalorder 1, %s23
      %p372 = scmp.lt.s32.totalorder %s23, 3
      %p373 = pnand %p371, %p372
      %p374 = pneg %p373
      // Predicated region
      $region9: #{tpu_custom_call.1} parent=5 // pred_check
        _
      $region10: #{tpu_custom_call.1} parent=5 // pred_check_branch
        %376 = sbr.rel (%p373) target = $region12
      $region11: #{tpu_custom_call.1} parent=5 // pred_region
        %s377 = ssub.s32 %s23, 1
        // Predicated region
        $region13: #{tpu_custom_call.1} parent=11 // pred_check
          %p378 = pneg %p148
        $region14: #{tpu_custom_call.1} parent=11 // pred_check_branch
          %380 = sbr.rel (%p378) target = $region16
        $region15: #{tpu_custom_call.1} parent=11 // pred_region
          _
        $region16: #{tpu_custom_call.1} parent=11 // pred_fallthru
          _
        // Predicated region
        $region17: #{tpu_custom_call.1} parent=11 // pred_check
          %p381 = pneg %p169
        $region18: #{tpu_custom_call.1} parent=11 // pred_check_branch
          %383 = sbr.rel (%p381) target = $region20
        $region19: #{tpu_custom_call.1} parent=11 // pred_region
          _
        $region20: #{tpu_custom_call.1} parent=11 // pred_fallthru
          _
        // Predicated region
        $region21: #{tpu_custom_call.1} parent=11 // pred_check
          %p384 = pneg %p190
        $region22: #{tpu_custom_call.1} parent=11 // pred_check_branch
          %386 = sbr.rel (%p384) target = $region24
        $region23: #{tpu_custom_call.1} parent=11 // pred_region
          _
        $region24: #{tpu_custom_call.1} parent=11 // pred_fallthru
          _
        // Predicated region
        $region25: #{tpu_custom_call.1} parent=11 // pred_check
          %p387 = pneg %p211
        $region26: #{tpu_custom_call.1} parent=11 // pred_check_branch
          %389 = sbr.rel (%p387) target = $region28
        $region27: #{tpu_custom_call.1} parent=11 // pred_region
          _
        $region28: #{tpu_custom_call.1} parent=11 // pred_fallthru
          _
        // Predicated region
        $region29: #{tpu_custom_call.1} parent=11 // pred_check
          %p390 = pneg %p232
        $region30: #{tpu_custom_call.1} parent=11 // pred_check_branch
          %392 = sbr.rel (%p390) target = $region32
        $region31: #{tpu_custom_call.1} parent=11 // pred_region
          _
        $region32: #{tpu_custom_call.1} parent=11 // pred_fallthru
          _
        // Predicated region
        $region33: #{tpu_custom_call.1} parent=11 // pred_check
          %p393 = pneg %p253
        $region34: #{tpu_custom_call.1} parent=11 // pred_check_branch
          %395 = sbr.rel (%p393) target = $region36
        $region35: #{tpu_custom_call.1} parent=11 // pred_region
          _
        $region36: #{tpu_custom_call.1} parent=11 // pred_fallthru
          _
        // Predicated region
        $region37: #{tpu_custom_call.1} parent=11 // pred_check
          %p396 = pneg %p274
        $region38: #{tpu_custom_call.1} parent=11 // pred_check_branch
          %398 = sbr.rel (%p396) target = $region40
        $region39: #{tpu_custom_call.1} parent=11 // pred_region
          _
        $region40: #{tpu_custom_call.1} parent=11 // pred_fallthru
          _
        // Predicated region
        $region41: #{tpu_custom_call.1} parent=11 // pred_check
          %p399 = pneg %p295
        $region42: #{tpu_custom_call.1} parent=11 // pred_check_branch
          %401 = sbr.rel (%p399) target = $region44
        $region43: #{tpu_custom_call.1} parent=11 // pred_region
          _
        $region44: #{tpu_custom_call.1} parent=11 // pred_fallthru
          _
        // Predicated region
        $region45: #{tpu_custom_call.1} parent=11 // pred_check
          %p402 = pneg %p316
        $region46: #{tpu_custom_call.1} parent=11 // pred_check_branch
          %404 = sbr.rel (%p402) target = $region48
        $region47: #{tpu_custom_call.1} parent=11 // pred_region
          _
        $region48: #{tpu_custom_call.1} parent=11 // pred_fallthru
          _
        // Predicated region
        $region49: #{tpu_custom_call.1} parent=11 // pred_check
          %p405 = pneg %p337
        $region50: #{tpu_custom_call.1} parent=11 // pred_check_branch
          %407 = sbr.rel (%p405) target = $region52
        $region51: #{tpu_custom_call.1} parent=11 // pred_region
          _
        $region52: #{tpu_custom_call.1} parent=11 // pred_fallthru
          _
      $region12: #{tpu_custom_call.1} parent=5 // pred_fallthru
        _
      %p408 = scmp.lt.s32.totalorder %s23, 2
      // Predicated region
      $region53: #{tpu_custom_call.1} parent=5 // pred_check
        %p409 = pneg %p408
      $region54: #{tpu_custom_call.1} parent=5 // pred_check_branch
        %411 = sbr.rel (%p409) target = $region56
      $region55: #{tpu_custom_call.1} parent=5 // pred_region
        // Predicated region
        $region57: #{tpu_custom_call.1} parent=55 // pred_check
          %p412 = pneg %p43
        $region58: #{tpu_custom_call.1} parent=55 // pred_check_branch
          %414 = sbr.rel (%p412) target = $region60
        $region59: #{tpu_custom_call.1} parent=55 // pred_region
          %p415 = scmp.lt.s32.totalorder %s23, 1
          %s416 = scalar_select %p415, %s23, 1
          %s417 = smul.addr %s416, 8
          %s418 = scalar_lea.vmem %s0, %s417
        $region60: #{tpu_custom_call.1} parent=55 // pred_fallthru
          _
        // Predicated region
        $region61: #{tpu_custom_call.1} parent=55 // pred_check
          %p419 = pneg %p69
        $region62: #{tpu_custom_call.1} parent=55 // pred_check_branch
          %421 = sbr.rel (%p419) target = $region64
        $region63: #{tpu_custom_call.1} parent=55 // pred_region
          %p422 = scmp.lt.s32.totalorder %s23, 1
          %s423 = scalar_select %p422, %s23, 1
          %s424 = smul.addr %s423, 2
          %s425 = smul.addr %s424, 8
          %s426 = scalar_lea.vmem %s1, %s425
        $region64: #{tpu_custom_call.1} parent=55 // pred_fallthru
          _
        // Predicated region
        $region65: #{tpu_custom_call.1} parent=55 // pred_check
          %p427 = pneg %p95
        $region66: #{tpu_custom_call.1} parent=55 // pred_check_branch
          %429 = sbr.rel (%p427) target = $region68
        $region67: #{tpu_custom_call.1} parent=55 // pred_region
          %p430 = scmp.lt.s32.totalorder %s23, 1
          %s431 = scalar_select %p430, %s23, 1
          %s432 = smul.addr %s431, 8
          %s433 = scalar_lea.vmem %s2, %s432
        $region68: #{tpu_custom_call.1} parent=55 // pred_fallthru
          _
        // Predicated region
        $region69: #{tpu_custom_call.1} parent=55 // pred_check
          %p434 = pneg %p121
        $region70: #{tpu_custom_call.1} parent=55 // pred_check_branch
          %436 = sbr.rel (%p434) target = $region72
        $region71: #{tpu_custom_call.1} parent=55 // pred_region
          %p437 = scmp.lt.s32.totalorder %s23, 1
          %s438 = scalar_select %p437, %s23, 1
          %s439 = smul.addr %s438, 2
          %s440 = smul.addr %s439, 8
          %s441 = scalar_lea.vmem %s3, %s440
        $region72: #{tpu_custom_call.1} parent=55 // pred_fallthru
          _
      $region56: #{tpu_custom_call.1} parent=5 // pred_fallthru
        _
      %p442 = scmp.le.s32.totalorder 1, %s23
      %p443 = scmp.lt.s32.totalorder %s23, 3
      %p444 = pnand %p442, %p443
      %p445 = pneg %p444
      // Predicated region
      $region73: #{tpu_custom_call.1} parent=5 // pred_check
        _
      $region74: #{tpu_custom_call.1} parent=5 // pred_check_branch
        %447 = sbr.rel (%p444) target = $region76
      $region75: #{tpu_custom_call.1} parent=5 // pred_region
        %s448 = ssub.s32 %s23, 1
        %p449 = scmp.lt.s32.totalorder %s28, 1
        %s450 = scalar_select %p449, %s28, 1
        %s451 = smul.addr %s450, 8
        %s452 = scalar_lea.vmem %s0, %s451
        %p453 = pneg %p49
        %p454 = pneg %p46
        %p455 = scmp.lt.s32.totalorder %s28, 1
        %s456 = scalar_select %p455, %s28, 1
        %s457 = smul.addr %s456, 2
        %s458 = smul.addr %s457, 8
        %s459 = scalar_lea.vmem %s1, %s458
        %p460 = pneg %p75
        %p461 = pneg %p72
        %p462 = scmp.lt.s32.totalorder %s28, 1
        %s463 = scalar_select %p462, %s28, 1
        %s464 = smul.addr %s463, 8
        %s465 = scalar_lea.vmem %s2, %s464
        %p466 = pneg %p101
        %p467 = pneg %p98
        %p468 = scmp.lt.s32.totalorder %s28, 1
        %s469 = scalar_select %p468, %s28, 1
        %s470 = smul.addr %s469, 2
        %s471 = smul.addr %s470, 8
        %s472 = scalar_lea.vmem %s3, %s471
        %p473 = pneg %p127
        %p474 = pneg %p124
        %p475 = pneg %p148
        %p476 = pneg %p145
        %p477 = pneg %p169
        %p478 = pneg %p166
        %p479 = pneg %p190
        %p480 = pneg %p187
        %p481 = pneg %p211
        %p482 = pneg %p208
        %p483 = pneg %p232
        %p484 = pneg %p229
        %p485 = pneg %p253
        %p486 = pneg %p250
        %p487 = pneg %p274
        %p488 = pneg %p271
        %p489 = pneg %p295
        %p490 = pneg %p292
        %p491 = pneg %p316
        %p492 = pneg %p313
        %p493 = pneg %p337
        %p494 = pneg %p334
        %p495 = pneg %p363
        %p496 = pneg %p360
        %s497 = sand.u32 %s350, 1
        %s498 = scalar_lea.sflag [#allocation3], %s497
        %s499 = sand.u32 %s350, 1
        %s500 = smul.addr %s499, 8
        %s501 = scalar_lea.vmem [#allocation2], %s500
        %p502 = scmp.lt.s32.totalorder %s28, 1
        %s503 = scalar_select %p502, %s28, 1
        %s504 = smul.addr %s503, 8
        %s505 = scalar_lea.vmem %s0, %s504
        %p506 = scmp.lt.s32.totalorder %s28, 1
        %s507 = scalar_select %p506, %s28, 1
        %s508 = smul.addr %s507, 2
        %s509 = smul.addr %s508, 8
        %s510 = scalar_lea.vmem %s1, %s509
        %p511 = scmp.lt.s32.totalorder %s28, 1
        %s512 = scalar_select %p511, %s28, 1
        %s513 = smul.addr %s512, 8
        %s514 = scalar_lea.vmem %s2, %s513
        %p515 = scmp.lt.s32.totalorder %s28, 1
        %s516 = scalar_select %p515, %s28, 1
        %s517 = smul.addr %s516, 2
        %s518 = smul.addr %s517, 8
        %s519 = scalar_lea.vmem %s3, %s518
        %v520 = vld [vmem:[%s505] sm:$0xff]
        %v521 = vld [vmem:[%s510] sm:$0xff]
        %v522 = vld [vmem:[%s510 + $0x8] sm:$0xff]
        %v523 = vld [vmem:[%s514] sm:$0xff]
        %v524 = vadd.f32 %v520, %v523
        %v525 = vld [vmem:[%s519] sm:$0xff]
        %v526 = vld [vmem:[%s519 + $0x8] sm:$0xff]
        %v527 = vadd.f32 %v521, %v525
        %v528 = vadd.f32 %v522, %v526
        %v529 = vld [vmem:[%s4] sm:$0xff]
        %v530 = vld [vmem:[%s4 + $0x8] sm:$0xff]
        %v531 = vld [vmem:[%s4 + $0x10] sm:$0xff]
        %v532 = vld [vmem:[%s4 + $0x18] sm:$0xff]
        %v533 = vld [vmem:[%s4 + $0x20] sm:$0xff]
        %v534 = vld [vmem:[%s4 + $0x28] sm:$0xff]
        %v535 = vld [vmem:[%s4 + $0x30] sm:$0xff]
        %v536 = vld [vmem:[%s4 + $0x38] sm:$0xff]
        %v537 = vld [vmem:[%s4 + $0x40] sm:$0xff]
        %v538 = vld [vmem:[%s4 + $0x48] sm:$0xff]
        %v539 = vld [vmem:[%s4 + $0x50] sm:$0xff]
        %v540 = vld [vmem:[%s4 + $0x58] sm:$0xff]
        %v541 = vld [vmem:[%s4 + $0x60] sm:$0xff]
        %v542 = vld [vmem:[%s4 + $0x68] sm:$0xff]
        %v543 = vld [vmem:[%s4 + $0x70] sm:$0xff]
        %v544 = vld [vmem:[%s4 + $0x78] sm:$0xff]
        %v545 = vld [vmem:[%s5] sm:$0x1]
        %v547 = vlaneseq
        %v548 = vshrl.u32 %v547, 7
        %v549 = vsub.s32 0, %v548
        %v550 = vrot.slane %v545, %v549
        %552 = vmatprep.subr.mxu0 0.0
        %553 = vmatpush1.msra.mxu0 %v529
        %554 = vmatprep.subr.mxu0 0.0
        %555 = vmatpush1.msra.mxu0 %v530
        %556 = vmatprep.subr.mxu0 0.0
        %557 = vmatpush1.msra.mxu0 %v531
        %558 = vmatprep.subr.mxu0 0.0
        %559 = vmatpush1.msra.mxu0 %v532
        %560 = vmatprep.subr.mxu0 0.0
        %561 = vmatpush1.msra.mxu0 %v533
        %562 = vmatprep.subr.mxu0 0.0
        %563 = vmatpush1.msra.mxu0 %v534
        %564 = vmatprep.subr.mxu0 0.0
        %565 = vmatpush1.msra.mxu0 %v535
        %566 = vmatprep.subr.mxu0 0.0
        %567 = vmatpush1.msra.mxu0 %v536
        %568 = vmatprep.subr.mxu0 0.0
        %569 = vmatpush1.msra.mxu0 %v537
        %570 = vmatprep.subr.mxu0 0.0
        %571 = vmatpush1.msra.mxu0 %v538
        %572 = vmatprep.subr.mxu0 0.0
        %573 = vmatpush1.msra.mxu0 %v539
        %574 = vmatprep.subr.mxu0 0.0
        %575 = vmatpush1.msra.mxu0 %v540
        %576 = vmatprep.subr.mxu0 0.0
        %577 = vmatpush1.msra.mxu0 %v541
        %578 = vmatprep.subr.mxu0 0.0
        %579 = vmatpush1.msra.mxu0 %v542
        %580 = vmatprep.subr.mxu0 0.0
        %581 = vmatpush1.msra.mxu0 %v543
        %582 = vmatprep.subr.mxu0 0.0
        %583 = vmatpush1.msra.mxu0 %v544
        %584 = vmatprep.subr.mxu0 0.0
        %585 = vmatpush1.msra.mxu0 0.0
        %586 = vmatprep.subr.mxu0 0.0
        %587 = vmatpush1.msra.mxu0 0.0
        %588 = vmatprep.subr.mxu0 0.0
        %589 = vmatpush1.msra.mxu0 0.0
        %590 = vmatprep.subr.mxu0 0.0
        %591 = vmatpush1.msra.mxu0 0.0
        %592 = vmatprep.subr.mxu0 0.0
        %593 = vmatpush1.msra.mxu0 0.0
        %594 = vmatprep.subr.mxu0 0.0
        %595 = vmatpush1.msra.mxu0 0.0
        %596 = vmatprep.subr.mxu0 0.0
        %597 = vmatpush1.msra.mxu0 0.0
        %598 = vmatprep.subr.mxu0 0.0
        %599 = vmatpush1.msra.mxu0 0.0
        %600 = vmatprep.subr.mxu0 0.0
        %601 = vmatpush1.msra.mxu0 0.0
        %602 = vmatprep.subr.mxu0 0.0
        %603 = vmatpush1.msra.mxu0 0.0
        %604 = vmatprep.subr.mxu0 0.0
        %605 = vmatpush1.msra.mxu0 0.0
        %606 = vmatprep.subr.mxu0 0.0
        %607 = vmatpush1.msra.mxu0 0.0
        %608 = vmatprep.subr.mxu0 0.0
        %609 = vmatpush1.msra.mxu0 0.0
        %610 = vmatprep.subr.mxu0 0.0
        %611 = vmatpush1.msra.mxu0 0.0
        %612 = vmatprep.subr.mxu0 0.0
        %613 = vmatpush1.msra.mxu0 0.0
        %614 = vmatprep.subr.mxu0 0.0
        %615 = vmatpush1.msra.mxu0 0.0
        %616 = vmatprep.mubr.f32.mxu0 0.0
        %617 = vmatmul.mubr.f32.gmra.mrb[0].mxu0 %v524
        %v618 = vpop.f32.mrb[0].mxu0
        %v619 = vadd.f32 %v550, %v618
        %v620 = vpop.f32.mrb[0].mxu0
        %621 = vdwg.mxu0
        %v622 = vld [vmem:[%s6] sm:$0xff]
        %v623 = vld [vmem:[%s6 + $0x8] sm:$0xff]
        %v624 = vld [vmem:[%s6 + $0x10] sm:$0xff]
        %v625 = vld [vmem:[%s6 + $0x18] sm:$0xff]
        %v626 = vld [vmem:[%s6 + $0x20] sm:$0xff]
        %v627 = vld [vmem:[%s6 + $0x28] sm:$0xff]
        %v628 = vld [vmem:[%s6 + $0x30] sm:$0xff]
        %v629 = vld [vmem:[%s6 + $0x38] sm:$0xff]
        %v630 = vld [vmem:[%s6 + $0x40] sm:$0xff]
        %v631 = vld [vmem:[%s6 + $0x48] sm:$0xff]
        %v632 = vld [vmem:[%s6 + $0x50] sm:$0xff]
        %v633 = vld [vmem:[%s6 + $0x58] sm:$0xff]
        %v634 = vld [vmem:[%s6 + $0x60] sm:$0xff]
        %v635 = vld [vmem:[%s6 + $0x68] sm:$0xff]
        %v636 = vld [vmem:[%s6 + $0x70] sm:$0xff]
        %v637 = vld [vmem:[%s6 + $0x78] sm:$0xff]
        %v638 = vld [vmem:[%s7] sm:$0x1]
        %v640 = vlaneseq
        %v641 = vshrl.u32 %v640, 7
        %v642 = vsub.s32 0, %v641
        %v643 = vrot.slane %v638, %v642
        %645 = vmatprep.subr.mxu0 0.0
        %646 = vmatpush1.msra.mxu0 %v622
        %647 = vmatprep.subr.mxu0 0.0
        %648 = vmatpush1.msra.mxu0 %v623
        %649 = vmatprep.subr.mxu0 0.0
        %650 = vmatpush1.msra.mxu0 %v624
        %651 = vmatprep.subr.mxu0 0.0
        %652 = vmatpush1.msra.mxu0 %v625
        %653 = vmatprep.subr.mxu0 0.0
        %654 = vmatpush1.msra.mxu0 %v626
        %655 = vmatprep.subr.mxu0 0.0
        %656 = vmatpush1.msra.mxu0 %v627
        %657 = vmatprep.subr.mxu0 0.0
        %658 = vmatpush1.msra.mxu0 %v628
        %659 = vmatprep.subr.mxu0 0.0
        %660 = vmatpush1.msra.mxu0 %v629
        %661 = vmatprep.subr.mxu0 0.0
        %662 = vmatpush1.msra.mxu0 %v630
        %663 = vmatprep.subr.mxu0 0.0
        %664 = vmatpush1.msra.mxu0 %v631
        %665 = vmatprep.subr.mxu0 0.0
        %666 = vmatpush1.msra.mxu0 %v632
        %667 = vmatprep.subr.mxu0 0.0
        %668 = vmatpush1.msra.mxu0 %v633
        %669 = vmatprep.subr.mxu0 0.0
        %670 = vmatpush1.msra.mxu0 %v634
        %671 = vmatprep.subr.mxu0 0.0
        %672 = vmatpush1.msra.mxu0 %v635
        %673 = vmatprep.subr.mxu0 0.0
        %674 = vmatpush1.msra.mxu0 %v636
        %675 = vmatprep.subr.mxu0 0.0
        %676 = vmatpush1.msra.mxu0 %v637
        %677 = vmatprep.subr.mxu0 0.0
        %678 = vmatpush1.msra.mxu0 0.0
        %679 = vmatprep.subr.mxu0 0.0
        %680 = vmatpush1.msra.mxu0 0.0
        %681 = vmatprep.subr.mxu0 0.0
        %682 = vmatpush1.msra.mxu0 0.0
        %683 = vmatprep.subr.mxu0 0.0
        %684 = vmatpush1.msra.mxu0 0.0
        %685 = vmatprep.subr.mxu0 0.0
        %686 = vmatpush1.msra.mxu0 0.0
        %687 = vmatprep.subr.mxu0 0.0
        %688 = vmatpush1.msra.mxu0 0.0
        %689 = vmatprep.subr.mxu0 0.0
        %690 = vmatpush1.msra.mxu0 0.0
        %691 = vmatprep.subr.mxu0 0.0
        %692 = vmatpush1.msra.mxu0 0.0
        %693 = vmatprep.subr.mxu0 0.0
        %694 = vmatpush1.msra.mxu0 0.0
        %695 = vmatprep.subr.mxu0 0.0
        %696 = vmatpush1.msra.mxu0 0.0
        %697 = vmatprep.subr.mxu0 0.0
        %698 = vmatpush1.msra.mxu0 0.0
        %699 = vmatprep.subr.mxu0 0.0
        %700 = vmatpush1.msra.mxu0 0.0
        %701 = vmatprep.subr.mxu0 0.0
        %702 = vmatpush1.msra.mxu0 0.0
        %703 = vmatprep.subr.mxu0 0.0
        %704 = vmatpush1.msra.mxu0 0.0
        %705 = vmatprep.subr.mxu0 0.0
        %706 = vmatpush1.msra.mxu0 0.0
        %707 = vmatprep.subr.mxu0 0.0
        %708 = vmatpush1.msra.mxu0 0.0
        %709 = vmatprep.mubr.f32.mxu0 0.0
        %710 = vmatmul.mubr.f32.gmra.mrb[0].mxu0 %v527
        %v711 = vpop.f32.mrb[0].mxu0
        %v712 = vadd.f32 %v643, %v711
        %v713 = vpop.f32.mrb[0].mxu0
        %714 = vmatprep.mubr.f32.mxu0 0.0
        %715 = vmatmul.mubr.f32.gmra.mrb[0].mxu0 %v528
        %v716 = vpop.f32.mrb[0].mxu0
        %v717 = vadd.f32 %v643, %v716
        %v718 = vpop.f32.mrb[0].mxu0
        %719 = vdwg.mxu0
        %v720 = vld [vmem:[%s8] sm:$0xff]
        %v721 = vld [vmem:[%s8 + $0x8] sm:$0xff]
        %v722 = vld [vmem:[%s8 + $0x10] sm:$0xff]
        %v723 = vld [vmem:[%s8 + $0x18] sm:$0xff]
        %v724 = vld [vmem:[%s8 + $0x20] sm:$0xff]
        %v725 = vld [vmem:[%s8 + $0x28] sm:$0xff]
        %v726 = vld [vmem:[%s8 + $0x30] sm:$0xff]
        %v727 = vld [vmem:[%s8 + $0x38] sm:$0xff]
        %v728 = vld [vmem:[%s8 + $0x40] sm:$0xff]
        %v729 = vld [vmem:[%s8 + $0x48] sm:$0xff]
        %v730 = vld [vmem:[%s8 + $0x50] sm:$0xff]
        %v731 = vld [vmem:[%s8 + $0x58] sm:$0xff]
        %v732 = vld [vmem:[%s8 + $0x60] sm:$0xff]
        %v733 = vld [vmem:[%s8 + $0x68] sm:$0xff]
        %v734 = vld [vmem:[%s8 + $0x70] sm:$0xff]
        %v735 = vld [vmem:[%s8 + $0x78] sm:$0xff]
        %v736 = vld [vmem:[%s9] sm:$0x1]
        %v738 = vlaneseq
        %v739 = vshrl.u32 %v738, 7
        %v740 = vsub.s32 0, %v739
        %v741 = vrot.slane %v736, %v740
        %743 = vmatprep.subr.mxu0 0.0
        %744 = vmatpush1.msra.mxu0 %v720
        %745 = vmatprep.subr.mxu0 0.0
        %746 = vmatpush1.msra.mxu0 %v721
        %747 = vmatprep.subr.mxu0 0.0
        %748 = vmatpush1.msra.mxu0 %v722
        %749 = vmatprep.subr.mxu0 0.0
        %750 = vmatpush1.msra.mxu0 %v723
        %751 = vmatprep.subr.mxu0 0.0
        %752 = vmatpush1.msra.mxu0 %v724
        %753 = vmatprep.subr.mxu0 0.0
        %754 = vmatpush1.msra.mxu0 %v725
        %755 = vmatprep.subr.mxu0 0.0
        %756 = vmatpush1.msra.mxu0 %v726
        %757 = vmatprep.subr.mxu0 0.0
        %758 = vmatpush1.msra.mxu0 %v727
        %759 = vmatprep.subr.mxu0 0.0
        %760 = vmatpush1.msra.mxu0 %v728
        %761 = vmatprep.subr.mxu0 0.0
        %762 = vmatpush1.msra.mxu0 %v729
        %763 = vmatprep.subr.mxu0 0.0
        %764 = vmatpush1.msra.mxu0 %v730
        %765 = vmatprep.subr.mxu0 0.0
        %766 = vmatpush1.msra.mxu0 %v731
        %767 = vmatprep.subr.mxu0 0.0
        %768 = vmatpush1.msra.mxu0 %v732
        %769 = vmatprep.subr.mxu0 0.0
        %770 = vmatpush1.msra.mxu0 %v733
        %771 = vmatprep.subr.mxu0 0.0
        %772 = vmatpush1.msra.mxu0 %v734
        %773 = vmatprep.subr.mxu0 0.0
        %774 = vmatpush1.msra.mxu0 %v735
        %775 = vmatprep.subr.mxu0 0.0
        %776 = vmatpush1.msra.mxu0 0.0
        %777 = vmatprep.subr.mxu0 0.0
        %778 = vmatpush1.msra.mxu0 0.0
        %779 = vmatprep.subr.mxu0 0.0
        %780 = vmatpush1.msra.mxu0 0.0
        %781 = vmatprep.subr.mxu0 0.0
        %782 = vmatpush1.msra.mxu0 0.0
        %783 = vmatprep.subr.mxu0 0.0
        %784 = vmatpush1.msra.mxu0 0.0
        %785 = vmatprep.subr.mxu0 0.0
        %786 = vmatpush1.msra.mxu0 0.0
        %787 = vmatprep.subr.mxu0 0.0
        %788 = vmatpush1.msra.mxu0 0.0
        %789 = vmatprep.subr.mxu0 0.0
        %790 = vmatpush1.msra.mxu0 0.0
        %791 = vmatprep.subr.mxu0 0.0
        %792 = vmatpush1.msra.mxu0 0.0
        %793 = vmatprep.subr.mxu0 0.0
        %794 = vmatpush1.msra.mxu0 0.0
        %795 = vmatprep.subr.mxu0 0.0
        %796 = vmatpush1.msra.mxu0 0.0
        %797 = vmatprep.subr.mxu0 0.0
        %798 = vmatpush1.msra.mxu0 0.0
        %799 = vmatprep.subr.mxu0 0.0
        %800 = vmatpush1.msra.mxu0 0.0
        %801 = vmatprep.subr.mxu0 0.0
        %802 = vmatpush1.msra.mxu0 0.0
        %803 = vmatprep.subr.mxu0 0.0
        %804 = vmatpush1.msra.mxu0 0.0
        %805 = vmatprep.subr.mxu0 0.0
        %806 = vmatpush1.msra.mxu0 0.0
        %807 = vmatprep.mubr.f32.mxu0 0.0
        %808 = vmatmul.mubr.f32.gmra.mrb[0].mxu0 %v521
        %v809 = vpop.f32.mrb[0].mxu0
        %v810 = vadd.f32 %v741, %v809
        %v811 = vpop.f32.mrb[0].mxu0
        %812 = vmatprep.mubr.f32.mxu0 0.0
        %813 = vmatmul.mubr.f32.gmra.mrb[0].mxu0 %v522
        %v814 = vpop.f32.mrb[0].mxu0
        %v815 = vadd.f32 %v741, %v814
        %v816 = vpop.f32.mrb[0].mxu0
        %817 = vdwg.mxu0
        %vm818 = vcmask 261120
        %v820 = vsel %vm818, %v619, 0
        %v823 = vsel %vm818, %v712, 0
        %v826 = vsel %vm818, %v717, 0
        %828 = vmatprep.subr.mxu0 0.0
        %829 = vmatpush1.xpose.msra.mxu0 %v823
        %830 = vmatprep.subr.mxu0 0.0
        %831 = vmatpush1.xpose.msra.mxu0 %v826
        %832 = vmatprep.subr.mxu0 0.0
        %833 = vmatpush1.xpose.msra.mxu0 0.0
        %834 = vmatprep.subr.mxu0 0.0
        %835 = vmatpush1.xpose.msra.mxu0 0.0
        %836 = vmatprep.subr.mxu0 0.0
        %837 = vmatpush1.xpose.msra.mxu0 0.0
        %838 = vmatprep.subr.mxu0 0.0
        %839 = vmatpush1.xpose.msra.mxu0 0.0
        %840 = vmatprep.subr.mxu0 0.0
        %841 = vmatpush1.xpose.msra.mxu0 0.0
        %842 = vmatprep.subr.mxu0 0.0
        %843 = vmatpush1.xpose.msra.mxu0 0.0
        %844 = vmatprep.subr.mxu0 0.0
        %845 = vmatpush1.xpose.msra.mxu0 0.0
        %846 = vmatprep.subr.mxu0 0.0
        %847 = vmatpush1.xpose.msra.mxu0 0.0
        %848 = vmatprep.subr.mxu0 0.0
        %849 = vmatpush1.xpose.msra.mxu0 0.0
        %850 = vmatprep.subr.mxu0 0.0
        %851 = vmatpush1.xpose.msra.mxu0 0.0
        %852 = vmatprep.subr.mxu0 0.0
        %853 = vmatpush1.xpose.msra.mxu0 0.0
        %854 = vmatprep.subr.mxu0 0.0
        %855 = vmatpush1.xpose.msra.mxu0 0.0
        %856 = vmatprep.subr.mxu0 0.0
        %857 = vmatpush1.xpose.msra.mxu0 0.0
        %858 = vmatprep.subr.mxu0 0.0
        %859 = vmatpush1.xpose.msra.mxu0 0.0
        %860 = vmatprep.subr.mxu0 0.0
        %861 = vmatpush1.xpose.msra.mxu0 0.0
        %862 = vmatprep.subr.mxu0 0.0
        %863 = vmatpush1.xpose.msra.mxu0 0.0
        %864 = vmatprep.subr.mxu0 0.0
        %865 = vmatpush1.xpose.msra.mxu0 0.0
        %866 = vmatprep.subr.mxu0 0.0
        %867 = vmatpush1.xpose.msra.mxu0 0.0
        %868 = vmatprep.subr.mxu0 0.0
        %869 = vmatpush1.xpose.msra.mxu0 0.0
        %870 = vmatprep.subr.mxu0 0.0
        %871 = vmatpush1.xpose.msra.mxu0 0.0
        %872 = vmatprep.subr.mxu0 0.0
        %873 = vmatpush1.xpose.msra.mxu0 0.0
        %874 = vmatprep.subr.mxu0 0.0
        %875 = vmatpush1.xpose.msra.mxu0 0.0
        %876 = vmatprep.subr.mxu0 0.0
        %877 = vmatpush1.xpose.msra.mxu0 0.0
        %878 = vmatprep.subr.mxu0 0.0
        %879 = vmatpush1.xpose.msra.mxu0 0.0
        %880 = vmatprep.subr.mxu0 0.0
        %881 = vmatpush1.xpose.msra.mxu0 0.0
        %882 = vmatprep.subr.mxu0 0.0
        %883 = vmatpush1.xpose.msra.mxu0 0.0
        %884 = vmatprep.subr.mxu0 0.0
        %885 = vmatpush1.xpose.msra.mxu0 0.0
        %886 = vmatprep.subr.mxu0 0.0
        %887 = vmatpush1.xpose.msra.mxu0 0.0
        %888 = vmatprep.subr.mxu0 0.0
        %889 = vmatpush1.xpose.msra.mxu0 0.0
        %890 = vmatprep.subr.mxu0 0.0
        %891 = vmatpush1.xpose.msra.mxu0 0.0
        %892 = vmatprep.mubr.f32.mxu0 0.0
        %893 = vmatmul.mubr.f32.gmra.mrb[0].mxu0 %v820
        %v894 = vpop.f32.mrb[0].mxu0
        %v895 = vadd.f32 0.0, %v894
        %v896 = vpop.f32.mrb[0].mxu0
        %897 = vdwg.mxu0
        %v898 = vmul.f32 %v895, 0.17677669
        %vm899 = vcmask 130048
        %v900 = vsel %vm899, %v898, -inf
        %901 = vmax.xlane.f32.xlu0 %v900
        %v902 = vpop.xlane.xlu0 %901
        %v903 = vsub.f32 %v898, %v902
        %v904 = vmul.f32 %v903, 1.442695
        %v905 = vpow.pop %v904
        %v906 = vsel %vm899, %v905, 0.0
        %907 = vadd.xlane.f32.xlu0 %v906
        %v908 = vpop.xlane.xlu0 %907
        %v909 = vrcp.pop %v908
        %v910 = vmul.f32 %v905, %v909
        %v912 = vsel %vm899, %v910, 0
        %914 = vmatprep.subr.mxu0 0.0
        %915 = vmatpush1.msra.mxu0 %v810
        %916 = vmatprep.subr.mxu0 0.0
        %917 = vmatpush1.msra.mxu0 %v815
        %918 = vmatprep.subr.mxu0 0.0
        %919 = vmatpush1.msra.mxu0 0.0
        %920 = vmatprep.subr.mxu0 0.0
        %921 = vmatpush1.msra.mxu0 0.0
        %922 = vmatprep.subr.mxu0 0.0
        %923 = vmatpush1.msra.mxu0 0.0
        %924 = vmatprep.subr.mxu0 0.0
        %925 = vmatpush1.msra.mxu0 0.0
        %926 = vmatprep.subr.mxu0 0.0
        %927 = vmatpush1.msra.mxu0 0.0
        %928 = vmatprep.subr.mxu0 0.0
        %929 = vmatpush1.msra.mxu0 0.0
        %930 = vmatprep.subr.mxu0 0.0
        %931 = vmatpush1.msra.mxu0 0.0
        %932 = vmatprep.subr.mxu0 0.0
        %933 = vmatpush1.msra.mxu0 0.0
        %934 = vmatprep.subr.mxu0 0.0
        %935 = vmatpush1.msra.mxu0 0.0
        %936 = vmatprep.subr.mxu0 0.0
        %937 = vmatpush1.msra.mxu0 0.0
        %938 = vmatprep.subr.mxu0 0.0
        %939 = vmatpush1.msra.mxu0 0.0
        %940 = vmatprep.subr.mxu0 0.0
        %941 = vmatpush1.msra.mxu0 0.0
        %942 = vmatprep.subr.mxu0 0.0
        %943 = vmatpush1.msra.mxu0 0.0
        %944 = vmatprep.subr.mxu0 0.0
        %945 = vmatpush1.msra.mxu0 0.0
        %946 = vmatprep.subr.mxu0 0.0
        %947 = vmatpush1.msra.mxu0 0.0
        %948 = vmatprep.subr.mxu0 0.0
        %949 = vmatpush1.msra.mxu0 0.0
        %950 = vmatprep.subr.mxu0 0.0
        %951 = vmatpush1.msra.mxu0 0.0
        %952 = vmatprep.subr.mxu0 0.0
        %953 = vmatpush1.msra.mxu0 0.0
        %954 = vmatprep.subr.mxu0 0.0
        %955 = vmatpush1.msra.mxu0 0.0
        %956 = vmatprep.subr.mxu0 0.0
        %957 = vmatpush1.msra.mxu0 0.0
        %958 = vmatprep.subr.mxu0 0.0
        %959 = vmatpush1.msra.mxu0 0.0
        %960 = vmatprep.subr.mxu0 0.0
        %961 = vmatpush1.msra.mxu0 0.0
        %962 = vmatprep.subr.mxu0 0.0
        %963 = vmatpush1.msra.mxu0 0.0
        %964 = vmatprep.subr.mxu0 0.0
        %965 = vmatpush1.msra.mxu0 0.0
        %966 = vmatprep.subr.mxu0 0.0
        %967 = vmatpush1.msra.mxu0 0.0
        %968 = vmatprep.subr.mxu0 0.0
        %969 = vmatpush1.msra.mxu0 0.0
        %970 = vmatprep.subr.mxu0 0.0
        %971 = vmatpush1.msra.mxu0 0.0
        %972 = vmatprep.subr.mxu0 0.0
        %973 = vmatpush1.msra.mxu0 0.0
        %974 = vmatprep.subr.mxu0 0.0
        %975 = vmatpush1.msra.mxu0 0.0
        %976 = vmatprep.subr.mxu0 0.0
        %977 = vmatpush1.msra.mxu0 0.0
        %978 = vmatprep.mubr.f32.mxu0 0.0
        %979 = vmatmul.mubr.f32.gmra.mrb[0].mxu0 %v912
        %v980 = vpop.f32.mrb[0].mxu0
        %v981 = vadd.f32 0.0, %v980
        %v982 = vpop.f32.mrb[0].mxu0
        %983 = vdwg.mxu0
        %v984 = vld [vmem:[%s10] sm:$0xff]
        %v985 = vld [vmem:[%s10 + $0x8] sm:$0xff]
        %v986 = vld [vmem:[%s10 + $0x10] sm:$0xff]
        %v987 = vld [vmem:[%s10 + $0x18] sm:$0xff]
        %s988 = scalar_lea.vmem %s4, 128
        %v989 = vld [vmem:[%s988] sm:$0xff]
        %v990 = vld [vmem:[%s988 + $0x8] sm:$0xff]
        %v991 = vld [vmem:[%s988 + $0x10] sm:$0xff]
        %v992 = vld [vmem:[%s988 + $0x18] sm:$0xff]
        %v993 = vld [vmem:[%s988 + $0x20] sm:$0xff]
        %v994 = vld [vmem:[%s988 + $0x28] sm:$0xff]
        %v995 = vld [vmem:[%s988 + $0x30] sm:$0xff]
        %v996 = vld [vmem:[%s988 + $0x38] sm:$0xff]
        %v997 = vld [vmem:[%s988 + $0x40] sm:$0xff]
        %v998 = vld [vmem:[%s988 + $0x48] sm:$0xff]
        %v999 = vld [vmem:[%s988 + $0x50] sm:$0xff]
        %v1000 = vld [vmem:[%s988 + $0x58] sm:$0xff]
        %v1001 = vld [vmem:[%s988 + $0x60] sm:$0xff]
        %v1002 = vld [vmem:[%s988 + $0x68] sm:$0xff]
        %v1003 = vld [vmem:[%s988 + $0x70] sm:$0xff]
        %v1004 = vld [vmem:[%s988 + $0x78] sm:$0xff]
        %s1005 = scalar_lea.vmem %s5, 1
        %v1006 = vld [vmem:[%s1005] sm:$0x1]
        %v1008 = vlaneseq
        %v1009 = vshrl.u32 %v1008, 7
        %v1010 = vsub.s32 0, %v1009
        %v1011 = vrot.slane %v1006, %v1010
        %1013 = vmatprep.subr.mxu0 0.0
        %1014 = vmatpush1.msra.mxu0 %v989
        %1015 = vmatprep.subr.mxu0 0.0
        %1016 = vmatpush1.msra.mxu0 %v990
        %1017 = vmatprep.subr.mxu0 0.0
        %1018 = vmatpush1.msra.mxu0 %v991
        %1019 = vmatprep.subr.mxu0 0.0
        %1020 = vmatpush1.msra.mxu0 %v992
        %1021 = vmatprep.subr.mxu0 0.0
        %1022 = vmatpush1.msra.mxu0 %v993
        %1023 = vmatprep.subr.mxu0 0.0
        %1024 = vmatpush1.msra.mxu0 %v994
        %1025 = vmatprep.subr.mxu0 0.0
        %1026 = vmatpush1.msra.mxu0 %v995
        %1027 = vmatprep.subr.mxu0 0.0
        %1028 = vmatpush1.msra.mxu0 %v996
        %1029 = vmatprep.subr.mxu0 0.0
        %1030 = vmatpush1.msra.mxu0 %v997
        %1031 = vmatprep.subr.mxu0 0.0
        %1032 = vmatpush1.msra.mxu0 %v998
        %1033 = vmatprep.subr.mxu0 0.0
        %1034 = vmatpush1.msra.mxu0 %v999
        %1035 = vmatprep.subr.mxu0 0.0
        %1036 = vmatpush1.msra.mxu0 %v1000
        %1037 = vmatprep.subr.mxu0 0.0
        %1038 = vmatpush1.msra.mxu0 %v1001
        %1039 = vmatprep.subr.mxu0 0.0
        %1040 = vmatpush1.msra.mxu0 %v1002
        %1041 = vmatprep.subr.mxu0 0.0
        %1042 = vmatpush1.msra.mxu0 %v1003
        %1043 = vmatprep.subr.mxu0 0.0
        %1044 = vmatpush1.msra.mxu0 %v1004
        %1045 = vmatprep.subr.mxu0 0.0
        %1046 = vmatpush1.msra.mxu0 0.0
        %1047 = vmatprep.subr.mxu0 0.0
        %1048 = vmatpush1.msra.mxu0 0.0
        %1049 = vmatprep.subr.mxu0 0.0
        %1050 = vmatpush1.msra.mxu0 0.0
        %1051 = vmatprep.subr.mxu0 0.0
        %1052 = vmatpush1.msra.mxu0 0.0
        %1053 = vmatprep.subr.mxu0 0.0
        %1054 = vmatpush1.msra.mxu0 0.0
        %1055 = vmatprep.subr.mxu0 0.0
        %1056 = vmatpush1.msra.mxu0 0.0
        %1057 = vmatprep.subr.mxu0 0.0
        %1058 = vmatpush1.msra.mxu0 0.0
        %1059 = vmatprep.subr.mxu0 0.0
        %1060 = vmatpush1.msra.mxu0 0.0
        %1061 = vmatprep.subr.mxu0 0.0
        %1062 = vmatpush1.msra.mxu0 0.0
        %1063 = vmatprep.subr.mxu0 0.0
        %1064 = vmatpush1.msra.mxu0 0.0
        %1065 = vmatprep.subr.mxu0 0.0
        %1066 = vmatpush1.msra.mxu0 0.0
        %1067 = vmatprep.subr.mxu0 0.0
        %1068 = vmatpush1.msra.mxu0 0.0
        %1069 = vmatprep.subr.mxu0 0.0
        %1070 = vmatpush1.msra.mxu0 0.0
        %1071 = vmatprep.subr.mxu0 0.0
        %1072 = vmatpush1.msra.mxu0 0.0
        %1073 = vmatprep.subr.mxu0 0.0
        %1074 = vmatpush1.msra.mxu0 0.0
        %1075 = vmatprep.subr.mxu0 0.0
        %1076 = vmatpush1.msra.mxu0 0.0
        %1077 = vmatprep.mubr.f32.mxu0 0.0
        %1078 = vmatmul.mubr.f32.gmra.mrb[0].mxu0 %v524
        %v1079 = vpop.f32.mrb[0].mxu0
        %v1080 = vadd.f32 %v1011, %v1079
        %v1081 = vpop.f32.mrb[0].mxu0
        %1082 = vdwg.mxu0
        %s1083 = scalar_lea.vmem %s6, 128
        %v1084 = vld [vmem:[%s1083] sm:$0xff]
        %v1085 = vld [vmem:[%s1083 + $0x8] sm:$0xff]
        %v1086 = vld [vmem:[%s1083 + $0x10] sm:$0xff]
        %v1087 = vld [vmem:[%s1083 + $0x18] sm:$0xff]
        %v1088 = vld [vmem:[%s1083 + $0x20] sm:$0xff]
        %v1089 = vld [vmem:[%s1083 + $0x28] sm:$0xff]
        %v1090 = vld [vmem:[%s1083 + $0x30] sm:$0xff]
        %v1091 = vld [vmem:[%s1083 + $0x38] sm:$0xff]
        %v1092 = vld [vmem:[%s1083 + $0x40] sm:$0xff]
        %v1093 = vld [vmem:[%s1083 + $0x48] sm:$0xff]
        %v1094 = vld [vmem:[%s1083 + $0x50] sm:$0xff]
        %v1095 = vld [vmem:[%s1083 + $0x58] sm:$0xff]
        %v1096 = vld [vmem:[%s1083 + $0x60] sm:$0xff]
        %v1097 = vld [vmem:[%s1083 + $0x68] sm:$0xff]
        %v1098 = vld [vmem:[%s1083 + $0x70] sm:$0xff]
        %v1099 = vld [vmem:[%s1083 + $0x78] sm:$0xff]
        %s1100 = scalar_lea.vmem %s7, 1
        %v1101 = vld [vmem:[%s1100] sm:$0x1]
        %v1103 = vlaneseq
        %v1104 = vshrl.u32 %v1103, 7
        %v1105 = vsub.s32 0, %v1104
        %v1106 = vrot.slane %v1101, %v1105
        %1108 = vmatprep.subr.mxu0 0.0
        %1109 = vmatpush1.msra.mxu0 %v1084
        %1110 = vmatprep.subr.mxu0 0.0
        %1111 = vmatpush1.msra.mxu0 %v1085
        %1112 = vmatprep.subr.mxu0 0.0
        %1113 = vmatpush1.msra.mxu0 %v1086
        %1114 = vmatprep.subr.mxu0 0.0
        %1115 = vmatpush1.msra.mxu0 %v1087
        %1116 = vmatprep.subr.mxu0 0.0
        %1117 = vmatpush1.msra.mxu0 %v1088
        %1118 = vmatprep.subr.mxu0 0.0
        %1119 = vmatpush1.msra.mxu0 %v1089
        %1120 = vmatprep.subr.mxu0 0.0
        %1121 = vmatpush1.msra.mxu0 %v1090
        %1122 = vmatprep.subr.mxu0 0.0
        %1123 = vmatpush1.msra.mxu0 %v1091
        %1124 = vmatprep.subr.mxu0 0.0
        %1125 = vmatpush1.msra.mxu0 %v1092
        %1126 = vmatprep.subr.mxu0 0.0
        %1127 = vmatpush1.msra.mxu0 %v1093
        %1128 = vmatprep.subr.mxu0 0.0
        %1129 = vmatpush1.msra.mxu0 %v1094
        %1130 = vmatprep.subr.mxu0 0.0
        %1131 = vmatpush1.msra.mxu0 %v1095
        %1132 = vmatprep.subr.mxu0 0.0
        %1133 = vmatpush1.msra.mxu0 %v1096
        %1134 = vmatprep.subr.mxu0 0.0
        %1135 = vmatpush1.msra.mxu0 %v1097
        %1136 = vmatprep.subr.mxu0 0.0
        %1137 = vmatpush1.msra.mxu0 %v1098
        %1138 = vmatprep.subr.mxu0 0.0
        %1139 = vmatpush1.msra.mxu0 %v1099
        %1140 = vmatprep.subr.mxu0 0.0
        %1141 = vmatpush1.msra.mxu0 0.0
        %1142 = vmatprep.subr.mxu0 0.0
        %1143 = vmatpush1.msra.mxu0 0.0
        %1144 = vmatprep.subr.mxu0 0.0
        %1145 = vmatpush1.msra.mxu0 0.0
        %1146 = vmatprep.subr.mxu0 0.0
        %1147 = vmatpush1.msra.mxu0 0.0
        %1148 = vmatprep.subr.mxu0 0.0
        %1149 = vmatpush1.msra.mxu0 0.0
        %1150 = vmatprep.subr.mxu0 0.0
        %1151 = vmatpush1.msra.mxu0 0.0
        %1152 = vmatprep.subr.mxu0 0.0
        %1153 = vmatpush1.msra.mxu0 0.0
        %1154 = vmatprep.subr.mxu0 0.0
        %1155 = vmatpush1.msra.mxu0 0.0
        %1156 = vmatprep.subr.mxu0 0.0
        %1157 = vmatpush1.msra.mxu0 0.0
        %1158 = vmatprep.subr.mxu0 0.0
        %1159 = vmatpush1.msra.mxu0 0.0
        %1160 = vmatprep.subr.mxu0 0.0
        %1161 = vmatpush1.msra.mxu0 0.0
        %1162 = vmatprep.subr.mxu0 0.0
        %1163 = vmatpush1.msra.mxu0 0.0
        %1164 = vmatprep.subr.mxu0 0.0
        %1165 = vmatpush1.msra.mxu0 0.0
        %1166 = vmatprep.subr.mxu0 0.0
        %1167 = vmatpush1.msra.mxu0 0.0
        %1168 = vmatprep.subr.mxu0 0.0
        %1169 = vmatpush1.msra.mxu0 0.0
        %1170 = vmatprep.subr.mxu0 0.0
        %1171 = vmatpush1.msra.mxu0 0.0
        %1172 = vmatprep.mubr.f32.mxu0 0.0
        %1173 = vmatmul.mubr.f32.gmra.mrb[0].mxu0 %v527
        %v1174 = vpop.f32.mrb[0].mxu0
        %v1175 = vadd.f32 %v1106, %v1174
        %v1176 = vpop.f32.mrb[0].mxu0
        %1177 = vmatprep.mubr.f32.mxu0 0.0
        %1178 = vmatmul.mubr.f32.gmra.mrb[0].mxu0 %v528
        %v1179 = vpop.f32.mrb[0].mxu0
        %v1180 = vadd.f32 %v1106, %v1179
        %v1181 = vpop.f32.mrb[0].mxu0
        %1182 = vdwg.mxu0
        %s1183 = scalar_lea.vmem %s8, 128
        %v1184 = vld [vmem:[%s1183] sm:$0xff]
        %v1185 = vld [vmem:[%s1183 + $0x8] sm:$0xff]
        %v1186 = vld [vmem:[%s1183 + $0x10] sm:$0xff]
        %v1187 = vld [vmem:[%s1183 + $0x18] sm:$0xff]
        %v1188 = vld [vmem:[%s1183 + $0x20] sm:$0xff]
        %v1189 = vld [vmem:[%s1183 + $0x28] sm:$0xff]
        %v1190 = vld [vmem:[%s1183 + $0x30] sm:$0xff]
        %v1191 = vld [vmem:[%s1183 + $0x38] sm:$0xff]
        %v1192 = vld [vmem:[%s1183 + $0x40] sm:$0xff]
        %v1193 = vld [vmem:[%s1183 + $0x48] sm:$0xff]
        %v1194 = vld [vmem:[%s1183 + $0x50] sm:$0xff]
        %v1195 = vld [vmem:[%s1183 + $0x58] sm:$0xff]
        %v1196 = vld [vmem:[%s1183 + $0x60] sm:$0xff]
        %v1197 = vld [vmem:[%s1183 + $0x68] sm:$0xff]
        %v1198 = vld [vmem:[%s1183 + $0x70] sm:$0xff]
        %v1199 = vld [vmem:[%s1183 + $0x78] sm:$0xff]
        %s1200 = scalar_lea.vmem %s9, 1
        %v1201 = vld [vmem:[%s1200] sm:$0x1]
        %v1203 = vlaneseq
        %v1204 = vshrl.u32 %v1203, 7
        %v1205 = vsub.s32 0, %v1204
        %v1206 = vrot.slane %v1201, %v1205
        %1208 = vmatprep.subr.mxu0 0.0
        %1209 = vmatpush1.msra.mxu0 %v1184
        %1210 = vmatprep.subr.mxu0 0.0
        %1211 = vmatpush1.msra.mxu0 %v1185
        %1212 = vmatprep.subr.mxu0 0.0
        %1213 = vmatpush1.msra.mxu0 %v1186
        %1214 = vmatprep.subr.mxu0 0.0
        %1215 = vmatpush1.msra.mxu0 %v1187
        %1216 = vmatprep.subr.mxu0 0.0
        %1217 = vmatpush1.msra.mxu0 %v1188
        %1218 = vmatprep.subr.mxu0 0.0
        %1219 = vmatpush1.msra.mxu0 %v1189
        %1220 = vmatprep.subr.mxu0 0.0
        %1221 = vmatpush1.msra.mxu0 %v1190
        %1222 = vmatprep.subr.mxu0 0.0
        %1223 = vmatpush1.msra.mxu0 %v1191
        %1224 = vmatprep.subr.mxu0 0.0
        %1225 = vmatpush1.msra.mxu0 %v1192
        %1226 = vmatprep.subr.mxu0 0.0
        %1227 = vmatpush1.msra.mxu0 %v1193
        %1228 = vmatprep.subr.mxu0 0.0
        %1229 = vmatpush1.msra.mxu0 %v1194
        %1230 = vmatprep.subr.mxu0 0.0
        %1231 = vmatpush1.msra.mxu0 %v1195
        %1232 = vmatprep.subr.mxu0 0.0
        %1233 = vmatpush1.msra.mxu0 %v1196
        %1234 = vmatprep.subr.mxu0 0.0
        %1235 = vmatpush1.msra.mxu0 %v1197
        %1236 = vmatprep.subr.mxu0 0.0
        %1237 = vmatpush1.msra.mxu0 %v1198
        %1238 = vmatprep.subr.mxu0 0.0
        %1239 = vmatpush1.msra.mxu0 %v1199
        %1240 = vmatprep.subr.mxu0 0.0
        %1241 = vmatpush1.msra.mxu0 0.0
        %1242 = vmatprep.subr.mxu0 0.0
        %1243 = vmatpush1.msra.mxu0 0.0
        %1244 = vmatprep.subr.mxu0 0.0
        %1245 = vmatpush1.msra.mxu0 0.0
        %1246 = vmatprep.subr.mxu0 0.0
        %1247 = vmatpush1.msra.mxu0 0.0
        %1248 = vmatprep.subr.mxu0 0.0
        %1249 = vmatpush1.msra.mxu0 0.0
        %1250 = vmatprep.subr.mxu0 0.0
        %1251 = vmatpush1.msra.mxu0 0.0
        %1252 = vmatprep.subr.mxu0 0.0
        %1253 = vmatpush1.msra.mxu0 0.0
        %1254 = vmatprep.subr.mxu0 0.0
        %1255 = vmatpush1.msra.mxu0 0.0
        %1256 = vmatprep.subr.mxu0 0.0
        %1257 = vmatpush1.msra.mxu0 0.0
        %1258 = vmatprep.subr.mxu0 0.0
        %1259 = vmatpush1.msra.mxu0 0.0
        %1260 = vmatprep.subr.mxu0 0.0
        %1261 = vmatpush1.msra.mxu0 0.0
        %1262 = vmatprep.subr.mxu0 0.0
        %1263 = vmatpush1.msra.mxu0 0.0
        %1264 = vmatprep.subr.mxu0 0.0
        %1265 = vmatpush1.msra.mxu0 0.0
        %1266 = vmatprep.subr.mxu0 0.0
        %1267 = vmatpush1.msra.mxu0 0.0
        %1268 = vmatprep.subr.mxu0 0.0
        %1269 = vmatpush1.msra.mxu0 0.0
        %1270 = vmatprep.subr.mxu0 0.0
        %1271 = vmatpush1.msra.mxu0 0.0
        %1272 = vmatprep.mubr.f32.mxu0 0.0
        %1273 = vmatmul.mubr.f32.gmra.mrb[0].mxu0 %v521
        %v1274 = vpop.f32.mrb[0].mxu0
        %v1275 = vadd.f32 %v1206, %v1274
        %v1276 = vpop.f32.mrb[0].mxu0
        %1277 = vmatprep.mubr.f32.mxu0 0.0
        %1278 = vmatmul.mubr.f32.gmra.mrb[0].mxu0 %v522
        %v1279 = vpop.f32.mrb[0].mxu0
        %v1280 = vadd.f32 %v1206, %v1279
        %v1281 = vpop.f32.mrb[0].mxu0
        %1282 = vdwg.mxu0
        %v1284 = vsel %vm818, %v1080, 0
        %v1287 = vsel %vm818, %v1175, 0
        %v1290 = vsel %vm818, %v1180, 0
        %1292 = vmatprep.subr.mxu0 0.0
        %1293 = vmatpush1.xpose.msra.mxu0 %v1287
        %1294 = vmatprep.subr.mxu0 0.0
        %1295 = vmatpush1.xpose.msra.mxu0 %v1290
        %1296 = vmatprep.subr.mxu0 0.0
        %1297 = vmatpush1.xpose.msra.mxu0 0.0
        %1298 = vmatprep.subr.mxu0 0.0
        %1299 = vmatpush1.xpose.msra.mxu0 0.0
        %1300 = vmatprep.subr.mxu0 0.0
        %1301 = vmatpush1.xpose.msra.mxu0 0.0
        %1302 = vmatprep.subr.mxu0 0.0
        %1303 = vmatpush1.xpose.msra.mxu0 0.0
        %1304 = vmatprep.subr.mxu0 0.0
        %1305 = vmatpush1.xpose.msra.mxu0 0.0
        %1306 = vmatprep.subr.mxu0 0.0
        %1307 = vmatpush1.xpose.msra.mxu0 0.0
        %1308 = vmatprep.subr.mxu0 0.0
        %1309 = vmatpush1.xpose.msra.mxu0 0.0
        %1310 = vmatprep.subr.mxu0 0.0
        %1311 = vmatpush1.xpose.msra.mxu0 0.0
        %1312 = vmatprep.subr.mxu0 0.0
        %1313 = vmatpush1.xpose.msra.mxu0 0.0
        %1314 = vmatprep.subr.mxu0 0.0
        %1315 = vmatpush1.xpose.msra.mxu0 0.0
        %1316 = vmatprep.subr.mxu0 0.0
        %1317 = vmatpush1.xpose.msra.mxu0 0.0
        %1318 = vmatprep.subr.mxu0 0.0
        %1319 = vmatpush1.xpose.msra.mxu0 0.0
        %1320 = vmatprep.subr.mxu0 0.0
        %1321 = vmatpush1.xpose.msra.mxu0 0.0
        %1322 = vmatprep.subr.mxu0 0.0
        %1323 = vmatpush1.xpose.msra.mxu0 0.0
        %1324 = vmatprep.subr.mxu0 0.0
        %1325 = vmatpush1.xpose.msra.mxu0 0.0
        %1326 = vmatprep.subr.mxu0 0.0
        %1327 = vmatpush1.xpose.msra.mxu0 0.0
        %1328 = vmatprep.subr.mxu0 0.0
        %1329 = vmatpush1.xpose.msra.mxu0 0.0
        %1330 = vmatprep.subr.mxu0 0.0
        %1331 = vmatpush1.xpose.msra.mxu0 0.0
        %1332 = vmatprep.subr.mxu0 0.0
        %1333 = vmatpush1.xpose.msra.mxu0 0.0
        %1334 = vmatprep.subr.mxu0 0.0
        %1335 = vmatpush1.xpose.msra.mxu0 0.0
        %1336 = vmatprep.subr.mxu0 0.0
        %1337 = vmatpush1.xpose.msra.mxu0 0.0
        %1338 = vmatprep.subr.mxu0 0.0
        %1339 = vmatpush1.xpose.msra.mxu0 0.0
        %1340 = vmatprep.subr.mxu0 0.0
        %1341 = vmatpush1.xpose.msra.mxu0 0.0
        %1342 = vmatprep.subr.mxu0 0.0
        %1343 = vmatpush1.xpose.msra.mxu0 0.0
        %1344 = vmatprep.subr.mxu0 0.0
        %1345 = vmatpush1.xpose.msra.mxu0 0.0
        %1346 = vmatprep.subr.mxu0 0.0
        %1347 = vmatpush1.xpose.msra.mxu0 0.0
        %1348 = vmatprep.subr.mxu0 0.0
        %1349 = vmatpush1.xpose.msra.mxu0 0.0
        %1350 = vmatprep.subr.mxu0 0.0
        %1351 = vmatpush1.xpose.msra.mxu0 0.0
        %1352 = vmatprep.subr.mxu0 0.0
        %1353 = vmatpush1.xpose.msra.mxu0 0.0
        %1354 = vmatprep.subr.mxu0 0.0
        %1355 = vmatpush1.xpose.msra.mxu0 0.0
        %1356 = vmatprep.mubr.f32.mxu0 0.0
        %1357 = vmatmul.mubr.f32.gmra.mrb[0].mxu0 %v1284
        %v1358 = vpop.f32.mrb[0].mxu0
        %v1359 = vadd.f32 0.0, %v1358
        %v1360 = vpop.f32.mrb[0].mxu0
        %1361 = vdwg.mxu0
        %v1362 = vmul.f32 %v1359, 0.17677669
        %v1363 = vsel %vm899, %v1362, -inf
        %1364 = vmax.xlane.f32.xlu0 %v1363
        %v1365 = vpop.xlane.xlu0 %1364
        %v1366 = vsub.f32 %v1362, %v1365
        %v1367 = vmul.f32 %v1366, 1.442695
        %v1368 = vpow.pop %v1367
        %v1369 = vsel %vm899, %v1368, 0.0
        %1370 = vadd.xlane.f32.xlu0 %v1369
        %v1371 = vpop.xlane.xlu0 %1370
        %v1372 = vrcp.pop %v1371
        %v1373 = vmul.f32 %v1368, %v1372
        %v1375 = vsel %vm899, %v1373, 0
        %1377 = vmatprep.subr.mxu0 0.0
        %1378 = vmatpush1.msra.mxu0 %v1275
        %1379 = vmatprep.subr.mxu0 0.0
        %1380 = vmatpush1.msra.mxu0 %v1280
        %1381 = vmatprep.subr.mxu0 0.0
        %1382 = vmatpush1.msra.mxu0 0.0
        %1383 = vmatprep.subr.mxu0 0.0
        %1384 = vmatpush1.msra.mxu0 0.0
        %1385 = vmatprep.subr.mxu0 0.0
        %1386 = vmatpush1.msra.mxu0 0.0
        %1387 = vmatprep.subr.mxu0 0.0
        %1388 = vmatpush1.msra.mxu0 0.0
        %1389 = vmatprep.subr.mxu0 0.0
        %1390 = vmatpush1.msra.mxu0 0.0
        %1391 = vmatprep.subr.mxu0 0.0
        %1392 = vmatpush1.msra.mxu0 0.0
        %1393 = vmatprep.subr.mxu0 0.0
        %1394 = vmatpush1.msra.mxu0 0.0
        %1395 = vmatprep.subr.mxu0 0.0
        %1396 = vmatpush1.msra.mxu0 0.0
        %1397 = vmatprep.subr.mxu0 0.0
        %1398 = vmatpush1.msra.mxu0 0.0
        %1399 = vmatprep.subr.mxu0 0.0
        %1400 = vmatpush1.msra.mxu0 0.0
        %1401 = vmatprep.subr.mxu0 0.0
        %1402 = vmatpush1.msra.mxu0 0.0
        %1403 = vmatprep.subr.mxu0 0.0
        %1404 = vmatpush1.msra.mxu0 0.0
        %1405 = vmatprep.subr.mxu0 0.0
        %1406 = vmatpush1.msra.mxu0 0.0
        %1407 = vmatprep.subr.mxu0 0.0
        %1408 = vmatpush1.msra.mxu0 0.0
        %1409 = vmatprep.subr.mxu0 0.0
        %1410 = vmatpush1.msra.mxu0 0.0
        %1411 = vmatprep.subr.mxu0 0.0
        %1412 = vmatpush1.msra.mxu0 0.0
        %1413 = vmatprep.subr.mxu0 0.0
        %1414 = vmatpush1.msra.mxu0 0.0
        %1415 = vmatprep.subr.mxu0 0.0
        %1416 = vmatpush1.msra.mxu0 0.0
        %1417 = vmatprep.subr.mxu0 0.0
        %1418 = vmatpush1.msra.mxu0 0.0
        %1419 = vmatprep.subr.mxu0 0.0
        %1420 = vmatpush1.msra.mxu0 0.0
        %1421 = vmatprep.subr.mxu0 0.0
        %1422 = vmatpush1.msra.mxu0 0.0
        %1423 = vmatprep.subr.mxu0 0.0
        %1424 = vmatpush1.msra.mxu0 0.0
        %1425 = vmatprep.subr.mxu0 0.0
        %1426 = vmatpush1.msra.mxu0 0.0
        %1427 = vmatprep.subr.mxu0 0.0
        %1428 = vmatpush1.msra.mxu0 0.0
        %1429 = vmatprep.subr.mxu0 0.0
        %1430 = vmatpush1.msra.mxu0 0.0
        %1431 = vmatprep.subr.mxu0 0.0
        %1432 = vmatpush1.msra.mxu0 0.0
        %1433 = vmatprep.subr.mxu0 0.0
        %1434 = vmatpush1.msra.mxu0 0.0
        %1435 = vmatprep.subr.mxu0 0.0
        %1436 = vmatpush1.msra.mxu0 0.0
        %1437 = vmatprep.subr.mxu0 0.0
        %1438 = vmatpush1.msra.mxu0 0.0
        %1439 = vmatprep.subr.mxu0 0.0
        %1440 = vmatpush1.msra.mxu0 0.0
        %1441 = vmatprep.mubr.f32.mxu0 0.0
        %1442 = vmatmul.mubr.f32.gmra.mrb[0].mxu0 %v1375
        %v1443 = vpop.f32.mrb[0].mxu0
        %v1444 = vadd.f32 0.0, %v1443
        %v1445 = vpop.f32.mrb[0].mxu0
        %1446 = vdwg.mxu0
        %s1447 = scalar_lea.vmem %s10, 32
        %v1448 = vld [vmem:[%s1447] sm:$0xff]
        %v1449 = vld [vmem:[%s1447 + $0x8] sm:$0xff]
        %v1450 = vld [vmem:[%s1447 + $0x10] sm:$0xff]
        %v1451 = vld [vmem:[%s1447 + $0x18] sm:$0xff]
        %v1453 = vsel %vm818, %v1444, 0
        %1455 = vmatprep.subr.mxu0 0.0
        %1456 = vmatpush1.msra.mxu0 %v1448
        %1457 = vmatprep.subr.mxu0 0.0
        %1458 = vmatpush1.msra.mxu0 %v1449
        %1459 = vmatprep.subr.mxu0 0.0
        %1460 = vmatpush1.msra.mxu0 %v1450
        %1461 = vmatprep.subr.mxu0 0.0
        %1462 = vmatpush1.msra.mxu0 %v1451
        %1463 = vmatprep.subr.mxu0 0.0
        %1464 = vmatpush1.msra.mxu0 0.0
        %1465 = vmatprep.subr.mxu0 0.0
        %1466 = vmatpush1.msra.mxu0 0.0
        %1467 = vmatprep.subr.mxu0 0.0
        %1468 = vmatpush1.msra.mxu0 0.0
        %1469 = vmatprep.subr.mxu0 0.0
        %1470 = vmatpush1.msra.mxu0 0.0
        %1471 = vmatprep.subr.mxu0 0.0
        %1472 = vmatpush1.msra.mxu0 0.0
        %1473 = vmatprep.subr.mxu0 0.0
        %1474 = vmatpush1.msra.mxu0 0.0
        %1475 = vmatprep.subr.mxu0 0.0
        %1476 = vmatpush1.msra.mxu0 0.0
        %1477 = vmatprep.subr.mxu0 0.0
        %1478 = vmatpush1.msra.mxu0 0.0
        %1479 = vmatprep.subr.mxu0 0.0
        %1480 = vmatpush1.msra.mxu0 0.0
        %1481 = vmatprep.subr.mxu0 0.0
        %1482 = vmatpush1.msra.mxu0 0.0
        %1483 = vmatprep.subr.mxu0 0.0
        %1484 = vmatpush1.msra.mxu0 0.0
        %1485 = vmatprep.subr.mxu0 0.0
        %1486 = vmatpush1.msra.mxu0 0.0
        %1487 = vmatprep.subr.mxu0 0.0
        %1488 = vmatpush1.msra.mxu0 0.0
        %1489 = vmatprep.subr.mxu0 0.0
        %1490 = vmatpush1.msra.mxu0 0.0
        %1491 = vmatprep.subr.mxu0 0.0
        %1492 = vmatpush1.msra.mxu0 0.0
        %1493 = vmatprep.subr.mxu0 0.0
        %1494 = vmatpush1.msra.mxu0 0.0
        %1495 = vmatprep.subr.mxu0 0.0
        %1496 = vmatpush1.msra.mxu0 0.0
        %1497 = vmatprep.subr.mxu0 0.0
        %1498 = vmatpush1.msra.mxu0 0.0
        %1499 = vmatprep.subr.mxu0 0.0
        %1500 = vmatpush1.msra.mxu0 0.0
        %1501 = vmatprep.subr.mxu0 0.0
        %1502 = vmatpush1.msra.mxu0 0.0
        %1503 = vmatprep.subr.mxu0 0.0
        %1504 = vmatpush1.msra.mxu0 0.0
        %1505 = vmatprep.subr.mxu0 0.0
        %1506 = vmatpush1.msra.mxu0 0.0
        %1507 = vmatprep.subr.mxu0 0.0
        %1508 = vmatpush1.msra.mxu0 0.0
        %1509 = vmatprep.subr.mxu0 0.0
        %1510 = vmatpush1.msra.mxu0 0.0
        %1511 = vmatprep.subr.mxu0 0.0
        %1512 = vmatpush1.msra.mxu0 0.0
        %1513 = vmatprep.subr.mxu0 0.0
        %1514 = vmatpush1.msra.mxu0 0.0
        %1515 = vmatprep.subr.mxu0 0.0
        %1516 = vmatpush1.msra.mxu0 0.0
        %1517 = vmatprep.subr.mxu0 0.0
        %1518 = vmatpush1.msra.mxu0 0.0
        %1519 = vmatprep.mubr.f32.mxu0 0.0
        %1520 = vmatmul.mubr.f32.gmra.mrb[0].mxu0 %v1453
        %v1521 = vpop.f32.mrb[0].mxu0
        %v1522 = vadd.f32 0.0, %v1521
        %v1523 = vpop.f32.mrb[0].mxu0
        %1524 = vdwg.mxu0
        %v1526 = vsel %vm818, %v981, 0
        %1528 = vmatprep.subr.mxu0 0.0
        %1529 = vmatpush1.msra.mxu0 %v984
        %1530 = vmatprep.subr.mxu0 0.0
        %1531 = vmatpush1.msra.mxu0 %v985
        %1532 = vmatprep.subr.mxu0 0.0
        %1533 = vmatpush1.msra.mxu0 %v986
        %1534 = vmatprep.subr.mxu0 0.0
        %1535 = vmatpush1.msra.mxu0 %v987
        %1536 = vmatprep.subr.mxu0 0.0
        %1537 = vmatpush1.msra.mxu0 0.0
        %1538 = vmatprep.subr.mxu0 0.0
        %1539 = vmatpush1.msra.mxu0 0.0
        %1540 = vmatprep.subr.mxu0 0.0
        %1541 = vmatpush1.msra.mxu0 0.0
        %1542 = vmatprep.subr.mxu0 0.0
        %1543 = vmatpush1.msra.mxu0 0.0
        %1544 = vmatprep.subr.mxu0 0.0
        %1545 = vmatpush1.msra.mxu0 0.0
        %1546 = vmatprep.subr.mxu0 0.0
        %1547 = vmatpush1.msra.mxu0 0.0
        %1548 = vmatprep.subr.mxu0 0.0
        %1549 = vmatpush1.msra.mxu0 0.0
        %1550 = vmatprep.subr.mxu0 0.0
        %1551 = vmatpush1.msra.mxu0 0.0
        %1552 = vmatprep.subr.mxu0 0.0
        %1553 = vmatpush1.msra.mxu0 0.0
        %1554 = vmatprep.subr.mxu0 0.0
        %1555 = vmatpush1.msra.mxu0 0.0
        %1556 = vmatprep.subr.mxu0 0.0
        %1557 = vmatpush1.msra.mxu0 0.0
        %1558 = vmatprep.subr.mxu0 0.0
        %1559 = vmatpush1.msra.mxu0 0.0
        %1560 = vmatprep.subr.mxu0 0.0
        %1561 = vmatpush1.msra.mxu0 0.0
        %1562 = vmatprep.subr.mxu0 0.0
        %1563 = vmatpush1.msra.mxu0 0.0
        %1564 = vmatprep.subr.mxu0 0.0
        %1565 = vmatpush1.msra.mxu0 0.0
        %1566 = vmatprep.subr.mxu0 0.0
        %1567 = vmatpush1.msra.mxu0 0.0
        %1568 = vmatprep.subr.mxu0 0.0
        %1569 = vmatpush1.msra.mxu0 0.0
        %1570 = vmatprep.subr.mxu0 0.0
        %1571 = vmatpush1.msra.mxu0 0.0
        %1572 = vmatprep.subr.mxu0 0.0
        %1573 = vmatpush1.msra.mxu0 0.0
        %1574 = vmatprep.subr.mxu0 0.0
        %1575 = vmatpush1.msra.mxu0 0.0
        %1576 = vmatprep.subr.mxu0 0.0
        %1577 = vmatpush1.msra.mxu0 0.0
        %1578 = vmatprep.subr.mxu0 0.0
        %1579 = vmatpush1.msra.mxu0 0.0
        %1580 = vmatprep.subr.mxu0 0.0
        %1581 = vmatpush1.msra.mxu0 0.0
        %1582 = vmatprep.subr.mxu0 0.0
        %1583 = vmatpush1.msra.mxu0 0.0
        %1584 = vmatprep.subr.mxu0 0.0
        %1585 = vmatpush1.msra.mxu0 0.0
        %1586 = vmatprep.subr.mxu0 0.0
        %1587 = vmatpush1.msra.mxu0 0.0
        %1588 = vmatprep.subr.mxu0 0.0
        %1589 = vmatpush1.msra.mxu0 0.0
        %1590 = vmatprep.subr.mxu0 0.0
        %1591 = vmatpush1.msra.mxu0 0.0
        %1592 = vmatprep.mubr.f32.mxu0 0.0
        %1593 = vmatmul.mubr.f32.gmra.mrb[0].mxu0 %v1526
        %v1594 = vpop.f32.mrb[0].mxu0
        %v1595 = vadd.f32 %v1522, %v1594
        %v1596 = vpop.f32.mrb[0].mxu0
        %1597 = vdwg.mxu0
        %s1598 = scalar_lea.vmem %s4, 256
        %v1599 = vld [vmem:[%s1598] sm:$0xff]
        %v1600 = vld [vmem:[%s1598 + $0x8] sm:$0xff]
        %v1601 = vld [vmem:[%s1598 + $0x10] sm:$0xff]
        %v1602 = vld [vmem:[%s1598 + $0x18] sm:$0xff]
        %v1603 = vld [vmem:[%s1598 + $0x20] sm:$0xff]
        %v1604 = vld [vmem:[%s1598 + $0x28] sm:$0xff]
        %v1605 = vld [vmem:[%s1598 + $0x30] sm:$0xff]
        %v1606 = vld [vmem:[%s1598 + $0x38] sm:$0xff]
        %v1607 = vld [vmem:[%s1598 + $0x40] sm:$0xff]
        %v1608 = vld [vmem:[%s1598 + $0x48] sm:$0xff]
        %v1609 = vld [vmem:[%s1598 + $0x50] sm:$0xff]
        %v1610 = vld [vmem:[%s1598 + $0x58] sm:$0xff]
        %v1611 = vld [vmem:[%s1598 + $0x60] sm:$0xff]
        %v1612 = vld [vmem:[%s1598 + $0x68] sm:$0xff]
        %v1613 = vld [vmem:[%s1598 + $0x70] sm:$0xff]
        %v1614 = vld [vmem:[%s1598 + $0x78] sm:$0xff]
        %s1615 = scalar_lea.vmem %s5, 2
        %v1616 = vld [vmem:[%s1615] sm:$0x1]
        %v1618 = vlaneseq
        %v1619 = vshrl.u32 %v1618, 7
        %v1620 = vsub.s32 0, %v1619
        %v1621 = vrot.slane %v1616, %v1620
        %1623 = vmatprep.subr.mxu0 0.0
        %1624 = vmatpush1.msra.mxu0 %v1599
        %1625 = vmatprep.subr.mxu0 0.0
        %1626 = vmatpush1.msra.mxu0 %v1600
        %1627 = vmatprep.subr.mxu0 0.0
        %1628 = vmatpush1.msra.mxu0 %v1601
        %1629 = vmatprep.subr.mxu0 0.0
        %1630 = vmatpush1.msra.mxu0 %v1602
        %1631 = vmatprep.subr.mxu0 0.0
        %1632 = vmatpush1.msra.mxu0 %v1603
        %1633 = vmatprep.subr.mxu0 0.0
        %1634 = vmatpush1.msra.mxu0 %v1604
        %1635 = vmatprep.subr.mxu0 0.0
        %1636 = vmatpush1.msra.mxu0 %v1605
        %1637 = vmatprep.subr.mxu0 0.0
        %1638 = vmatpush1.msra.mxu0 %v1606
        %1639 = vmatprep.subr.mxu0 0.0
        %1640 = vmatpush1.msra.mxu0 %v1607
        %1641 = vmatprep.subr.mxu0 0.0
        %1642 = vmatpush1.msra.mxu0 %v1608
        %1643 = vmatprep.subr.mxu0 0.0
        %1644 = vmatpush1.msra.mxu0 %v1609
        %1645 = vmatprep.subr.mxu0 0.0
        %1646 = vmatpush1.msra.mxu0 %v1610
        %1647 = vmatprep.subr.mxu0 0.0
        %1648 = vmatpush1.msra.mxu0 %v1611
        %1649 = vmatprep.subr.mxu0 0.0
        %1650 = vmatpush1.msra.mxu0 %v1612
        %1651 = vmatprep.subr.mxu0 0.0
        %1652 = vmatpush1.msra.mxu0 %v1613
        %1653 = vmatprep.subr.mxu0 0.0
        %1654 = vmatpush1.msra.mxu0 %v1614
        %1655 = vmatprep.subr.mxu0 0.0
        %1656 = vmatpush1.msra.mxu0 0.0
        %1657 = vmatprep.subr.mxu0 0.0
        %1658 = vmatpush1.msra.mxu0 0.0
        %1659 = vmatprep.subr.mxu0 0.0
        %1660 = vmatpush1.msra.mxu0 0.0
        %1661 = vmatprep.subr.mxu0 0.0
        %1662 = vmatpush1.msra.mxu0 0.0
        %1663 = vmatprep.subr.mxu0 0.0
        %1664 = vmatpush1.msra.mxu0 0.0
        %1665 = vmatprep.subr.mxu0 0.0
        %1666 = vmatpush1.msra.mxu0 0.0
        %1667 = vmatprep.subr.mxu0 0.0
        %1668 = vmatpush1.msra.mxu0 0.0
        %1669 = vmatprep.subr.mxu0 0.0
        %1670 = vmatpush1.msra.mxu0 0.0
        %1671 = vmatprep.subr.mxu0 0.0
        %1672 = vmatpush1.msra.mxu0 0.0
        %1673 = vmatprep.subr.mxu0 0.0
        %1674 = vmatpush1.msra.mxu0 0.0
        %1675 = vmatprep.subr.mxu0 0.0
        %1676 = vmatpush1.msra.mxu0 0.0
        %1677 = vmatprep.subr.mxu0 0.0
        %1678 = vmatpush1.msra.mxu0 0.0
        %1679 = vmatprep.subr.mxu0 0.0
        %1680 = vmatpush1.msra.mxu0 0.0
        %1681 = vmatprep.subr.mxu0 0.0
        %1682 = vmatpush1.msra.mxu0 0.0
        %1683 = vmatprep.subr.mxu0 0.0
        %1684 = vmatpush1.msra.mxu0 0.0
        %1685 = vmatprep.subr.mxu0 0.0
        %1686 = vmatpush1.msra.mxu0 0.0
        %1687 = vmatprep.mubr.f32.mxu0 0.0
        %1688 = vmatmul.mubr.f32.gmra.mrb[0].mxu0 %v524
        %v1689 = vpop.f32.mrb[0].mxu0
        %v1690 = vadd.f32 %v1621, %v1689
        %v1691 = vpop.f32.mrb[0].mxu0
        %1692 = vdwg.mxu0
        %s1693 = scalar_lea.vmem %s6, 256
        %v1694 = vld [vmem:[%s1693] sm:$0xff]
        %v1695 = vld [vmem:[%s1693 + $0x8] sm:$0xff]
        %v1696 = vld [vmem:[%s1693 + $0x10] sm:$0xff]
        %v1697 = vld [vmem:[%s1693 + $0x18] sm:$0xff]
        %v1698 = vld [vmem:[%s1693 + $0x20] sm:$0xff]
        %v1699 = vld [vmem:[%s1693 + $0x28] sm:$0xff]
        %v1700 = vld [vmem:[%s1693 + $0x30] sm:$0xff]
        %v1701 = vld [vmem:[%s1693 + $0x38] sm:$0xff]
        %v1702 = vld [vmem:[%s1693 + $0x40] sm:$0xff]
        %v1703 = vld [vmem:[%s1693 + $0x48] sm:$0xff]
        %v1704 = vld [vmem:[%s1693 + $0x50] sm:$0xff]
        %v1705 = vld [vmem:[%s1693 + $0x58] sm:$0xff]
        %v1706 = vld [vmem:[%s1693 + $0x60] sm:$0xff]
        %v1707 = vld [vmem:[%s1693 + $0x68] sm:$0xff]
        %v1708 = vld [vmem:[%s1693 + $0x70] sm:$0xff]
        %v1709 = vld [vmem:[%s1693 + $0x78] sm:$0xff]
        %s1710 = scalar_lea.vmem %s7, 2
        %v1711 = vld [vmem:[%s1710] sm:$0x1]
        %v1713 = vlaneseq
        %v1714 = vshrl.u32 %v1713, 7
        %v1715 = vsub.s32 0, %v1714
        %v1716 = vrot.slane %v1711, %v1715
        %1718 = vmatprep.subr.mxu0 0.0
        %1719 = vmatpush1.msra.mxu0 %v1694
        %1720 = vmatprep.subr.mxu0 0.0
        %1721 = vmatpush1.msra.mxu0 %v1695
        %1722 = vmatprep.subr.mxu0 0.0
        %1723 = vmatpush1.msra.mxu0 %v1696
        %1724 = vmatprep.subr.mxu0 0.0
        %1725 = vmatpush1.msra.mxu0 %v1697
        %1726 = vmatprep.subr.mxu0 0.0
        %1727 = vmatpush1.msra.mxu0 %v1698
        %1728 = vmatprep.subr.mxu0 0.0
        %1729 = vmatpush1.msra.mxu0 %v1699
        %1730 = vmatprep.subr.mxu0 0.0
        %1731 = vmatpush1.msra.mxu0 %v1700
        %1732 = vmatprep.subr.mxu0 0.0
        %1733 = vmatpush1.msra.mxu0 %v1701
        %1734 = vmatprep.subr.mxu0 0.0
        %1735 = vmatpush1.msra.mxu0 %v1702
        %1736 = vmatprep.subr.mxu0 0.0
        %1737 = vmatpush1.msra.mxu0 %v1703
        %1738 = vmatprep.subr.mxu0 0.0
        %1739 = vmatpush1.msra.mxu0 %v1704
        %1740 = vmatprep.subr.mxu0 0.0
        %1741 = vmatpush1.msra.mxu0 %v1705
        %1742 = vmatprep.subr.mxu0 0.0
        %1743 = vmatpush1.msra.mxu0 %v1706
        %1744 = vmatprep.subr.mxu0 0.0
        %1745 = vmatpush1.msra.mxu0 %v1707
        %1746 = vmatprep.subr.mxu0 0.0
        %1747 = vmatpush1.msra.mxu0 %v1708
        %1748 = vmatprep.subr.mxu0 0.0
        %1749 = vmatpush1.msra.mxu0 %v1709
        %1750 = vmatprep.subr.mxu0 0.0
        %1751 = vmatpush1.msra.mxu0 0.0
        %1752 = vmatprep.subr.mxu0 0.0
        %1753 = vmatpush1.msra.mxu0 0.0
        %1754 = vmatprep.subr.mxu0 0.0
        %1755 = vmatpush1.msra.mxu0 0.0
        %1756 = vmatprep.subr.mxu0 0.0
        %1757 = vmatpush1.msra.mxu0 0.0
        %1758 = vmatprep.subr.mxu0 0.0
        %1759 = vmatpush1.msra.mxu0 0.0
        %1760 = vmatprep.subr.mxu0 0.0
        %1761 = vmatpush1.msra.mxu0 0.0
        %1762 = vmatprep.subr.mxu0 0.0
        %1763 = vmatpush1.msra.mxu0 0.0
        %1764 = vmatprep.subr.mxu0 0.0
        %1765 = vmatpush1.msra.mxu0 0.0
        %1766 = vmatprep.subr.mxu0 0.0
        %1767 = vmatpush1.msra.mxu0 0.0
        %1768 = vmatprep.subr.mxu0 0.0
        %1769 = vmatpush1.msra.mxu0 0.0
        %1770 = vmatprep.subr.mxu0 0.0
        %1771 = vmatpush1.msra.mxu0 0.0
        %1772 = vmatprep.subr.mxu0 0.0
        %1773 = vmatpush1.msra.mxu0 0.0
        %1774 = vmatprep.subr.mxu0 0.0
        %1775 = vmatpush1.msra.mxu0 0.0
        %1776 = vmatprep.subr.mxu0 0.0
        %1777 = vmatpush1.msra.mxu0 0.0
        %1778 = vmatprep.subr.mxu0 0.0
        %1779 = vmatpush1.msra.mxu0 0.0
        %1780 = vmatprep.subr.mxu0 0.0
        %1781 = vmatpush1.msra.mxu0 0.0
        %1782 = vmatprep.mubr.f32.mxu0 0.0
        %1783 = vmatmul.mubr.f32.gmra.mrb[0].mxu0 %v527
        %v1784 = vpop.f32.mrb[0].mxu0
        %v1785 = vadd.f32 %v1716, %v1784
        %v1786 = vpop.f32.mrb[0].mxu0
        %1787 = vmatprep.mubr.f32.mxu0 0.0
        %1788 = vmatmul.mubr.f32.gmra.mrb[0].mxu0 %v528
        %v1789 = vpop.f32.mrb[0].mxu0
        %v1790 = vadd.f32 %v1716, %v1789
        %v1791 = vpop.f32.mrb[0].mxu0
        %1792 = vdwg.mxu0
        %s1793 = scalar_lea.vmem %s8, 256
        %v1794 = vld [vmem:[%s1793] sm:$0xff]
        %v1795 = vld [vmem:[%s1793 + $0x8] sm:$0xff]
        %v1796 = vld [vmem:[%s1793 + $0x10] sm:$0xff]
        %v1797 = vld [vmem:[%s1793 + $0x18] sm:$0xff]
        %v1798 = vld [vmem:[%s1793 + $0x20] sm:$0xff]
        %v1799 = vld [vmem:[%s1793 + $0x28] sm:$0xff]
        %v1800 = vld [vmem:[%s1793 + $0x30] sm:$0xff]
        %v1801 = vld [vmem:[%s1793 + $0x38] sm:$0xff]
        %v1802 = vld [vmem:[%s1793 + $0x40] sm:$0xff]
        %v1803 = vld [vmem:[%s1793 + $0x48] sm:$0xff]
        %v1804 = vld [vmem:[%s1793 + $0x50] sm:$0xff]
        %v1805 = vld [vmem:[%s1793 + $0x58] sm:$0xff]
        %v1806 = vld [vmem:[%s1793 + $0x60] sm:$0xff]
        %v1807 = vld [vmem:[%s1793 + $0x68] sm:$0xff]
        %v1808 = vld [vmem:[%s1793 + $0x70] sm:$0xff]
        %v1809 = vld [vmem:[%s1793 + $0x78] sm:$0xff]
        %s1810 = scalar_lea.vmem %s9, 2
        %v1811 = vld [vmem:[%s1810] sm:$0x1]
        %v1813 = vlaneseq
        %v1814 = vshrl.u32 %v1813, 7
        %v1815 = vsub.s32 0, %v1814
        %v1816 = vrot.slane %v1811, %v1815
        %1818 = vmatprep.subr.mxu0 0.0
        %1819 = vmatpush1.msra.mxu0 %v1794
        %1820 = vmatprep.subr.mxu0 0.0
        %1821 = vmatpush1.msra.mxu0 %v1795
        %1822 = vmatprep.subr.mxu0 0.0
        %1823 = vmatpush1.msra.mxu0 %v1796
        %1824 = vmatprep.subr.mxu0 0.0
        %1825 = vmatpush1.msra.mxu0 %v1797
        %1826 = vmatprep.subr.mxu0 0.0
        %1827 = vmatpush1.msra.mxu0 %v1798
        %1828 = vmatprep.subr.mxu0 0.0
        %1829 = vmatpush1.msra.mxu0 %v1799
        %1830 = vmatprep.subr.mxu0 0.0
        %1831 = vmatpush1.msra.mxu0 %v1800
        %1832 = vmatprep.subr.mxu0 0.0
        %1833 = vmatpush1.msra.mxu0 %v1801
        %1834 = vmatprep.subr.mxu0 0.0
        %1835 = vmatpush1.msra.mxu0 %v1802
        %1836 = vmatprep.subr.mxu0 0.0
        %1837 = vmatpush1.msra.mxu0 %v1803
        %1838 = vmatprep.subr.mxu0 0.0
        %1839 = vmatpush1.msra.mxu0 %v1804
        %1840 = vmatprep.subr.mxu0 0.0
        %1841 = vmatpush1.msra.mxu0 %v1805
        %1842 = vmatprep.subr.mxu0 0.0
        %1843 = vmatpush1.msra.mxu0 %v1806
        %1844 = vmatprep.subr.mxu0 0.0
        %1845 = vmatpush1.msra.mxu0 %v1807
        %1846 = vmatprep.subr.mxu0 0.0
        %1847 = vmatpush1.msra.mxu0 %v1808
        %1848 = vmatprep.subr.mxu0 0.0
        %1849 = vmatpush1.msra.mxu0 %v1809
        %1850 = vmatprep.subr.mxu0 0.0
        %1851 = vmatpush1.msra.mxu0 0.0
        %1852 = vmatprep.subr.mxu0 0.0
        %1853 = vmatpush1.msra.mxu0 0.0
        %1854 = vmatprep.subr.mxu0 0.0
        %1855 = vmatpush1.msra.mxu0 0.0
        %1856 = vmatprep.subr.mxu0 0.0
        %1857 = vmatpush1.msra.mxu0 0.0
        %1858 = vmatprep.subr.mxu0 0.0
        %1859 = vmatpush1.msra.mxu0 0.0
        %1860 = vmatprep.subr.mxu0 0.0
        %1861 = vmatpush1.msra.mxu0 0.0
        %1862 = vmatprep.subr.mxu0 0.0
        %1863 = vmatpush1.msra.mxu0 0.0
        %1864 = vmatprep.subr.mxu0 0.0
        %1865 = vmatpush1.msra.mxu0 0.0
        %1866 = vmatprep.subr.mxu0 0.0
        %1867 = vmatpush1.msra.mxu0 0.0
        %1868 = vmatprep.subr.mxu0 0.0
        %1869 = vmatpush1.msra.mxu0 0.0
        %1870 = vmatprep.subr.mxu0 0.0
        %1871 = vmatpush1.msra.mxu0 0.0
        %1872 = vmatprep.subr.mxu0 0.0
        %1873 = vmatpush1.msra.mxu0 0.0
        %1874 = vmatprep.subr.mxu0 0.0
        %1875 = vmatpush1.msra.mxu0 0.0
        %1876 = vmatprep.subr.mxu0 0.0
        %1877 = vmatpush1.msra.mxu0 0.0
        %1878 = vmatprep.subr.mxu0 0.0
        %1879 = vmatpush1.msra.mxu0 0.0
        %1880 = vmatprep.subr.mxu0 0.0
        %1881 = vmatpush1.msra.mxu0 0.0
        %1882 = vmatprep.mubr.f32.mxu0 0.0
        %1883 = vmatmul.mubr.f32.gmra.mrb[0].mxu0 %v521
        %v1884 = vpop.f32.mrb[0].mxu0
        %v1885 = vadd.f32 %v1816, %v1884
        %v1886 = vpop.f32.mrb[0].mxu0
        %1887 = vmatprep.mubr.f32.mxu0 0.0
        %1888 = vmatmul.mubr.f32.gmra.mrb[0].mxu0 %v522
        %v1889 = vpop.f32.mrb[0].mxu0
        %v1890 = vadd.f32 %v1816, %v1889
        %v1891 = vpop.f32.mrb[0].mxu0
        %1892 = vdwg.mxu0
        %v1894 = vsel %vm818, %v1690, 0
        %v1897 = vsel %vm818, %v1785, 0
        %v1900 = vsel %vm818, %v1790, 0
        %1902 = vmatprep.subr.mxu0 0.0
        %1903 = vmatpush1.xpose.msra.mxu0 %v1897
        %1904 = vmatprep.subr.mxu0 0.0
        %1905 = vmatpush1.xpose.msra.mxu0 %v1900
        %1906 = vmatprep.subr.mxu0 0.0
        %1907 = vmatpush1.xpose.msra.mxu0 0.0
        %1908 = vmatprep.subr.mxu0 0.0
        %1909 = vmatpush1.xpose.msra.mxu0 0.0
        %1910 = vmatprep.subr.mxu0 0.0
        %1911 = vmatpush1.xpose.msra.mxu0 0.0
        %1912 = vmatprep.subr.mxu0 0.0
        %1913 = vmatpush1.xpose.msra.mxu0 0.0
        %1914 = vmatprep.subr.mxu0 0.0
        %1915 = vmatpush1.xpose.msra.mxu0 0.0
        %1916 = vmatprep.subr.mxu0 0.0
        %1917 = vmatpush1.xpose.msra.mxu0 0.0
        %1918 = vmatprep.subr.mxu0 0.0
        %1919 = vmatpush1.xpose.msra.mxu0 0.0
        %1920 = vmatprep.subr.mxu0 0.0
        %1921 = vmatpush1.xpose.msra.mxu0 0.0
        %1922 = vmatprep.subr.mxu0 0.0
        %1923 = vmatpush1.xpose.msra.mxu0 0.0
        %1924 = vmatprep.subr.mxu0 0.0
        %1925 = vmatpush1.xpose.msra.mxu0 0.0
        %1926 = vmatprep.subr.mxu0 0.0
        %1927 = vmatpush1.xpose.msra.mxu0 0.0
        %1928 = vmatprep.subr.mxu0 0.0
        %1929 = vmatpush1.xpose.msra.mxu0 0.0
        %1930 = vmatprep.subr.mxu0 0.0
        %1931 = vmatpush1.xpose.msra.mxu0 0.0
        %1932 = vmatprep.subr.mxu0 0.0
        %1933 = vmatpush1.xpose.msra.mxu0 0.0
        %1934 = vmatprep.subr.mxu0 0.0
        %1935 = vmatpush1.xpose.msra.mxu0 0.0
        %1936 = vmatprep.subr.mxu0 0.0
        %1937 = vmatpush1.xpose.msra.mxu0 0.0
        %1938 = vmatprep.subr.mxu0 0.0
        %1939 = vmatpush1.xpose.msra.mxu0 0.0
        %1940 = vmatprep.subr.mxu0 0.0
        %1941 = vmatpush1.xpose.msra.mxu0 0.0
        %1942 = vmatprep.subr.mxu0 0.0
        %1943 = vmatpush1.xpose.msra.mxu0 0.0
        %1944 = vmatprep.subr.mxu0 0.0
        %1945 = vmatpush1.xpose.msra.mxu0 0.0
        %1946 = vmatprep.subr.mxu0 0.0
        %1947 = vmatpush1.xpose.msra.mxu0 0.0
        %1948 = vmatprep.subr.mxu0 0.0
        %1949 = vmatpush1.xpose.msra.mxu0 0.0
        %1950 = vmatprep.subr.mxu0 0.0
        %1951 = vmatpush1.xpose.msra.mxu0 0.0
        %1952 = vmatprep.subr.mxu0 0.0
        %1953 = vmatpush1.xpose.msra.mxu0 0.0
        %1954 = vmatprep.subr.mxu0 0.0
        %1955 = vmatpush1.xpose.msra.mxu0 0.0
        %1956 = vmatprep.subr.mxu0 0.0
        %1957 = vmatpush1.xpose.msra.mxu0 0.0
        %1958 = vmatprep.subr.mxu0 0.0
        %1959 = vmatpush1.xpose.msra.mxu0 0.0
        %1960 = vmatprep.subr.mxu0 0.0
        %1961 = vmatpush1.xpose.msra.mxu0 0.0
        %1962 = vmatprep.subr.mxu0 0.0
        %1963 = vmatpush1.xpose.msra.mxu0 0.0
        %1964 = vmatprep.subr.mxu0 0.0
        %1965 = vmatpush1.xpose.msra.mxu0 0.0
        %1966 = vmatprep.mubr.f32.mxu0 0.0
        %1967 = vmatmul.mubr.f32.gmra.mrb[0].mxu0 %v1894
        %v1968 = vpop.f32.mrb[0].mxu0
        %v1969 = vadd.f32 0.0, %v1968
        %v1970 = vpop.f32.mrb[0].mxu0
        %1971 = vdwg.mxu0
        %v1972 = vmul.f32 %v1969, 0.17677669
        %v1973 = vsel %vm899, %v1972, -inf
        %1974 = vmax.xlane.f32.xlu0 %v1973
        %v1975 = vpop.xlane.xlu0 %1974
        %v1976 = vsub.f32 %v1972, %v1975
        %v1977 = vmul.f32 %v1976, 1.442695
        %v1978 = vpow.pop %v1977
        %v1979 = vsel %vm899, %v1978, 0.0
        %1980 = vadd.xlane.f32.xlu0 %v1979
        %v1981 = vpop.xlane.xlu0 %1980
        %v1982 = vrcp.pop %v1981
        %v1983 = vmul.f32 %v1978, %v1982
        %v1985 = vsel %vm899, %v1983, 0
        %1987 = vmatprep.subr.mxu0 0.0
        %1988 = vmatpush1.msra.mxu0 %v1885
        %1989 = vmatprep.subr.mxu0 0.0
        %1990 = vmatpush1.msra.mxu0 %v1890
        %1991 = vmatprep.subr.mxu0 0.0
        %1992 = vmatpush1.msra.mxu0 0.0
        %1993 = vmatprep.subr.mxu0 0.0
        %1994 = vmatpush1.msra.mxu0 0.0
        %1995 = vmatprep.subr.mxu0 0.0
        %1996 = vmatpush1.msra.mxu0 0.0
        %1997 = vmatprep.subr.mxu0 0.0
        %1998 = vmatpush1.msra.mxu0 0.0
        %1999 = vmatprep.subr.mxu0 0.0
        %2000 = vmatpush1.msra.mxu0 0.0
        %2001 = vmatprep.subr.mxu0 0.0
        %2002 = vmatpush1.msra.mxu0 0.0
        %2003 = vmatprep.subr.mxu0 0.0
        %2004 = vmatpush1.msra.mxu0 0.0
        %2005 = vmatprep.subr.mxu0 0.0
        %2006 = vmatpush1.msra.mxu0 0.0
        %2007 = vmatprep.subr.mxu0 0.0
        %2008 = vmatpush1.msra.mxu0 0.0
        %2009 = vmatprep.subr.mxu0 0.0
        %2010 = vmatpush1.msra.mxu0 0.0
        %2011 = vmatprep.subr.mxu0 0.0
        %2012 = vmatpush1.msra.mxu0 0.0
        %2013 = vmatprep.subr.mxu0 0.0
        %2014 = vmatpush1.msra.mxu0 0.0
        %2015 = vmatprep.subr.mxu0 0.0
        %2016 = vmatpush1.msra.mxu0 0.0
        %2017 = vmatprep.subr.mxu0 0.0
        %2018 = vmatpush1.msra.mxu0 0.0
        %2019 = vmatprep.subr.mxu0 0.0
        %2020 = vmatpush1.msra.mxu0 0.0
        %2021 = vmatprep.subr.mxu0 0.0
        %2022 = vmatpush1.msra.mxu0 0.0
        %2023 = vmatprep.subr.mxu0 0.0
        %2024 = vmatpush1.msra.mxu0 0.0
        %2025 = vmatprep.subr.mxu0 0.0
        %2026 = vmatpush1.msra.mxu0 0.0
        %2027 = vmatprep.subr.mxu0 0.0
        %2028 = vmatpush1.msra.mxu0 0.0
        %2029 = vmatprep.subr.mxu0 0.0
        %2030 = vmatpush1.msra.mxu0 0.0
        %2031 = vmatprep.subr.mxu0 0.0
        %2032 = vmatpush1.msra.mxu0 0.0
        %2033 = vmatprep.subr.mxu0 0.0
        %2034 = vmatpush1.msra.mxu0 0.0
        %2035 = vmatprep.subr.mxu0 0.0
        %2036 = vmatpush1.msra.mxu0 0.0
        %2037 = vmatprep.subr.mxu0 0.0
        %2038 = vmatpush1.msra.mxu0 0.0
        %2039 = vmatprep.subr.mxu0 0.0
        %2040 = vmatpush1.msra.mxu0 0.0
        %2041 = vmatprep.subr.mxu0 0.0
        %2042 = vmatpush1.msra.mxu0 0.0
        %2043 = vmatprep.subr.mxu0 0.0
        %2044 = vmatpush1.msra.mxu0 0.0
        %2045 = vmatprep.subr.mxu0 0.0
        %2046 = vmatpush1.msra.mxu0 0.0
        %2047 = vmatprep.subr.mxu0 0.0
        %2048 = vmatpush1.msra.mxu0 0.0
        %2049 = vmatprep.subr.mxu0 0.0
        %2050 = vmatpush1.msra.mxu0 0.0
        %2051 = vmatprep.mubr.f32.mxu0 0.0
        %2052 = vmatmul.mubr.f32.gmra.mrb[0].mxu0 %v1985
        %v2053 = vpop.f32.mrb[0].mxu0
        %v2054 = vadd.f32 0.0, %v2053
        %v2055 = vpop.f32.mrb[0].mxu0
        %2056 = vdwg.mxu0
        %s2057 = scalar_lea.vmem %s10, 64
        %v2058 = vld [vmem:[%s2057] sm:$0xff]
        %v2059 = vld [vmem:[%s2057 + $0x8] sm:$0xff]
        %v2060 = vld [vmem:[%s2057 + $0x10] sm:$0xff]
        %v2061 = vld [vmem:[%s2057 + $0x18] sm:$0xff]
        %v2063 = vsel %vm818, %v2054, 0
        %2065 = vmatprep.subr.mxu0 0.0
        %2066 = vmatpush1.msra.mxu0 %v2058
        %2067 = vmatprep.subr.mxu0 0.0
        %2068 = vmatpush1.msra.mxu0 %v2059
        %2069 = vmatprep.subr.mxu0 0.0
        %2070 = vmatpush1.msra.mxu0 %v2060
        %2071 = vmatprep.subr.mxu0 0.0
        %2072 = vmatpush1.msra.mxu0 %v2061
        %2073 = vmatprep.subr.mxu0 0.0
        %2074 = vmatpush1.msra.mxu0 0.0
        %2075 = vmatprep.subr.mxu0 0.0
        %2076 = vmatpush1.msra.mxu0 0.0
        %2077 = vmatprep.subr.mxu0 0.0
        %2078 = vmatpush1.msra.mxu0 0.0
        %2079 = vmatprep.subr.mxu0 0.0
        %2080 = vmatpush1.msra.mxu0 0.0
        %2081 = vmatprep.subr.mxu0 0.0
        %2082 = vmatpush1.msra.mxu0 0.0
        %2083 = vmatprep.subr.mxu0 0.0
        %2084 = vmatpush1.msra.mxu0 0.0
        %2085 = vmatprep.subr.mxu0 0.0
        %2086 = vmatpush1.msra.mxu0 0.0
        %2087 = vmatprep.subr.mxu0 0.0
        %2088 = vmatpush1.msra.mxu0 0.0
        %2089 = vmatprep.subr.mxu0 0.0
        %2090 = vmatpush1.msra.mxu0 0.0
        %2091 = vmatprep.subr.mxu0 0.0
        %2092 = vmatpush1.msra.mxu0 0.0
        %2093 = vmatprep.subr.mxu0 0.0
        %2094 = vmatpush1.msra.mxu0 0.0
        %2095 = vmatprep.subr.mxu0 0.0
        %2096 = vmatpush1.msra.mxu0 0.0
        %2097 = vmatprep.subr.mxu0 0.0
        %2098 = vmatpush1.msra.mxu0 0.0
        %2099 = vmatprep.subr.mxu0 0.0
        %2100 = vmatpush1.msra.mxu0 0.0
        %2101 = vmatprep.subr.mxu0 0.0
        %2102 = vmatpush1.msra.mxu0 0.0
        %2103 = vmatprep.subr.mxu0 0.0
        %2104 = vmatpush1.msra.mxu0 0.0
        %2105 = vmatprep.subr.mxu0 0.0
        %2106 = vmatpush1.msra.mxu0 0.0
        %2107 = vmatprep.subr.mxu0 0.0
        %2108 = vmatpush1.msra.mxu0 0.0
        %2109 = vmatprep.subr.mxu0 0.0
        %2110 = vmatpush1.msra.mxu0 0.0
        %2111 = vmatprep.subr.mxu0 0.0
        %2112 = vmatpush1.msra.mxu0 0.0
        %2113 = vmatprep.subr.mxu0 0.0
        %2114 = vmatpush1.msra.mxu0 0.0
        %2115 = vmatprep.subr.mxu0 0.0
        %2116 = vmatpush1.msra.mxu0 0.0
        %2117 = vmatprep.subr.mxu0 0.0
        %2118 = vmatpush1.msra.mxu0 0.0
        %2119 = vmatprep.subr.mxu0 0.0
        %2120 = vmatpush1.msra.mxu0 0.0
        %2121 = vmatprep.subr.mxu0 0.0
        %2122 = vmatpush1.msra.mxu0 0.0
        %2123 = vmatprep.subr.mxu0 0.0
        %2124 = vmatpush1.msra.mxu0 0.0
        %2125 = vmatprep.subr.mxu0 0.0
        %2126 = vmatpush1.msra.mxu0 0.0
        %2127 = vmatprep.subr.mxu0 0.0
        %2128 = vmatpush1.msra.mxu0 0.0
        %2129 = vmatprep.mubr.f32.mxu0 0.0
        %2130 = vmatmul.mubr.f32.gmra.mrb[0].mxu0 %v2063
        %v2131 = vpop.f32.mrb[0].mxu0
        %v2132 = vadd.f32 0.0, %v2131
        %v2133 = vpop.f32.mrb[0].mxu0
        %2134 = vdwg.mxu0
        %v2135 = vadd.f32 %v1595, %v2132
        %s2136 = scalar_lea.vmem %s4, 384
        %v2137 = vld [vmem:[%s2136] sm:$0xff]
        %v2138 = vld [vmem:[%s2136 + $0x8] sm:$0xff]
        %v2139 = vld [vmem:[%s2136 + $0x10] sm:$0xff]
        %v2140 = vld [vmem:[%s2136 + $0x18] sm:$0xff]
        %v2141 = vld [vmem:[%s2136 + $0x20] sm:$0xff]
        %v2142 = vld [vmem:[%s2136 + $0x28] sm:$0xff]
        %v2143 = vld [vmem:[%s2136 + $0x30] sm:$0xff]
        %v2144 = vld [vmem:[%s2136 + $0x38] sm:$0xff]
        %v2145 = vld [vmem:[%s2136 + $0x40] sm:$0xff]
        %v2146 = vld [vmem:[%s2136 + $0x48] sm:$0xff]
        %v2147 = vld [vmem:[%s2136 + $0x50] sm:$0xff]
        %v2148 = vld [vmem:[%s2136 + $0x58] sm:$0xff]
        %v2149 = vld [vmem:[%s2136 + $0x60] sm:$0xff]
        %v2150 = vld [vmem:[%s2136 + $0x68] sm:$0xff]
        %v2151 = vld [vmem:[%s2136 + $0x70] sm:$0xff]
        %v2152 = vld [vmem:[%s2136 + $0x78] sm:$0xff]
        %s2153 = scalar_lea.vmem %s5, 3
        %v2154 = vld [vmem:[%s2153] sm:$0x1]
        %v2156 = vlaneseq
        %v2157 = vshrl.u32 %v2156, 7
        %v2158 = vsub.s32 0, %v2157
        %v2159 = vrot.slane %v2154, %v2158
        %2161 = vmatprep.subr.mxu0 0.0
        %2162 = vmatpush1.msra.mxu0 %v2137
        %2163 = vmatprep.subr.mxu0 0.0
        %2164 = vmatpush1.msra.mxu0 %v2138
        %2165 = vmatprep.subr.mxu0 0.0
        %2166 = vmatpush1.msra.mxu0 %v2139
        %2167 = vmatprep.subr.mxu0 0.0
        %2168 = vmatpush1.msra.mxu0 %v2140
        %2169 = vmatprep.subr.mxu0 0.0
        %2170 = vmatpush1.msra.mxu0 %v2141
        %2171 = vmatprep.subr.mxu0 0.0
        %2172 = vmatpush1.msra.mxu0 %v2142
        %2173 = vmatprep.subr.mxu0 0.0
        %2174 = vmatpush1.msra.mxu0 %v2143
        %2175 = vmatprep.subr.mxu0 0.0
        %2176 = vmatpush1.msra.mxu0 %v2144
        %2177 = vmatprep.subr.mxu0 0.0
        %2178 = vmatpush1.msra.mxu0 %v2145
        %2179 = vmatprep.subr.mxu0 0.0
        %2180 = vmatpush1.msra.mxu0 %v2146
        %2181 = vmatprep.subr.mxu0 0.0
        %2182 = vmatpush1.msra.mxu0 %v2147
        %2183 = vmatprep.subr.mxu0 0.0
        %2184 = vmatpush1.msra.mxu0 %v2148
        %2185 = vmatprep.subr.mxu0 0.0
        %2186 = vmatpush1.msra.mxu0 %v2149
        %2187 = vmatprep.subr.mxu0 0.0
        %2188 = vmatpush1.msra.mxu0 %v2150
        %2189 = vmatprep.subr.mxu0 0.0
        %2190 = vmatpush1.msra.mxu0 %v2151
        %2191 = vmatprep.subr.mxu0 0.0
        %2192 = vmatpush1.msra.mxu0 %v2152
        %2193 = vmatprep.subr.mxu0 0.0
        %2194 = vmatpush1.msra.mxu0 0.0
        %2195 = vmatprep.subr.mxu0 0.0
        %2196 = vmatpush1.msra.mxu0 0.0
        %2197 = vmatprep.subr.mxu0 0.0
        %2198 = vmatpush1.msra.mxu0 0.0
        %2199 = vmatprep.subr.mxu0 0.0
        %2200 = vmatpush1.msra.mxu0 0.0
        %2201 = vmatprep.subr.mxu0 0.0
        %2202 = vmatpush1.msra.mxu0 0.0
        %2203 = vmatprep.subr.mxu0 0.0
        %2204 = vmatpush1.msra.mxu0 0.0
        %2205 = vmatprep.subr.mxu0 0.0
        %2206 = vmatpush1.msra.mxu0 0.0
        %2207 = vmatprep.subr.mxu0 0.0
        %2208 = vmatpush1.msra.mxu0 0.0
        %2209 = vmatprep.subr.mxu0 0.0
        %2210 = vmatpush1.msra.mxu0 0.0
        %2211 = vmatprep.subr.mxu0 0.0
        %2212 = vmatpush1.msra.mxu0 0.0
        %2213 = vmatprep.subr.mxu0 0.0
        %2214 = vmatpush1.msra.mxu0 0.0
        %2215 = vmatprep.subr.mxu0 0.0
        %2216 = vmatpush1.msra.mxu0 0.0
        %2217 = vmatprep.subr.mxu0 0.0
        %2218 = vmatpush1.msra.mxu0 0.0
        %2219 = vmatprep.subr.mxu0 0.0
        %2220 = vmatpush1.msra.mxu0 0.0
        %2221 = vmatprep.subr.mxu0 0.0
        %2222 = vmatpush1.msra.mxu0 0.0
        %2223 = vmatprep.subr.mxu0 0.0
        %2224 = vmatpush1.msra.mxu0 0.0
        %2225 = vmatprep.mubr.f32.mxu0 0.0
        %2226 = vmatmul.mubr.f32.gmra.mrb[0].mxu0 %v524
        %v2227 = vpop.f32.mrb[0].mxu0
        %v2228 = vadd.f32 %v2159, %v2227
        %v2229 = vpop.f32.mrb[0].mxu0
        %2230 = vdwg.mxu0
        %s2231 = scalar_lea.vmem %s6, 384
        %v2232 = vld [vmem:[%s2231] sm:$0xff]
        %v2233 = vld [vmem:[%s2231 + $0x8] sm:$0xff]
        %v2234 = vld [vmem:[%s2231 + $0x10] sm:$0xff]
        %v2235 = vld [vmem:[%s2231 + $0x18] sm:$0xff]
        %v2236 = vld [vmem:[%s2231 + $0x20] sm:$0xff]
        %v2237 = vld [vmem:[%s2231 + $0x28] sm:$0xff]
        %v2238 = vld [vmem:[%s2231 + $0x30] sm:$0xff]
        %v2239 = vld [vmem:[%s2231 + $0x38] sm:$0xff]
        %v2240 = vld [vmem:[%s2231 + $0x40] sm:$0xff]
        %v2241 = vld [vmem:[%s2231 + $0x48] sm:$0xff]
        %v2242 = vld [vmem:[%s2231 + $0x50] sm:$0xff]
        %v2243 = vld [vmem:[%s2231 + $0x58] sm:$0xff]
        %v2244 = vld [vmem:[%s2231 + $0x60] sm:$0xff]
        %v2245 = vld [vmem:[%s2231 + $0x68] sm:$0xff]
        %v2246 = vld [vmem:[%s2231 + $0x70] sm:$0xff]
        %v2247 = vld [vmem:[%s2231 + $0x78] sm:$0xff]
        %s2248 = scalar_lea.vmem %s7, 3
        %v2249 = vld [vmem:[%s2248] sm:$0x1]
        %v2251 = vlaneseq
        %v2252 = vshrl.u32 %v2251, 7
        %v2253 = vsub.s32 0, %v2252
        %v2254 = vrot.slane %v2249, %v2253
        %2256 = vmatprep.subr.mxu0 0.0
        %2257 = vmatpush1.msra.mxu0 %v2232
        %2258 = vmatprep.subr.mxu0 0.0
        %2259 = vmatpush1.msra.mxu0 %v2233
        %2260 = vmatprep.subr.mxu0 0.0
        %2261 = vmatpush1.msra.mxu0 %v2234
        %2262 = vmatprep.subr.mxu0 0.0
        %2263 = vmatpush1.msra.mxu0 %v2235
        %2264 = vmatprep.subr.mxu0 0.0
        %2265 = vmatpush1.msra.mxu0 %v2236
        %2266 = vmatprep.subr.mxu0 0.0
        %2267 = vmatpush1.msra.mxu0 %v2237
        %2268 = vmatprep.subr.mxu0 0.0
        %2269 = vmatpush1.msra.mxu0 %v2238
        %2270 = vmatprep.subr.mxu0 0.0
        %2271 = vmatpush1.msra.mxu0 %v2239
        %2272 = vmatprep.subr.mxu0 0.0
        %2273 = vmatpush1.msra.mxu0 %v2240
        %2274 = vmatprep.subr.mxu0 0.0
        %2275 = vmatpush1.msra.mxu0 %v2241
        %2276 = vmatprep.subr.mxu0 0.0
        %2277 = vmatpush1.msra.mxu0 %v2242
        %2278 = vmatprep.subr.mxu0 0.0
        %2279 = vmatpush1.msra.mxu0 %v2243
        %2280 = vmatprep.subr.mxu0 0.0
        %2281 = vmatpush1.msra.mxu0 %v2244
        %2282 = vmatprep.subr.mxu0 0.0
        %2283 = vmatpush1.msra.mxu0 %v2245
        %2284 = vmatprep.subr.mxu0 0.0
        %2285 = vmatpush1.msra.mxu0 %v2246
        %2286 = vmatprep.subr.mxu0 0.0
        %2287 = vmatpush1.msra.mxu0 %v2247
        %2288 = vmatprep.subr.mxu0 0.0
        %2289 = vmatpush1.msra.mxu0 0.0
        %2290 = vmatprep.subr.mxu0 0.0
        %2291 = vmatpush1.msra.mxu0 0.0
        %2292 = vmatprep.subr.mxu0 0.0
        %2293 = vmatpush1.msra.mxu0 0.0
        %2294 = vmatprep.subr.mxu0 0.0
        %2295 = vmatpush1.msra.mxu0 0.0
        %2296 = vmatprep.subr.mxu0 0.0
        %2297 = vmatpush1.msra.mxu0 0.0
        %2298 = vmatprep.subr.mxu0 0.0
        %2299 = vmatpush1.msra.mxu0 0.0
        %2300 = vmatprep.subr.mxu0 0.0
        %2301 = vmatpush1.msra.mxu0 0.0
        %2302 = vmatprep.subr.mxu0 0.0
        %2303 = vmatpush1.msra.mxu0 0.0
        %2304 = vmatprep.subr.mxu0 0.0
        %2305 = vmatpush1.msra.mxu0 0.0
        %2306 = vmatprep.subr.mxu0 0.0
        %2307 = vmatpush1.msra.mxu0 0.0
        %2308 = vmatprep.subr.mxu0 0.0
        %2309 = vmatpush1.msra.mxu0 0.0
        %2310 = vmatprep.subr.mxu0 0.0
        %2311 = vmatpush1.msra.mxu0 0.0
        %2312 = vmatprep.subr.mxu0 0.0
        %2313 = vmatpush1.msra.mxu0 0.0
        %2314 = vmatprep.subr.mxu0 0.0
        %2315 = vmatpush1.msra.mxu0 0.0
        %2316 = vmatprep.subr.mxu0 0.0
        %2317 = vmatpush1.msra.mxu0 0.0
        %2318 = vmatprep.subr.mxu0 0.0
        %2319 = vmatpush1.msra.mxu0 0.0
        %2320 = vmatprep.mubr.f32.mxu0 0.0
        %2321 = vmatmul.mubr.f32.gmra.mrb[0].mxu0 %v527
        %v2322 = vpop.f32.mrb[0].mxu0
        %v2323 = vadd.f32 %v2254, %v2322
        %v2324 = vpop.f32.mrb[0].mxu0
        %2325 = vmatprep.mubr.f32.mxu0 0.0
        %2326 = vmatmul.mubr.f32.gmra.mrb[0].mxu0 %v528
        %v2327 = vpop.f32.mrb[0].mxu0
        %v2328 = vadd.f32 %v2254, %v2327
        %v2329 = vpop.f32.mrb[0].mxu0
        %2330 = vdwg.mxu0
        %s2331 = scalar_lea.vmem %s8, 384
        %v2332 = vld [vmem:[%s2331] sm:$0xff]
        %v2333 = vld [vmem:[%s2331 + $0x8] sm:$0xff]
        %v2334 = vld [vmem:[%s2331 + $0x10] sm:$0xff]
        %v2335 = vld [vmem:[%s2331 + $0x18] sm:$0xff]
        %v2336 = vld [vmem:[%s2331 + $0x20] sm:$0xff]
        %v2337 = vld [vmem:[%s2331 + $0x28] sm:$0xff]
        %v2338 = vld [vmem:[%s2331 + $0x30] sm:$0xff]
        %v2339 = vld [vmem:[%s2331 + $0x38] sm:$0xff]
        %v2340 = vld [vmem:[%s2331 + $0x40] sm:$0xff]
        %v2341 = vld [vmem:[%s2331 + $0x48] sm:$0xff]
        %v2342 = vld [vmem:[%s2331 + $0x50] sm:$0xff]
        %v2343 = vld [vmem:[%s2331 + $0x58] sm:$0xff]
        %v2344 = vld [vmem:[%s2331 + $0x60] sm:$0xff]
        %v2345 = vld [vmem:[%s2331 + $0x68] sm:$0xff]
        %v2346 = vld [vmem:[%s2331 + $0x70] sm:$0xff]
        %v2347 = vld [vmem:[%s2331 + $0x78] sm:$0xff]
        %s2348 = scalar_lea.vmem %s9, 3
        %v2349 = vld [vmem:[%s2348] sm:$0x1]
        %v2351 = vlaneseq
        %v2352 = vshrl.u32 %v2351, 7
        %v2353 = vsub.s32 0, %v2352
        %v2354 = vrot.slane %v2349, %v2353
        %2356 = vmatprep.subr.mxu0 0.0
        %2357 = vmatpush1.msra.mxu0 %v2332
        %2358 = vmatprep.subr.mxu0 0.0
        %2359 = vmatpush1.msra.mxu0 %v2333
        %2360 = vmatprep.subr.mxu0 0.0
        %2361 = vmatpush1.msra.mxu0 %v2334
        %2362 = vmatprep.subr.mxu0 0.0
        %2363 = vmatpush1.msra.mxu0 %v2335
        %2364 = vmatprep.subr.mxu0 0.0
        %2365 = vmatpush1.msra.mxu0 %v2336
        %2366 = vmatprep.subr.mxu0 0.0
        %2367 = vmatpush1.msra.mxu0 %v2337
        %2368 = vmatprep.subr.mxu0 0.0
        %2369 = vmatpush1.msra.mxu0 %v2338
        %2370 = vmatprep.subr.mxu0 0.0
        %2371 = vmatpush1.msra.mxu0 %v2339
        %2372 = vmatprep.subr.mxu0 0.0
        %2373 = vmatpush1.msra.mxu0 %v2340
        %2374 = vmatprep.subr.mxu0 0.0
        %2375 = vmatpush1.msra.mxu0 %v2341
        %2376 = vmatprep.subr.mxu0 0.0
        %2377 = vmatpush1.msra.mxu0 %v2342
        %2378 = vmatprep.subr.mxu0 0.0
        %2379 = vmatpush1.msra.mxu0 %v2343
        %2380 = vmatprep.subr.mxu0 0.0
        %2381 = vmatpush1.msra.mxu0 %v2344
        %2382 = vmatprep.subr.mxu0 0.0
        %2383 = vmatpush1.msra.mxu0 %v2345
        %2384 = vmatprep.subr.mxu0 0.0
        %2385 = vmatpush1.msra.mxu0 %v2346
        %2386 = vmatprep.subr.mxu0 0.0
        %2387 = vmatpush1.msra.mxu0 %v2347
        %2388 = vmatprep.subr.mxu0 0.0
        %2389 = vmatpush1.msra.mxu0 0.0
        %2390 = vmatprep.subr.mxu0 0.0
        %2391 = vmatpush1.msra.mxu0 0.0
        %2392 = vmatprep.subr.mxu0 0.0
        %2393 = vmatpush1.msra.mxu0 0.0
        %2394 = vmatprep.subr.mxu0 0.0
        %2395 = vmatpush1.msra.mxu0 0.0
        %2396 = vmatprep.subr.mxu0 0.0
        %2397 = vmatpush1.msra.mxu0 0.0
        %2398 = vmatprep.subr.mxu0 0.0
        %2399 = vmatpush1.msra.mxu0 0.0
        %2400 = vmatprep.subr.mxu0 0.0
        %2401 = vmatpush1.msra.mxu0 0.0
        %2402 = vmatprep.subr.mxu0 0.0
        %2403 = vmatpush1.msra.mxu0 0.0
        %2404 = vmatprep.subr.mxu0 0.0
        %2405 = vmatpush1.msra.mxu0 0.0
        %2406 = vmatprep.subr.mxu0 0.0
        %2407 = vmatpush1.msra.mxu0 0.0
        %2408 = vmatprep.subr.mxu0 0.0
        %2409 = vmatpush1.msra.mxu0 0.0
        %2410 = vmatprep.subr.mxu0 0.0
        %2411 = vmatpush1.msra.mxu0 0.0
        %2412 = vmatprep.subr.mxu0 0.0
        %2413 = vmatpush1.msra.mxu0 0.0
        %2414 = vmatprep.subr.mxu0 0.0
        %2415 = vmatpush1.msra.mxu0 0.0
        %2416 = vmatprep.subr.mxu0 0.0
        %2417 = vmatpush1.msra.mxu0 0.0
        %2418 = vmatprep.subr.mxu0 0.0
        %2419 = vmatpush1.msra.mxu0 0.0
        %2420 = vmatprep.mubr.f32.mxu0 0.0
        %2421 = vmatmul.mubr.f32.gmra.mrb[0].mxu0 %v521
        %v2422 = vpop.f32.mrb[0].mxu0
        %v2423 = vadd.f32 %v2354, %v2422
        %v2424 = vpop.f32.mrb[0].mxu0
        %2425 = vmatprep.mubr.f32.mxu0 0.0
        %2426 = vmatmul.mubr.f32.gmra.mrb[0].mxu0 %v522
        %v2427 = vpop.f32.mrb[0].mxu0
        %v2428 = vadd.f32 %v2354, %v2427
        %v2429 = vpop.f32.mrb[0].mxu0
        %2430 = vdwg.mxu0
        %v2432 = vsel %vm818, %v2228, 0
        %v2435 = vsel %vm818, %v2323, 0
        %v2438 = vsel %vm818, %v2328, 0
        %2440 = vmatprep.subr.mxu0 0.0
        %2441 = vmatpush1.xpose.msra.mxu0 %v2435
        %2442 = vmatprep.subr.mxu0 0.0
        %2443 = vmatpush1.xpose.msra.mxu0 %v2438
        %2444 = vmatprep.subr.mxu0 0.0
        %2445 = vmatpush1.xpose.msra.mxu0 0.0
        %2446 = vmatprep.subr.mxu0 0.0
        %2447 = vmatpush1.xpose.msra.mxu0 0.0
        %2448 = vmatprep.subr.mxu0 0.0
        %2449 = vmatpush1.xpose.msra.mxu0 0.0
        %2450 = vmatprep.subr.mxu0 0.0
        %2451 = vmatpush1.xpose.msra.mxu0 0.0
        %2452 = vmatprep.subr.mxu0 0.0
        %2453 = vmatpush1.xpose.msra.mxu0 0.0
        %2454 = vmatprep.subr.mxu0 0.0
        %2455 = vmatpush1.xpose.msra.mxu0 0.0
        %2456 = vmatprep.subr.mxu0 0.0
        %2457 = vmatpush1.xpose.msra.mxu0 0.0
        %2458 = vmatprep.subr.mxu0 0.0
        %2459 = vmatpush1.xpose.msra.mxu0 0.0
        %2460 = vmatprep.subr.mxu0 0.0
        %2461 = vmatpush1.xpose.msra.mxu0 0.0
        %2462 = vmatprep.subr.mxu0 0.0
        %2463 = vmatpush1.xpose.msra.mxu0 0.0
        %2464 = vmatprep.subr.mxu0 0.0
        %2465 = vmatpush1.xpose.msra.mxu0 0.0
        %2466 = vmatprep.subr.mxu0 0.0
        %2467 = vmatpush1.xpose.msra.mxu0 0.0
        %2468 = vmatprep.subr.mxu0 0.0
        %2469 = vmatpush1.xpose.msra.mxu0 0.0
        %2470 = vmatprep.subr.mxu0 0.0
        %2471 = vmatpush1.xpose.msra.mxu0 0.0
        %2472 = vmatprep.subr.mxu0 0.0
        %2473 = vmatpush1.xpose.msra.mxu0 0.0
        %2474 = vmatprep.subr.mxu0 0.0
        %2475 = vmatpush1.xpose.msra.mxu0 0.0
        %2476 = vmatprep.subr.mxu0 0.0
        %2477 = vmatpush1.xpose.msra.mxu0 0.0
        %2478 = vmatprep.subr.mxu0 0.0
        %2479 = vmatpush1.xpose.msra.mxu0 0.0
        %2480 = vmatprep.subr.mxu0 0.0
        %2481 = vmatpush1.xpose.msra.mxu0 0.0
        %2482 = vmatprep.subr.mxu0 0.0
        %2483 = vmatpush1.xpose.msra.mxu0 0.0
        %2484 = vmatprep.subr.mxu0 0.0
        %2485 = vmatpush1.xpose.msra.mxu0 0.0
        %2486 = vmatprep.subr.mxu0 0.0
        %2487 = vmatpush1.xpose.msra.mxu0 0.0
        %2488 = vmatprep.subr.mxu0 0.0
        %2489 = vmatpush1.xpose.msra.mxu0 0.0
        %2490 = vmatprep.subr.mxu0 0.0
        %2491 = vmatpush1.xpose.msra.mxu0 0.0
        %2492 = vmatprep.subr.mxu0 0.0
        %2493 = vmatpush1.xpose.msra.mxu0 0.0
        %2494 = vmatprep.subr.mxu0 0.0
        %2495 = vmatpush1.xpose.msra.mxu0 0.0
        %2496 = vmatprep.subr.mxu0 0.0
        %2497 = vmatpush1.xpose.msra.mxu0 0.0
        %2498 = vmatprep.subr.mxu0 0.0
        %2499 = vmatpush1.xpose.msra.mxu0 0.0
        %2500 = vmatprep.subr.mxu0 0.0
        %2501 = vmatpush1.xpose.msra.mxu0 0.0
        %2502 = vmatprep.subr.mxu0 0.0
        %2503 = vmatpush1.xpose.msra.mxu0 0.0
        %2504 = vmatprep.mubr.f32.mxu0 0.0
        %2505 = vmatmul.mubr.f32.gmra.mrb[0].mxu0 %v2432
        %v2506 = vpop.f32.mrb[0].mxu0
        %v2507 = vadd.f32 0.0, %v2506
        %v2508 = vpop.f32.mrb[0].mxu0
        %2509 = vdwg.mxu0
        %v2510 = vmul.f32 %v2507, 0.17677669
        %v2511 = vsel %vm899, %v2510, -inf
        %2512 = vmax.xlane.f32.xlu0 %v2511
        %v2513 = vpop.xlane.xlu0 %2512
        %v2514 = vsub.f32 %v2510, %v2513
        %v2515 = vmul.f32 %v2514, 1.442695
        %v2516 = vpow.pop %v2515
        %v2517 = vsel %vm899, %v2516, 0.0
        %2518 = vadd.xlane.f32.xlu0 %v2517
        %v2519 = vpop.xlane.xlu0 %2518
        %v2520 = vrcp.pop %v2519
        %v2521 = vmul.f32 %v2516, %v2520
        %v2523 = vsel %vm899, %v2521, 0
        %2525 = vmatprep.subr.mxu0 0.0
        %2526 = vmatpush1.msra.mxu0 %v2423
        %2527 = vmatprep.subr.mxu0 0.0
        %2528 = vmatpush1.msra.mxu0 %v2428
        %2529 = vmatprep.subr.mxu0 0.0
        %2530 = vmatpush1.msra.mxu0 0.0
        %2531 = vmatprep.subr.mxu0 0.0
        %2532 = vmatpush1.msra.mxu0 0.0
        %2533 = vmatprep.subr.mxu0 0.0
        %2534 = vmatpush1.msra.mxu0 0.0
        %2535 = vmatprep.subr.mxu0 0.0
        %2536 = vmatpush1.msra.mxu0 0.0
        %2537 = vmatprep.subr.mxu0 0.0
        %2538 = vmatpush1.msra.mxu0 0.0
        %2539 = vmatprep.subr.mxu0 0.0
        %2540 = vmatpush1.msra.mxu0 0.0
        %2541 = vmatprep.subr.mxu0 0.0
        %2542 = vmatpush1.msra.mxu0 0.0
        %2543 = vmatprep.subr.mxu0 0.0
        %2544 = vmatpush1.msra.mxu0 0.0
        %2545 = vmatprep.subr.mxu0 0.0
        %2546 = vmatpush1.msra.mxu0 0.0
        %2547 = vmatprep.subr.mxu0 0.0
        %2548 = vmatpush1.msra.mxu0 0.0
        %2549 = vmatprep.subr.mxu0 0.0
        %2550 = vmatpush1.msra.mxu0 0.0
        %2551 = vmatprep.subr.mxu0 0.0
        %2552 = vmatpush1.msra.mxu0 0.0
        %2553 = vmatprep.subr.mxu0 0.0
        %2554 = vmatpush1.msra.mxu0 0.0
        %2555 = vmatprep.subr.mxu0 0.0
        %2556 = vmatpush1.msra.mxu0 0.0
        %2557 = vmatprep.subr.mxu0 0.0
        %2558 = vmatpush1.msra.mxu0 0.0
        %2559 = vmatprep.subr.mxu0 0.0
        %2560 = vmatpush1.msra.mxu0 0.0
        %2561 = vmatprep.subr.mxu0 0.0
        %2562 = vmatpush1.msra.mxu0 0.0
        %2563 = vmatprep.subr.mxu0 0.0
        %2564 = vmatpush1.msra.mxu0 0.0
        %2565 = vmatprep.subr.mxu0 0.0
        %2566 = vmatpush1.msra.mxu0 0.0
        %2567 = vmatprep.subr.mxu0 0.0
        %2568 = vmatpush1.msra.mxu0 0.0
        %2569 = vmatprep.subr.mxu0 0.0
        %2570 = vmatpush1.msra.mxu0 0.0
        %2571 = vmatprep.subr.mxu0 0.0
        %2572 = vmatpush1.msra.mxu0 0.0
        %2573 = vmatprep.subr.mxu0 0.0
        %2574 = vmatpush1.msra.mxu0 0.0
        %2575 = vmatprep.subr.mxu0 0.0
        %2576 = vmatpush1.msra.mxu0 0.0
        %2577 = vmatprep.subr.mxu0 0.0
        %2578 = vmatpush1.msra.mxu0 0.0
        %2579 = vmatprep.subr.mxu0 0.0
        %2580 = vmatpush1.msra.mxu0 0.0
        %2581 = vmatprep.subr.mxu0 0.0
        %2582 = vmatpush1.msra.mxu0 0.0
        %2583 = vmatprep.subr.mxu0 0.0
        %2584 = vmatpush1.msra.mxu0 0.0
        %2585 = vmatprep.subr.mxu0 0.0
        %2586 = vmatpush1.msra.mxu0 0.0
        %2587 = vmatprep.subr.mxu0 0.0
        %2588 = vmatpush1.msra.mxu0 0.0
        %2589 = vmatprep.mubr.f32.mxu0 0.0
        %2590 = vmatmul.mubr.f32.gmra.mrb[0].mxu0 %v2523
        %v2591 = vpop.f32.mrb[0].mxu0
        %v2592 = vadd.f32 0.0, %v2591
        %v2593 = vpop.f32.mrb[0].mxu0
        %2594 = vdwg.mxu0
        %s2595 = scalar_lea.vmem %s10, 96
        %v2596 = vld [vmem:[%s2595] sm:$0xff]
        %v2597 = vld [vmem:[%s2595 + $0x8] sm:$0xff]
        %v2598 = vld [vmem:[%s2595 + $0x10] sm:$0xff]
        %v2599 = vld [vmem:[%s2595 + $0x18] sm:$0xff]
        %v2601 = vsel %vm818, %v2592, 0
        %2603 = vmatprep.subr.mxu0 0.0
        %2604 = vmatpush1.msra.mxu0 %v2596
        %2605 = vmatprep.subr.mxu0 0.0
        %2606 = vmatpush1.msra.mxu0 %v2597
        %2607 = vmatprep.subr.mxu0 0.0
        %2608 = vmatpush1.msra.mxu0 %v2598
        %2609 = vmatprep.subr.mxu0 0.0
        %2610 = vmatpush1.msra.mxu0 %v2599
        %2611 = vmatprep.subr.mxu0 0.0
        %2612 = vmatpush1.msra.mxu0 0.0
        %2613 = vmatprep.subr.mxu0 0.0
        %2614 = vmatpush1.msra.mxu0 0.0
        %2615 = vmatprep.subr.mxu0 0.0
        %2616 = vmatpush1.msra.mxu0 0.0
        %2617 = vmatprep.subr.mxu0 0.0
        %2618 = vmatpush1.msra.mxu0 0.0
        %2619 = vmatprep.subr.mxu0 0.0
        %2620 = vmatpush1.msra.mxu0 0.0
        %2621 = vmatprep.subr.mxu0 0.0
        %2622 = vmatpush1.msra.mxu0 0.0
        %2623 = vmatprep.subr.mxu0 0.0
        %2624 = vmatpush1.msra.mxu0 0.0
        %2625 = vmatprep.subr.mxu0 0.0
        %2626 = vmatpush1.msra.mxu0 0.0
        %2627 = vmatprep.subr.mxu0 0.0
        %2628 = vmatpush1.msra.mxu0 0.0
        %2629 = vmatprep.subr.mxu0 0.0
        %2630 = vmatpush1.msra.mxu0 0.0
        %2631 = vmatprep.subr.mxu0 0.0
        %2632 = vmatpush1.msra.mxu0 0.0
        %2633 = vmatprep.subr.mxu0 0.0
        %2634 = vmatpush1.msra.mxu0 0.0
        %2635 = vmatprep.subr.mxu0 0.0
        %2636 = vmatpush1.msra.mxu0 0.0
        %2637 = vmatprep.subr.mxu0 0.0
        %2638 = vmatpush1.msra.mxu0 0.0
        %2639 = vmatprep.subr.mxu0 0.0
        %2640 = vmatpush1.msra.mxu0 0.0
        %2641 = vmatprep.subr.mxu0 0.0
        %2642 = vmatpush1.msra.mxu0 0.0
        %2643 = vmatprep.subr.mxu0 0.0
        %2644 = vmatpush1.msra.mxu0 0.0
        %2645 = vmatprep.subr.mxu0 0.0
        %2646 = vmatpush1.msra.mxu0 0.0
        %2647 = vmatprep.subr.mxu0 0.0
        %2648 = vmatpush1.msra.mxu0 0.0
        %2649 = vmatprep.subr.mxu0 0.0
        %2650 = vmatpush1.msra.mxu0 0.0
        %2651 = vmatprep.subr.mxu0 0.0
        %2652 = vmatpush1.msra.mxu0 0.0
        %2653 = vmatprep.subr.mxu0 0.0
        %2654 = vmatpush1.msra.mxu0 0.0
        %2655 = vmatprep.subr.mxu0 0.0
        %2656 = vmatpush1.msra.mxu0 0.0
        %2657 = vmatprep.subr.mxu0 0.0
        %2658 = vmatpush1.msra.mxu0 0.0
        %2659 = vmatprep.subr.mxu0 0.0
        %2660 = vmatpush1.msra.mxu0 0.0
        %2661 = vmatprep.subr.mxu0 0.0
        %2662 = vmatpush1.msra.mxu0 0.0
        %2663 = vmatprep.subr.mxu0 0.0
        %2664 = vmatpush1.msra.mxu0 0.0
        %2665 = vmatprep.subr.mxu0 0.0
        %2666 = vmatpush1.msra.mxu0 0.0
        %2667 = vmatprep.mubr.f32.mxu0 0.0
        %2668 = vmatmul.mubr.f32.gmra.mrb[0].mxu0 %v2601
        %v2669 = vpop.f32.mrb[0].mxu0
        %v2670 = vadd.f32 0.0, %v2669
        %v2671 = vpop.f32.mrb[0].mxu0
        %2672 = vdwg.mxu0
        %v2673 = vadd.f32 %v2135, %v2670
        %v2674 = vadd.f32 %v520, %v2673
        %v2675 = vld [vmem:[%s11] sm:$0x1]
        %v2677 = vlaneseq
        %v2678 = vshrl.u32 %v2677, 7
        %v2679 = vsub.s32 0, %v2678
        %v2680 = vrot.slane %v2675, %v2679
        %v2682 = vadd.f32 %v2674, %v2680
        %2683 = vadd.xlane.f32.xlu0 %v2682
        %v2684 = vpop.xlane.xlu0 %2683
        %v2685 = vrcp.pop 128.0
        %v2686 = vmul.f32 %v2684, %v2685
        %v2687 = vsub.f32 %v2682, %v2686
        %v2688 = vmul.f32 %v2687, %v2687
        %2689 = vadd.xlane.f32.xlu0 %v2688
        %v2690 = vpop.xlane.xlu0 %2689
        %v2691 = vmul.f32 %v2690, %v2685
        %v2692 = vadd.f32 %v2691, 1e-05
        %v2693 = vrsqrt.pop %v2692
        %v2694 = vmul.f32 %v2687, %v2693
        %v2695 = vld [vmem:[%s12] sm:$0x1]
        %v2697 = vlaneseq
        %v2698 = vshrl.u32 %v2697, 7
        %v2699 = vsub.s32 0, %v2698
        %v2700 = vrot.slane %v2695, %v2699
        %v2702 = vmul.f32 %v2694, %v2700
        %v2703 = vld [vmem:[%s13] sm:$0x1]
        %v2705 = vlaneseq
        %v2706 = vshrl.u32 %v2705, 7
        %v2707 = vsub.s32 0, %v2706
        %v2708 = vrot.slane %v2703, %v2707
        %v2710 = vadd.f32 %v2702, %v2708
        %2711 = vst [vmem:[%s501] sm:$0xff] %v2710
        %s2712 = sand.u32 %s350, 1
        %s2713 = scalar_lea.sflag [#allocation3], %s2712
        %s2714 = sand.u32 %s350, 1
        %s2715 = smul.addr %s2714, 8
        %s2716 = scalar_lea.vmem [#allocation2], %s2715
        // Predicated region
        $region77: #{tpu_custom_call.1} parent=75 // pred_check
          %p2717 = pneg %p360
        $region78: #{tpu_custom_call.1} parent=75 // pred_check_branch
          %2719 = sbr.rel (%p2717) target = $region80
        $region79: #{tpu_custom_call.1} parent=75 // pred_region
          %s2721 = ssub.s32 128, 128
          %2722 = vsyncadd %s2713, %s2721
          %s2723 = smul.addr %s28, 128
          %s2724 = scalar_lea.hbm %s14, %s2723
          %s2726 = sshll.u32 %s2716, 4
          %s2727 = int_to_ptr.vmem [resolvable:$true] %s2726
          %2729 = dma.vmem_to_hbm [thread:$0]  %s2727, 128, %s2724, %s2713
        $region80: #{tpu_custom_call.1} parent=75 // pred_fallthru
          _
      $region76: #{tpu_custom_call.1} parent=5 // pred_fallthru
        _
      %p2730 = scmp.le.s32.totalorder 2, %s23
      // Predicated region
      $region81: #{tpu_custom_call.1} parent=5 // pred_check
        %p2731 = pneg %p2730
      $region82: #{tpu_custom_call.1} parent=5 // pred_check_branch
        %2733 = sbr.rel (%p2731) target = $region84
      $region83: #{tpu_custom_call.1} parent=5 // pred_region
        %s2734 = ssub.s32 %s23, 2
        // Predicated region
        $region85: #{tpu_custom_call.1} parent=83 // pred_check
          %p2735 = pneg %p366
        $region86: #{tpu_custom_call.1} parent=83 // pred_check_branch
          %2737 = sbr.rel (%p2735) target = $region88
        $region87: #{tpu_custom_call.1} parent=83 // pred_region
          %s2738 = sand.u32 %s351, 1
          %s2739 = scalar_lea.sflag [#allocation3], %s2738
          %s2740 = sand.u32 %s351, 1
          %s2741 = smul.addr %s2740, 8
          %s2742 = scalar_lea.vmem [#allocation2], %s2741
          %2743 = dma.done %s2739, 128
        $region88: #{tpu_custom_call.1} parent=83 // pred_fallthru
          _
      $region84: #{tpu_custom_call.1} parent=5 // pred_fallthru
        _
    $region6: #{tpu_custom_call.1} parent=1 // loop_footer
      %s27 = sadd.s32 1, %s23
    $region7: #{tpu_custom_call.1} parent=1 // loop_footer_branch
      %22 = sbr.rel target = $region3
    $region8: #{tpu_custom_call.1} parent=1 // loop_exit
      _
    %2744 = vsyncpa [#allocation3], 1
    %s2745 = scalar_lea.sflag [#allocation3], 1
    %2746 = vsyncpa %s2745, 1

</llo_original>
